<compile_context>
chip_gen: v5e
topology: v5e:2x2
jax: 0.10.0
libtpu: 0.0.40
codegen_flags: <defaults>
</compile_context>

<pallas_src>
import functools

import jax
import jax.numpy as jnp
import numpy as np
from jax.experimental import pallas as pl
from jax.experimental.pallas import tpu as pltpu


def _gtu_kernel(x_ref, wp_ref, wq_ref, bp_ref, bq_ref, o_ref, *, K, S, TT, C, tBN):
    """x_ref: (T_x, C, tBN) bf16; wp/wq: (K, C, C) bf16; bp/bq: (C, 1) f32;
    o_ref: (TT, C, tBN) f32."""
    t_blk = pl.program_id(1)
    base = t_blk * (TT * S)

    # Bias folded into the accumulator init; broadcast hoisted out of both loops.
    bias_p = jnp.broadcast_to(bp_ref[...], (C, tBN)).astype(jnp.float32)
    bias_q = jnp.broadcast_to(bq_ref[...], (C, tBN)).astype(jnp.float32)

    for j in range(TT):                       # static unroll over output time steps
        acc_p = bias_p
        acc_q = bias_q
        for k in range(K):                    # 1xK conv == K accumulated matmuls (MXU)
            xk = x_ref[base + j * S + k]      # (C, tBN) bf16, lane-dense load
            acc_p = acc_p + jnp.dot(wp_ref[k], xk, preferred_element_type=jnp.float32)
            acc_q = acc_q + jnp.dot(wq_ref[k], xk, preferred_element_type=jnp.float32)
        # sigmoid(q) = 0.5 * (1 + tanh(0.5 * q))  -> fewer EUP pushes than jax.nn.sigmoid
        gate = 0.5 * (1.0 + jnp.tanh(0.5 * acc_q))
        o_ref[j] = (jnp.tanh(acc_p) * gate).astype(o_ref.dtype)


def gtu_pallas(x_tcm, w_p, w_q, b_p, b_q, *, kernel_size, time_strides,
               tt_max=16, bn_tile=1024):
    """x_tcm: (T, C, BN) bf16; w_p/w_q: (K, C, C) bf16; b_p/b_q: (C, 1) f32.
    Returns (T_out, C, BN) float32."""
    T, C, BN = x_tcm.shape
    K = kernel_size
    S = time_strides
    T_out = (T - K) // S + 1

    # --- time tiling: TT output steps per program; pad T_out up to a multiple ---
    TT = min(T_out, tt_max)
    n_t = pl.cdiv(T_out, TT)
    T_out_pad = n_t * TT
    T_need = (T_out_pad - 1) * S + K          # input steps touched by the padded grid
    if T_need > T:
        x_tcm = jnp.pad(x_tcm, ((0, T_need - T), (0, 0), (0, 0)))

    # --- BN tiling (lane axis): tile only when large; tile width multiple of 128 ---
    if BN > bn_tile:
        tBN = bn_tile
        n_bn = pl.cdiv(BN, tBN)
        BN_pad = n_bn * tBN
        if BN_pad > BN:
            x_tcm = jnp.pad(x_tcm, ((0, 0), (0, 0), (0, BN_pad - BN)))
    else:
        tBN, n_bn, BN_pad = BN, 1, BN

    T_x = x_tcm.shape[0]

    kernel = functools.partial(_gtu_kernel, K=K, S=S, TT=TT, C=C, tBN=tBN)

    out = pl.pallas_call(
        kernel,
        out_shape=jax.ShapeDtypeStruct((T_out_pad, C, BN_pad), jnp.float32),
        grid=(n_bn, n_t),                     # t innermost -> x tile fetched once per BN tile
        in_specs=[
            # x: full time & channel extent, tiled over BN; block index constant along
            # the inner (time) grid axis so the slab is not re-fetched per time block.
            pl.BlockSpec((T_x, C, tBN), lambda bn, t: (0, 0, bn)),
            pl.BlockSpec((K, C, C), lambda bn, t: (0, 0, 0)),   # w_p resident
            pl.BlockSpec((K, C, C), lambda bn, t: (0, 0, 0)),   # w_q resident
            pl.BlockSpec((C, 1), lambda bn, t: (0, 0)),         # b_p
            pl.BlockSpec((C, 1), lambda bn, t: (0, 0)),         # b_q
        ],
        out_specs=pl.BlockSpec((TT, C, tBN), lambda bn, t: (t, 0, bn)),
        compiler_params=pltpu.CompilerParams(
            dimension_semantics=("parallel", "parallel")),
    )(x_tcm, w_p, w_q, b_p, b_q)

    return out[:T_out, :, :BN]


def gtu_forward(x_nchw, w_torch, b_torch, *, kernel_size, time_strides):
    """x_nchw: (B, C, N, T) f32; w_torch: (2C, C, 1, K); b_torch: (2C,). Returns NCHW."""
    B, C, N, T = x_nchw.shape
    K = kernel_size
    S = time_strides
    T_out = (T - K) // S + 1

    # (B, C, N, T) -> (T, C, B*N): B*N on the lane (minor) axis for lane-dense IO.
    # TODO(synk): these HBM relayouts could be removed end-to-end by keeping DSTAGNN
    # activations in the (T, C, B*N) layout between layers.
    x_tcm = jnp.transpose(x_nchw, (3, 1, 0, 2)).reshape(T, C, B * N)
    x_tcm = x_tcm.astype(jnp.bfloat16)            # bf16 MXU inputs; f32 accumulation

    # torch weight (2C, C, 1, K) split into tanh/sigmoid halves: (K, C_out=C, C_in=C)
    w2d = w_torch[:, :, 0, :]                     # (2C, C, K)
    w_p = jnp.transpose(w2d[:C], (2, 0, 1)).astype(jnp.bfloat16)
    w_q = jnp.transpose(w2d[C:], (2, 0, 1)).astype(jnp.bfloat16)
    b_p = b_torch[:C].reshape(C, 1).astype(jnp.float32)
    b_q = b_torch[C:].reshape(C, 1).astype(jnp.float32)

    out_tcm = gtu_pallas(x_tcm, w_p, w_q, b_p, b_q,
                         kernel_size=K, time_strides=S)     # (T_out, C, B*N) f32
    out = out_tcm.reshape(T_out, C, B, N).transpose(2, 1, 3, 0)   # (B, C, N, T_out)
    return out


def gtu_reference(x_nchw, w_torch, b_torch, *, kernel_size, time_strides):
    """Pure-JAX f32 reference mirroring the PyTorch forward (for verification)."""
    B, C, N, T = x_nchw.shape
    K = kernel_size
    S = time_strides
    T_out = (T - K) // S + 1
    w2d = w_torch[:, :, 0, :]                     # (2C, C, K)
    ys = []
    for t in range(T_out):
        patch = x_nchw[:, :, :, t * S:t * S + K]  # (B, C, N, K)
        y = jnp.einsum('bcnk,ock->bon', patch, w2d,
                       precision=jax.lax.Precision.HIGHEST) + b_torch[None, :, None]
        ys.append(y)
    y = jnp.stack(ys, axis=-1)                    # (B, 2C, N, T_out)
    p = y[:, :C]
    q = y[:, C:]
    return jnp.tanh(p) * jax.nn.sigmoid(q)


def _run_case(key, B, C, N, T, K, S, **pallas_kwargs):
    kx, kw, kb = jax.random.split(key, 3)
    x = jax.random.normal(kx, (B, C, N, T), dtype=jnp.float32)
    fan_in = C * 1 * K
    bound = 1.0 / np.sqrt(fan_in)
    w = jax.random.uniform(kw, (2 * C, C, 1, K), minval=-bound, maxval=bound,
                           dtype=jnp.float32)
    b = jax.random.uniform(kb, (2 * C,), minval=-bound, maxval=bound,
                           dtype=jnp.float32)

    if pallas_kwargs:
        # route custom tile sizes through gtu_pallas while keeping gtu_forward's layout code
        def fwd(xx, ww, bb):
            Bq, Cq, Nq, Tq = xx.shape
            T_out = (Tq - K) // S + 1
            x_tcm = jnp.transpose(xx, (3, 1, 0, 2)).reshape(Tq, Cq, Bq * Nq).astype(jnp.bfloat16)
            w2d = ww[:, :, 0, :]
            w_p = jnp.transpose(w2d[:Cq], (2, 0, 1)).astype(jnp.bfloat16)
            w_q = jnp.transpose(w2d[Cq:], (2, 0, 1)).astype(jnp.bfloat16)
            b_p = bb[:Cq].reshape(Cq, 1).astype(jnp.float32)
            b_q = bb[Cq:].reshape(Cq, 1).astype(jnp.float32)
            o = gtu_pallas(x_tcm, w_p, w_q, b_p, b_q, kernel_size=K, time_strides=S,
                           **pallas_kwargs)
            return o.reshape(T_out, Cq, Bq, Nq).transpose(2, 1, 3, 0)
        out = fwd(x, w, b)
    else:
        out = gtu_forward(x, w, b, kernel_size=K, time_strides=S)

    out = jax.block_until_ready(out)
    ref = gtu_reference(x, w, b, kernel_size=K, time_strides=S)
    np.testing.assert_allclose(np.asarray(out), np.asarray(ref), rtol=5e-2, atol=5e-2)


if __name__ == "__main__":
    key = jax.random.PRNGKey(0)
    k1, k2 = jax.random.split(key)

    # Case 1: small DSTAGNN-like shapes, default tiling (single program).
    _run_case(k1, B=2, C=4, N=8, T=16, K=3, S=1)

    # Case 2: exercises time tiling + BN tiling + padding paths and stride > 1.
    _run_case(k2, B=4, C=8, N=48, T=24, K=3, S=2, tt_max=4, bn_tile=128)

    print("KERNEL_OK")
</pallas_src>

<mosaic_0001>
module attributes {stable_mosaic.version = 11 : i64} {
  func.func @_gtu_kernel(%arg0: i32, %arg1: i32, %arg2: memref<16x4x16xbf16, #tpu.memory_space<vmem>>, %arg3: memref<3x4x4xbf16, #tpu.memory_space<vmem>>, %arg4: memref<3x4x4xbf16, #tpu.memory_space<vmem>>, %arg5: memref<4x1xf32, #tpu.memory_space<vmem>>, %arg6: memref<4x1xf32, #tpu.memory_space<vmem>>, %arg7: memref<14x4x16xf32, #tpu.memory_space<vmem>>) attributes {dimension_semantics = [#tpu.dimension_semantics<parallel>, #tpu.dimension_semantics<parallel>], iteration_bounds = array<i64: 1, 1>, scalar_prefetch = 0 : i64, scratch_operands = 0 : i64, tpu.core_type = #tpu.core_type<tc>, window_params = [{transform_indices = @transform_0, window_bounds = array<i64: 16, 4, 16>}, {pipeline_mode = #tpu.pipeline_mode<synchronous>, transform_indices = @transform_1, window_bounds = array<i64: 3, 4, 4>}, {pipeline_mode = #tpu.pipeline_mode<synchronous>, transform_indices = @transform_2, window_bounds = array<i64: 3, 4, 4>}, {pipeline_mode = #tpu.pipeline_mode<synchronous>, transform_indices = @transform_3, window_bounds = array<i64: 4, 1>}, {pipeline_mode = #tpu.pipeline_mode<synchronous>, transform_indices = @transform_4, window_bounds = array<i64: 4, 1>}, {transform_indices = @transform_5, window_bounds = array<i64: 14, 4, 16>}]} {
    %c14_i32 = arith.constant 14 : i32
    %0 = arith.muli %arg1, %c14_i32 : i32
    %c0 = arith.constant 0 : index
    %c0_0 = arith.constant 0 : index
    %1 = vector.load %arg5[%c0, %c0_0] : memref<4x1xf32, #tpu.memory_space<vmem>>, vector<4x1xf32>
    %2 = vector.shape_cast %1 : vector<4x1xf32> to vector<4x1xf32>
    %3 = vector.broadcast %2 : vector<4x1xf32> to vector<4x16xf32>
    %c0_1 = arith.constant 0 : index
    %c0_2 = arith.constant 0 : index
    %4 = vector.load %arg6[%c0_1, %c0_2] : memref<4x1xf32, #tpu.memory_space<vmem>>, vector<4x1xf32>
    %5 = vector.shape_cast %4 : vector<4x1xf32> to vector<4x1xf32>
    %6 = vector.broadcast %5 : vector<4x1xf32> to vector<4x16xf32>
    %c0_i32 = arith.constant 0 : i32
    %7 = arith.addi %0, %c0_i32 : i32
    %c0_i32_3 = arith.constant 0 : i32
    %8 = arith.addi %7, %c0_i32_3 : i32
    %9 = arith.index_cast %8 : i32 to index
    %c0_4 = arith.constant 0 : index
    %c0_5 = arith.constant 0 : index
    %10 = vector.load %arg2[%9, %c0_4, %c0_5] : memref<16x4x16xbf16, #tpu.memory_space<vmem>>, vector<1x4x16xbf16>
    %11 = vector.shape_cast %10 : vector<1x4x16xbf16> to vector<4x16xbf16>
    %c0_6 = arith.constant 0 : index
    %c0_7 = arith.constant 0 : index
    %c0_8 = arith.constant 0 : index
    %12 = vector.load %arg3[%c0_6, %c0_7, %c0_8] : memref<3x4x4xbf16, #tpu.memory_space<vmem>>, vector<1x4x4xbf16>
    %13 = vector.shape_cast %12 : vector<1x4x4xbf16> to vector<4x4xbf16>
    %cst = arith.constant dense<0.000000e+00> : vector<4x16xf32>
    %14 = tpu.matmul %13, %11, %cst {dimension_numbers = #tpu.dot_dimension_numbers<[1], [0], [0], [1], [0, 0, 1, 1], [], []>} : vector<4x4xbf16>, vector<4x16xbf16>, vector<4x16xf32> -> vector<4x16xf32>
    %15 = arith.addf %3, %14 : vector<4x16xf32>
    %c0_9 = arith.constant 0 : index
    %c0_10 = arith.constant 0 : index
    %c0_11 = arith.constant 0 : index
    %16 = vector.load %arg4[%c0_9, %c0_10, %c0_11] : memref<3x4x4xbf16, #tpu.memory_space<vmem>>, vector<1x4x4xbf16>
    %17 = vector.shape_cast %16 : vector<1x4x4xbf16> to vector<4x4xbf16>
    %cst_12 = arith.constant dense<0.000000e+00> : vector<4x16xf32>
    %18 = tpu.matmul %17, %11, %cst_12 {dimension_numbers = #tpu.dot_dimension_numbers<[1], [0], [0], [1], [0, 0, 1, 1], [], []>} : vector<4x4xbf16>, vector<4x16xbf16>, vector<4x16xf32> -> vector<4x16xf32>
    %19 = arith.addf %6, %18 : vector<4x16xf32>
    %c0_i32_13 = arith.constant 0 : i32
    %20 = arith.addi %0, %c0_i32_13 : i32
    %c1_i32 = arith.constant 1 : i32
    %21 = arith.addi %20, %c1_i32 : i32
    %22 = arith.index_cast %21 : i32 to index
    %c0_14 = arith.constant 0 : index
    %c0_15 = arith.constant 0 : index
    %23 = vector.load %arg2[%22, %c0_14, %c0_15] : memref<16x4x16xbf16, #tpu.memory_space<vmem>>, vector<1x4x16xbf16>
    %24 = vector.shape_cast %23 : vector<1x4x16xbf16> to vector<4x16xbf16>
    %c1 = arith.constant 1 : index
    %c0_16 = arith.constant 0 : index
    %c0_17 = arith.constant 0 : index
    %25 = vector.load %arg3[%c1, %c0_16, %c0_17] : memref<3x4x4xbf16, #tpu.memory_space<vmem>>, vector<1x4x4xbf16>
    %26 = vector.shape_cast %25 : vector<1x4x4xbf16> to vector<4x4xbf16>
    %cst_18 = arith.constant dense<0.000000e+00> : vector<4x16xf32>
    %27 = tpu.matmul %26, %24, %cst_18 {dimension_numbers = #tpu.dot_dimension_numbers<[1], [0], [0], [1], [0, 0, 1, 1], [], []>} : vector<4x4xbf16>, vector<4x16xbf16>, vector<4x16xf32> -> vector<4x16xf32>
    %28 = arith.addf %15, %27 : vector<4x16xf32>
    %c1_19 = arith.constant 1 : index
    %c0_20 = arith.constant 0 : index
    %c0_21 = arith.constant 0 : index
    %29 = vector.load %arg4[%c1_19, %c0_20, %c0_21] : memref<3x4x4xbf16, #tpu.memory_space<vmem>>, vector<1x4x4xbf16>
    %30 = vector.shape_cast %29 : vector<1x4x4xbf16> to vector<4x4xbf16>
    %cst_22 = arith.constant dense<0.000000e+00> : vector<4x16xf32>
    %31 = tpu.matmul %30, %24, %cst_22 {dimension_numbers = #tpu.dot_dimension_numbers<[1], [0], [0], [1], [0, 0, 1, 1], [], []>} : vector<4x4xbf16>, vector<4x16xbf16>, vector<4x16xf32> -> vector<4x16xf32>
    %32 = arith.addf %19, %31 : vector<4x16xf32>
    %c0_i32_23 = arith.constant 0 : i32
    %33 = arith.addi %0, %c0_i32_23 : i32
    %c2_i32 = arith.constant 2 : i32
    %34 = arith.addi %33, %c2_i32 : i32
    %35 = arith.index_cast %34 : i32 to index
    %c0_24 = arith.constant 0 : index
    %c0_25 = arith.constant 0 : index
    %36 = vector.load %arg2[%35, %c0_24, %c0_25] : memref<16x4x16xbf16, #tpu.memory_space<vmem>>, vector<1x4x16xbf16>
    %37 = vector.shape_cast %36 : vector<1x4x16xbf16> to vector<4x16xbf16>
    %c2 = arith.constant 2 : index
    %c0_26 = arith.constant 0 : index
    %c0_27 = arith.constant 0 : index
    %38 = vector.load %arg3[%c2, %c0_26, %c0_27] : memref<3x4x4xbf16, #tpu.memory_space<vmem>>, vector<1x4x4xbf16>
    %39 = vector.shape_cast %38 : vector<1x4x4xbf16> to vector<4x4xbf16>
    %cst_28 = arith.constant dense<0.000000e+00> : vector<4x16xf32>
    %40 = tpu.matmul %39, %37, %cst_28 {dimension_numbers = #tpu.dot_dimension_numbers<[1], [0], [0], [1], [0, 0, 1, 1], [], []>} : vector<4x4xbf16>, vector<4x16xbf16>, vector<4x16xf32> -> vector<4x16xf32>
    %41 = arith.addf %28, %40 : vector<4x16xf32>
    %c2_29 = arith.constant 2 : index
    %c0_30 = arith.constant 0 : index
    %c0_31 = arith.constant 0 : index
    %42 = vector.load %arg4[%c2_29, %c0_30, %c0_31] : memref<3x4x4xbf16, #tpu.memory_space<vmem>>, vector<1x4x4xbf16>
    %43 = vector.shape_cast %42 : vector<1x4x4xbf16> to vector<4x4xbf16>
    %cst_32 = arith.constant dense<0.000000e+00> : vector<4x16xf32>
    %44 = tpu.matmul %43, %37, %cst_32 {dimension_numbers = #tpu.dot_dimension_numbers<[1], [0], [0], [1], [0, 0, 1, 1], [], []>} : vector<4x4xbf16>, vector<4x16xbf16>, vector<4x16xf32> -> vector<4x16xf32>
    %45 = arith.addf %32, %44 : vector<4x16xf32>
    %cst_33 = arith.constant 5.000000e-01 : f32
    %46 = vector.broadcast %cst_33 : f32 to vector<4x16xf32>
    %47 = arith.mulf %46, %45 : vector<4x16xf32>
    %48 = math.tanh %47 : vector<4x16xf32>
    %cst_34 = arith.constant 1.000000e+00 : f32
    %49 = vector.broadcast %cst_34 : f32 to vector<4x16xf32>
    %50 = arith.addf %49, %48 : vector<4x16xf32>
    %cst_35 = arith.constant 5.000000e-01 : f32
    %51 = vector.broadcast %cst_35 : f32 to vector<4x16xf32>
    %52 = arith.mulf %51, %50 : vector<4x16xf32>
    %53 = math.tanh %41 : vector<4x16xf32>
    %54 = arith.mulf %53, %52 : vector<4x16xf32>
    %c0_36 = arith.constant 0 : index
    %c0_37 = arith.constant 0 : index
    %c0_38 = arith.constant 0 : index
    %55 = vector.load %arg7[%c0_36, %c0_37, %c0_38] : memref<14x4x16xf32, #tpu.memory_space<vmem>>, vector<1x4x16xf32>
    %56 = vector.shape_cast %55 : vector<1x4x16xf32> to vector<4x16xf32>
    %57 = vector.shape_cast %54 : vector<4x16xf32> to vector<1x4x16xf32>
    tpu.vector_store %arg7[%c0_36, %c0_37, %c0_38], %57 {strides = array<i32>} : memref<14x4x16xf32, #tpu.memory_space<vmem>>, vector<1x4x16xf32>,
    %c1_i32_39 = arith.constant 1 : i32
    %58 = arith.addi %0, %c1_i32_39 : i32
    %c0_i32_40 = arith.constant 0 : i32
    %59 = arith.addi %58, %c0_i32_40 : i32
    %60 = arith.index_cast %59 : i32 to index
    %c0_41 = arith.constant 0 : index
    %c0_42 = arith.constant 0 : index
    %61 = vector.load %arg2[%60, %c0_41, %c0_42] : memref<16x4x16xbf16, #tpu.memory_space<vmem>>, vector<1x4x16xbf16>
    %62 = vector.shape_cast %61 : vector<1x4x16xbf16> to vector<4x16xbf16>
    %c0_43 = arith.constant 0 : index
    %c0_44 = arith.constant 0 : index
    %c0_45 = arith.constant 0 : index
    %63 = vector.load %arg3[%c0_43, %c0_44, %c0_45] : memref<3x4x4xbf16, #tpu.memory_space<vmem>>, vector<1x4x4xbf16>
    %64 = vector.shape_cast %63 : vector<1x4x4xbf16> to vector<4x4xbf16>
    %cst_46 = arith.constant dense<0.000000e+00> : vector<4x16xf32>
    %65 = tpu.matmul %64, %62, %cst_46 {dimension_numbers = #tpu.dot_dimension_numbers<[1], [0], [0], [1], [0, 0, 1, 1], [], []>} : vector<4x4xbf16>, vector<4x16xbf16>, vector<4x16xf32> -> vector<4x16xf32>
    %66 = arith.addf %3, %65 : vector<4x16xf32>
    %c0_47 = arith.constant 0 : index
    %c0_48 = arith.constant 0 : index
    %c0_49 = arith.constant 0 : index
    %67 = vector.load %arg4[%c0_47, %c0_48, %c0_49] : memref<3x4x4xbf16, #tpu.memory_space<vmem>>, vector<1x4x4xbf16>
    %68 = vector.shape_cast %67 : vector<1x4x4xbf16> to vector<4x4xbf16>
    %cst_50 = arith.constant dense<0.000000e+00> : vector<4x16xf32>
    %69 = tpu.matmul %68, %62, %cst_50 {dimension_numbers = #tpu.dot_dimension_numbers<[1], [0], [0], [1], [0, 0, 1, 1], [], []>} : vector<4x4xbf16>, vector<4x16xbf16>, vector<4x16xf32> -> vector<4x16xf32>
    %70 = arith.addf %6, %69 : vector<4x16xf32>
    %c1_i32_51 = arith.constant 1 : i32
    %71 = arith.addi %0, %c1_i32_51 : i32
    %c1_i32_52 = arith.constant 1 : i32
    %72 = arith.addi %71, %c1_i32_52 : i32
    %73 = arith.index_cast %72 : i32 to index
    %c0_53 = arith.constant 0 : index
    %c0_54 = arith.constant 0 : index
    %74 = vector.load %arg2[%73, %c0_53, %c0_54] : memref<16x4x16xbf16, #tpu.memory_space<vmem>>, vector<1x4x16xbf16>
    %75 = vector.shape_cast %74 : vector<1x4x16xbf16> to vector<4x16xbf16>
    %c1_55 = arith.constant 1 : index
    %c0_56 = arith.constant 0 : index
    %c0_57 = arith.constant 0 : index
    %76 = vector.load %arg3[%c1_55, %c0_56, %c0_57] : memref<3x4x4xbf16, #tpu.memory_space<vmem>>, vector<1x4x4xbf16>
    %77 = vector.shape_cast %76 : vector<1x4x4xbf16> to vector<4x4xbf16>
    %cst_58 = arith.constant dense<0.000000e+00> : vector<4x16xf32>
    %78 = tpu.matmul %77, %75, %cst_58 {dimension_numbers = #tpu.dot_dimension_numbers<[1], [0], [0], [1], [0, 0, 1, 1], [], []>} : vector<4x4xbf16>, vector<4x16xbf16>, vector<4x16xf32> -> vector<4x16xf32>
    %79 = arith.addf %66, %78 : vector<4x16xf32>
    %c1_59 = arith.constant 1 : index
    %c0_60 = arith.constant 0 : index
    %c0_61 = arith.constant 0 : index
    %80 = vector.load %arg4[%c1_59, %c0_60, %c0_61] : memref<3x4x4xbf16, #tpu.memory_space<vmem>>, vector<1x4x4xbf16>
    %81 = vector.shape_cast %80 : vector<1x4x4xbf16> to vector<4x4xbf16>
    %cst_62 = arith.constant dense<0.000000e+00> : vector<4x16xf32>
    %82 = tpu.matmul %81, %75, %cst_62 {dimension_numbers = #tpu.dot_dimension_numbers<[1], [0], [0], [1], [0, 0, 1, 1], [], []>} : vector<4x4xbf16>, vector<4x16xbf16>, vector<4x16xf32> -> vector<4x16xf32>
    %83 = arith.addf %70, %82 : vector<4x16xf32>
    %c1_i32_63 = arith.constant 1 : i32
    %84 = arith.addi %0, %c1_i32_63 : i32
    %c2_i32_64 = arith.constant 2 : i32
    %85 = arith.addi %84, %c2_i32_64 : i32
    %86 = arith.index_cast %85 : i32 to index
    %c0_65 = arith.constant 0 : index
    %c0_66 = arith.constant 0 : index
    %87 = vector.load %arg2[%86, %c0_65, %c0_66] : memref<16x4x16xbf16, #tpu.memory_space<vmem>>, vector<1x4x16xbf16>
    %88 = vector.shape_cast %87 : vector<1x4x16xbf16> to vector<4x16xbf16>
    %c2_67 = arith.constant 2 : index
    %c0_68 = arith.constant 0 : index
    %c0_69 = arith.constant 0 : index
    %89 = vector.load %arg3[%c2_67, %c0_68, %c0_69] : memref<3x4x4xbf16, #tpu.memory_space<vmem>>, vector<1x4x4xbf16>
    %90 = vector.shape_cast %89 : vector<1x4x4xbf16> to vector<4x4xbf16>
    %cst_70 = arith.constant dense<0.000000e+00> : vector<4x16xf32>
    %91 = tpu.matmul %90, %88, %cst_70 {dimension_numbers = #tpu.dot_dimension_numbers<[1], [0], [0], [1], [0, 0, 1, 1], [], []>} : vector<4x4xbf16>, vector<4x16xbf16>, vector<4x16xf32> -> vector<4x16xf32>
    %92 = arith.addf %79, %91 : vector<4x16xf32>
    %c2_71 = arith.constant 2 : index
    %c0_72 = arith.constant 0 : index
    %c0_73 = arith.constant 0 : index
    %93 = vector.load %arg4[%c2_71, %c0_72, %c0_73] : memref<3x4x4xbf16, #tpu.memory_space<vmem>>, vector<1x4x4xbf16>
    %94 = vector.shape_cast %93 : vector<1x4x4xbf16> to vector<4x4xbf16>
    %cst_74 = arith.constant dense<0.000000e+00> : vector<4x16xf32>
    %95 = tpu.matmul %94, %88, %cst_74 {dimension_numbers = #tpu.dot_dimension_numbers<[1], [0], [0], [1], [0, 0, 1, 1], [], []>} : vector<4x4xbf16>, vector<4x16xbf16>, vector<4x16xf32> -> vector<4x16xf32>
    %96 = arith.addf %83, %95 : vector<4x16xf32>
    %cst_75 = arith.constant 5.000000e-01 : f32
    %97 = vector.broadcast %cst_75 : f32 to vector<4x16xf32>
    %98 = arith.mulf %97, %96 : vector<4x16xf32>
    %99 = math.tanh %98 : vector<4x16xf32>
    %cst_76 = arith.constant 1.000000e+00 : f32
    %100 = vector.broadcast %cst_76 : f32 to vector<4x16xf32>
    %101 = arith.addf %100, %99 : vector<4x16xf32>
    %cst_77 = arith.constant 5.000000e-01 : f32
    %102 = vector.broadcast %cst_77 : f32 to vector<4x16xf32>
    %103 = arith.mulf %102, %101 : vector<4x16xf32>
    %104 = math.tanh %92 : vector<4x16xf32>
    %105 = arith.mulf %104, %103 : vector<4x16xf32>
    %c1_78 = arith.constant 1 : index
    %c0_79 = arith.constant 0 : index
    %c0_80 = arith.constant 0 : index
    %106 = vector.load %arg7[%c1_78, %c0_79, %c0_80] : memref<14x4x16xf32, #tpu.memory_space<vmem>>, vector<1x4x16xf32>
    %107 = vector.shape_cast %106 : vector<1x4x16xf32> to vector<4x16xf32>
    %108 = vector.shape_cast %105 : vector<4x16xf32> to vector<1x4x16xf32>
    tpu.vector_store %arg7[%c1_78, %c0_79, %c0_80], %108 {strides = array<i32>} : memref<14x4x16xf32, #tpu.memory_space<vmem>>, vector<1x4x16xf32>,
    %c2_i32_81 = arith.constant 2 : i32
    %109 = arith.addi %0, %c2_i32_81 : i32
    %c0_i32_82 = arith.constant 0 : i32
    %110 = arith.addi %109, %c0_i32_82 : i32
    %111 = arith.index_cast %110 : i32 to index
    %c0_83 = arith.constant 0 : index
    %c0_84 = arith.constant 0 : index
    %112 = vector.load %arg2[%111, %c0_83, %c0_84] : memref<16x4x16xbf16, #tpu.memory_space<vmem>>, vector<1x4x16xbf16>
    %113 = vector.shape_cast %112 : vector<1x4x16xbf16> to vector<4x16xbf16>
    %c0_85 = arith.constant 0 : index
    %c0_86 = arith.constant 0 : index
    %c0_87 = arith.constant 0 : index
    %114 = vector.load %arg3[%c0_85, %c0_86, %c0_87] : memref<3x4x4xbf16, #tpu.memory_space<vmem>>, vector<1x4x4xbf16>
    %115 = vector.shape_cast %114 : vector<1x4x4xbf16> to vector<4x4xbf16>
    %cst_88 = arith.constant dense<0.000000e+00> : vector<4x16xf32>
    %116 = tpu.matmul %115, %113, %cst_88 {dimension_numbers = #tpu.dot_dimension_numbers<[1], [0], [0], [1], [0, 0, 1, 1], [], []>} : vector<4x4xbf16>, vector<4x16xbf16>, vector<4x16xf32> -> vector<4x16xf32>
    %117 = arith.addf %3, %116 : vector<4x16xf32>
    %c0_89 = arith.constant 0 : index
    %c0_90 = arith.constant 0 : index
    %c0_91 = arith.constant 0 : index
    %118 = vector.load %arg4[%c0_89, %c0_90, %c0_91] : memref<3x4x4xbf16, #tpu.memory_space<vmem>>, vector<1x4x4xbf16>
    %119 = vector.shape_cast %118 : vector<1x4x4xbf16> to vector<4x4xbf16>
    %cst_92 = arith.constant dense<0.000000e+00> : vector<4x16xf32>
    %120 = tpu.matmul %119, %113, %cst_92 {dimension_numbers = #tpu.dot_dimension_numbers<[1], [0], [0], [1], [0, 0, 1, 1], [], []>} : vector<4x4xbf16>, vector<4x16xbf16>, vector<4x16xf32> -> vector<4x16xf32>
    %121 = arith.addf %6, %120 : vector<4x16xf32>
    %c2_i32_93 = arith.constant 2 : i32
    %122 = arith.addi %0, %c2_i32_93 : i32
    %c1_i32_94 = arith.constant 1 : i32
    %123 = arith.addi %122, %c1_i32_94 : i32
    %124 = arith.index_cast %123 : i32 to index
    %c0_95 = arith.constant 0 : index
    %c0_96 = arith.constant 0 : index
    %125 = vector.load %arg2[%124, %c0_95, %c0_96] : memref<16x4x16xbf16, #tpu.memory_space<vmem>>, vector<1x4x16xbf16>
    %126 = vector.shape_cast %125 : vector<1x4x16xbf16> to vector<4x16xbf16>
    %c1_97 = arith.constant 1 : index
    %c0_98 = arith.constant 0 : index
    %c0_99 = arith.constant 0 : index
    %127 = vector.load %arg3[%c1_97, %c0_98, %c0_99] : memref<3x4x4xbf16, #tpu.memory_space<vmem>>, vector<1x4x4xbf16>
    %128 = vector.shape_cast %127 : vector<1x4x4xbf16> to vector<4x4xbf16>
    %cst_100 = arith.constant dense<0.000000e+00> : vector<4x16xf32>
    %129 = tpu.matmul %128, %126, %cst_100 {dimension_numbers = #tpu.dot_dimension_numbers<[1], [0], [0], [1], [0, 0, 1, 1], [], []>} : vector<4x4xbf16>, vector<4x16xbf16>, vector<4x16xf32> -> vector<4x16xf32>
    %130 = arith.addf %117, %129 : vector<4x16xf32>
    %c1_101 = arith.constant 1 : index
    %c0_102 = arith.constant 0 : index
    %c0_103 = arith.constant 0 : index
    %131 = vector.load %arg4[%c1_101, %c0_102, %c0_103] : memref<3x4x4xbf16, #tpu.memory_space<vmem>>, vector<1x4x4xbf16>
    %132 = vector.shape_cast %131 : vector<1x4x4xbf16> to vector<4x4xbf16>
    %cst_104 = arith.constant dense<0.000000e+00> : vector<4x16xf32>
    %133 = tpu.matmul %132, %126, %cst_104 {dimension_numbers = #tpu.dot_dimension_numbers<[1], [0], [0], [1], [0, 0, 1, 1], [], []>} : vector<4x4xbf16>, vector<4x16xbf16>, vector<4x16xf32> -> vector<4x16xf32>
    %134 = arith.addf %121, %133 : vector<4x16xf32>
    %c2_i32_105 = arith.constant 2 : i32
    %135 = arith.addi %0, %c2_i32_105 : i32
    %c2_i32_106 = arith.constant 2 : i32
    %136 = arith.addi %135, %c2_i32_106 : i32
    %137 = arith.index_cast %136 : i32 to index
    %c0_107 = arith.constant 0 : index
    %c0_108 = arith.constant 0 : index
    %138 = vector.load %arg2[%137, %c0_107, %c0_108] : memref<16x4x16xbf16, #tpu.memory_space<vmem>>, vector<1x4x16xbf16>
    %139 = vector.shape_cast %138 : vector<1x4x16xbf16> to vector<4x16xbf16>
    %c2_109 = arith.constant 2 : index
    %c0_110 = arith.constant 0 : index
    %c0_111 = arith.constant 0 : index
    %140 = vector.load %arg3[%c2_109, %c0_110, %c0_111] : memref<3x4x4xbf16, #tpu.memory_space<vmem>>, vector<1x4x4xbf16>
    %141 = vector.shape_cast %140 : vector<1x4x4xbf16> to vector<4x4xbf16>
    %cst_112 = arith.constant dense<0.000000e+00> : vector<4x16xf32>
    %142 = tpu.matmul %141, %139, %cst_112 {dimension_numbers = #tpu.dot_dimension_numbers<[1], [0], [0], [1], [0, 0, 1, 1], [], []>} : vector<4x4xbf16>, vector<4x16xbf16>, vector<4x16xf32> -> vector<4x16xf32>
    %143 = arith.addf %130, %142 : vector<4x16xf32>
    %c2_113 = arith.constant 2 : index
    %c0_114 = arith.constant 0 : index
    %c0_115 = arith.constant 0 : index
    %144 = vector.load %arg4[%c2_113, %c0_114, %c0_115] : memref<3x4x4xbf16, #tpu.memory_space<vmem>>, vector<1x4x4xbf16>
    %145 = vector.shape_cast %144 : vector<1x4x4xbf16> to vector<4x4xbf16>
    %cst_116 = arith.constant dense<0.000000e+00> : vector<4x16xf32>
    %146 = tpu.matmul %145, %139, %cst_116 {dimension_numbers = #tpu.dot_dimension_numbers<[1], [0], [0], [1], [0, 0, 1, 1], [], []>} : vector<4x4xbf16>, vector<4x16xbf16>, vector<4x16xf32> -> vector<4x16xf32>
    %147 = arith.addf %134, %146 : vector<4x16xf32>
    %cst_117 = arith.constant 5.000000e-01 : f32
    %148 = vector.broadcast %cst_117 : f32 to vector<4x16xf32>
    %149 = arith.mulf %148, %147 : vector<4x16xf32>
    %150 = math.tanh %149 : vector<4x16xf32>
    %cst_118 = arith.constant 1.000000e+00 : f32
    %151 = vector.broadcast %cst_118 : f32 to vector<4x16xf32>
    %152 = arith.addf %151, %150 : vector<4x16xf32>
    %cst_119 = arith.constant 5.000000e-01 : f32
    %153 = vector.broadcast %cst_119 : f32 to vector<4x16xf32>
    %154 = arith.mulf %153, %152 : vector<4x16xf32>
    %155 = math.tanh %143 : vector<4x16xf32>
    %156 = arith.mulf %155, %154 : vector<4x16xf32>
    %c2_120 = arith.constant 2 : index
    %c0_121 = arith.constant 0 : index
    %c0_122 = arith.constant 0 : index
    %157 = vector.load %arg7[%c2_120, %c0_121, %c0_122] : memref<14x4x16xf32, #tpu.memory_space<vmem>>, vector<1x4x16xf32>
    %158 = vector.shape_cast %157 : vector<1x4x16xf32> to vector<4x16xf32>
    %159 = vector.shape_cast %156 : vector<4x16xf32> to vector<1x4x16xf32>
    tpu.vector_store %arg7[%c2_120, %c0_121, %c0_122], %159 {strides = array<i32>} : memref<14x4x16xf32, #tpu.memory_space<vmem>>, vector<1x4x16xf32>,
    %c3_i32 = arith.constant 3 : i32
    %160 = arith.addi %0, %c3_i32 : i32
    %c0_i32_123 = arith.constant 0 : i32
    %161 = arith.addi %160, %c0_i32_123 : i32
    %162 = arith.index_cast %161 : i32 to index
    %c0_124 = arith.constant 0 : index
    %c0_125 = arith.constant 0 : index
    %163 = vector.load %arg2[%162, %c0_124, %c0_125] : memref<16x4x16xbf16, #tpu.memory_space<vmem>>, vector<1x4x16xbf16>
    %164 = vector.shape_cast %163 : vector<1x4x16xbf16> to vector<4x16xbf16>
    %c0_126 = arith.constant 0 : index
    %c0_127 = arith.constant 0 : index
    %c0_128 = arith.constant 0 : index
    %165 = vector.load %arg3[%c0_126, %c0_127, %c0_128] : memref<3x4x4xbf16, #tpu.memory_space<vmem>>, vector<1x4x4xbf16>
    %166 = vector.shape_cast %165 : vector<1x4x4xbf16> to vector<4x4xbf16>
    %cst_129 = arith.constant dense<0.000000e+00> : vector<4x16xf32>
    %167 = tpu.matmul %166, %164, %cst_129 {dimension_numbers = #tpu.dot_dimension_numbers<[1], [0], [0], [1], [0, 0, 1, 1], [], []>} : vector<4x4xbf16>, vector<4x16xbf16>, vector<4x16xf32> -> vector<4x16xf32>
    %168 = arith.addf %3, %167 : vector<4x16xf32>
    %c0_130 = arith.constant 0 : index
    %c0_131 = arith.constant 0 : index
    %c0_132 = arith.constant 0 : index
    %169 = vector.load %arg4[%c0_130, %c0_131, %c0_132] : memref<3x4x4xbf16, #tpu.memory_space<vmem>>, vector<1x4x4xbf16>
    %170 = vector.shape_cast %169 : vector<1x4x4xbf16> to vector<4x4xbf16>
    %cst_133 = arith.constant dense<0.000000e+00> : vector<4x16xf32>
    %171 = tpu.matmul %170, %164, %cst_133 {dimension_numbers = #tpu.dot_dimension_numbers<[1], [0], [0], [1], [0, 0, 1, 1], [], []>} : vector<4x4xbf16>, vector<4x16xbf16>, vector<4x16xf32> -> vector<4x16xf32>
    %172 = arith.addf %6, %171 : vector<4x16xf32>
    %c3_i32_134 = arith.constant 3 : i32
    %173 = arith.addi %0, %c3_i32_134 : i32
    %c1_i32_135 = arith.constant 1 : i32
    %174 = arith.addi %173, %c1_i32_135 : i32
    %175 = arith.index_cast %174 : i32 to index
    %c0_136 = arith.constant 0 : index
    %c0_137 = arith.constant 0 : index
    %176 = vector.load %arg2[%175, %c0_136, %c0_137] : memref<16x4x16xbf16, #tpu.memory_space<vmem>>, vector<1x4x16xbf16>
    %177 = vector.shape_cast %176 : vector<1x4x16xbf16> to vector<4x16xbf16>
    %c1_138 = arith.constant 1 : index
    %c0_139 = arith.constant 0 : index
    %c0_140 = arith.constant 0 : index
    %178 = vector.load %arg3[%c1_138, %c0_139, %c0_140] : memref<3x4x4xbf16, #tpu.memory_space<vmem>>, vector<1x4x4xbf16>
    %179 = vector.shape_cast %178 : vector<1x4x4xbf16> to vector<4x4xbf16>
    %cst_141 = arith.constant dense<0.000000e+00> : vector<4x16xf32>
    %180 = tpu.matmul %179, %177, %cst_141 {dimension_numbers = #tpu.dot_dimension_numbers<[1], [0], [0], [1], [0, 0, 1, 1], [], []>} : vector<4x4xbf16>, vector<4x16xbf16>, vector<4x16xf32> -> vector<4x16xf32>
    %181 = arith.addf %168, %180 : vector<4x16xf32>
    %c1_142 = arith.constant 1 : index
    %c0_143 = arith.constant 0 : index
    %c0_144 = arith.constant 0 : index
    %182 = vector.load %arg4[%c1_142, %c0_143, %c0_144] : memref<3x4x4xbf16, #tpu.memory_space<vmem>>, vector<1x4x4xbf16>
    %183 = vector.shape_cast %182 : vector<1x4x4xbf16> to vector<4x4xbf16>
    %cst_145 = arith.constant dense<0.000000e+00> : vector<4x16xf32>
    %184 = tpu.matmul %183, %177, %cst_145 {dimension_numbers = #tpu.dot_dimension_numbers<[1], [0], [0], [1], [0, 0, 1, 1], [], []>} : vector<4x4xbf16>, vector<4x16xbf16>, vector<4x16xf32> -> vector<4x16xf32>
    %185 = arith.addf %172, %184 : vector<4x16xf32>
    %c3_i32_146 = arith.constant 3 : i32
    %186 = arith.addi %0, %c3_i32_146 : i32
    %c2_i32_147 = arith.constant 2 : i32
    %187 = arith.addi %186, %c2_i32_147 : i32
    %188 = arith.index_cast %187 : i32 to index
    %c0_148 = arith.constant 0 : index
    %c0_149 = arith.constant 0 : index
    %189 = vector.load %arg2[%188, %c0_148, %c0_149] : memref<16x4x16xbf16, #tpu.memory_space<vmem>>, vector<1x4x16xbf16>
    %190 = vector.shape_cast %189 : vector<1x4x16xbf16> to vector<4x16xbf16>
    %c2_150 = arith.constant 2 : index
    %c0_151 = arith.constant 0 : index
    %c0_152 = arith.constant 0 : index
    %191 = vector.load %arg3[%c2_150, %c0_151, %c0_152] : memref<3x4x4xbf16, #tpu.memory_space<vmem>>, vector<1x4x4xbf16>
    %192 = vector.shape_cast %191 : vector<1x4x4xbf16> to vector<4x4xbf16>
    %cst_153 = arith.constant dense<0.000000e+00> : vector<4x16xf32>
    %193 = tpu.matmul %192, %190, %cst_153 {dimension_numbers = #tpu.dot_dimension_numbers<[1], [0], [0], [1], [0, 0, 1, 1], [], []>} : vector<4x4xbf16>, vector<4x16xbf16>, vector<4x16xf32> -> vector<4x16xf32>
    %194 = arith.addf %181, %193 : vector<4x16xf32>
    %c2_154 = arith.constant 2 : index
    %c0_155 = arith.constant 0 : index
    %c0_156 = arith.constant 0 : index
    %195 = vector.load %arg4[%c2_154, %c0_155, %c0_156] : memref<3x4x4xbf16, #tpu.memory_space<vmem>>, vector<1x4x4xbf16>
    %196 = vector.shape_cast %195 : vector<1x4x4xbf16> to vector<4x4xbf16>
    %cst_157 = arith.constant dense<0.000000e+00> : vector<4x16xf32>
    %197 = tpu.matmul %196, %190, %cst_157 {dimension_numbers = #tpu.dot_dimension_numbers<[1], [0], [0], [1], [0, 0, 1, 1], [], []>} : vector<4x4xbf16>, vector<4x16xbf16>, vector<4x16xf32> -> vector<4x16xf32>
    %198 = arith.addf %185, %197 : vector<4x16xf32>
    %cst_158 = arith.constant 5.000000e-01 : f32
    %199 = vector.broadcast %cst_158 : f32 to vector<4x16xf32>
    %200 = arith.mulf %199, %198 : vector<4x16xf32>
    %201 = math.tanh %200 : vector<4x16xf32>
    %cst_159 = arith.constant 1.000000e+00 : f32
    %202 = vector.broadcast %cst_159 : f32 to vector<4x16xf32>
    %203 = arith.addf %202, %201 : vector<4x16xf32>
    %cst_160 = arith.constant 5.000000e-01 : f32
    %204 = vector.broadcast %cst_160 : f32 to vector<4x16xf32>
    %205 = arith.mulf %204, %203 : vector<4x16xf32>
    %206 = math.tanh %194 : vector<4x16xf32>
    %207 = arith.mulf %206, %205 : vector<4x16xf32>
    %c3 = arith.constant 3 : index
    %c0_161 = arith.constant 0 : index
    %c0_162 = arith.constant 0 : index
    %208 = vector.load %arg7[%c3, %c0_161, %c0_162] : memref<14x4x16xf32, #tpu.memory_space<vmem>>, vector<1x4x16xf32>
    %209 = vector.shape_cast %208 : vector<1x4x16xf32> to vector<4x16xf32>
    %210 = vector.shape_cast %207 : vector<4x16xf32> to vector<1x4x16xf32>
    tpu.vector_store %arg7[%c3, %c0_161, %c0_162], %210 {strides = array<i32>} : memref<14x4x16xf32, #tpu.memory_space<vmem>>, vector<1x4x16xf32>,
    %c4_i32 = arith.constant 4 : i32
    %211 = arith.addi %0, %c4_i32 : i32
    %c0_i32_163 = arith.constant 0 : i32
    %212 = arith.addi %211, %c0_i32_163 : i32
    %213 = arith.index_cast %212 : i32 to index
    %c0_164 = arith.constant 0 : index
    %c0_165 = arith.constant 0 : index
    %214 = vector.load %arg2[%213, %c0_164, %c0_165] : memref<16x4x16xbf16, #tpu.memory_space<vmem>>, vector<1x4x16xbf16>
    %215 = vector.shape_cast %214 : vector<1x4x16xbf16> to vector<4x16xbf16>
    %c0_166 = arith.constant 0 : index
    %c0_167 = arith.constant 0 : index
    %c0_168 = arith.constant 0 : index
    %216 = vector.load %arg3[%c0_166, %c0_167, %c0_168] : memref<3x4x4xbf16, #tpu.memory_space<vmem>>, vector<1x4x4xbf16>
    %217 = vector.shape_cast %216 : vector<1x4x4xbf16> to vector<4x4xbf16>
    %cst_169 = arith.constant dense<0.000000e+00> : vector<4x16xf32>
    %218 = tpu.matmul %217, %215, %cst_169 {dimension_numbers = #tpu.dot_dimension_numbers<[1], [0], [0], [1], [0, 0, 1, 1], [], []>} : vector<4x4xbf16>, vector<4x16xbf16>, vector<4x16xf32> -> vector<4x16xf32>
    %219 = arith.addf %3, %218 : vector<4x16xf32>
    %c0_170 = arith.constant 0 : index
    %c0_171 = arith.constant 0 : index
    %c0_172 = arith.constant 0 : index
    %220 = vector.load %arg4[%c0_170, %c0_171, %c0_172] : memref<3x4x4xbf16, #tpu.memory_space<vmem>>, vector<1x4x4xbf16>
    %221 = vector.shape_cast %220 : vector<1x4x4xbf16> to vector<4x4xbf16>
    %cst_173 = arith.constant dense<0.000000e+00> : vector<4x16xf32>
    %222 = tpu.matmul %221, %215, %cst_173 {dimension_numbers = #tpu.dot_dimension_numbers<[1], [0], [0], [1], [0, 0, 1, 1], [], []>} : vector<4x4xbf16>, vector<4x16xbf16>, vector<4x16xf32> -> vector<4x16xf32>
    %223 = arith.addf %6, %222 : vector<4x16xf32>
    %c4_i32_174 = arith.constant 4 : i32
    %224 = arith.addi %0, %c4_i32_174 : i32
    %c1_i32_175 = arith.constant 1 : i32
    %225 = arith.addi %224, %c1_i32_175 : i32
    %226 = arith.index_cast %225 : i32 to index
    %c0_176 = arith.constant 0 : index
    %c0_177 = arith.constant 0 : index
    %227 = vector.load %arg2[%226, %c0_176, %c0_177] : memref<16x4x16xbf16, #tpu.memory_space<vmem>>, vector<1x4x16xbf16>
    %228 = vector.shape_cast %227 : vector<1x4x16xbf16> to vector<4x16xbf16>
    %c1_178 = arith.constant 1 : index
    %c0_179 = arith.constant 0 : index
    %c0_180 = arith.constant 0 : index
    %229 = vector.load %arg3[%c1_178, %c0_179, %c0_180] : memref<3x4x4xbf16, #tpu.memory_space<vmem>>, vector<1x4x4xbf16>
    %230 = vector.shape_cast %229 : vector<1x4x4xbf16> to vector<4x4xbf16>
    %cst_181 = arith.constant dense<0.000000e+00> : vector<4x16xf32>
    %231 = tpu.matmul %230, %228, %cst_181 {dimension_numbers = #tpu.dot_dimension_numbers<[1], [0], [0], [1], [0, 0, 1, 1], [], []>} : vector<4x4xbf16>, vector<4x16xbf16>, vector<4x16xf32> -> vector<4x16xf32>
    %232 = arith.addf %219, %231 : vector<4x16xf32>
    %c1_182 = arith.constant 1 : index
    %c0_183 = arith.constant 0 : index
    %c0_184 = arith.constant 0 : index
    %233 = vector.load %arg4[%c1_182, %c0_183, %c0_184] : memref<3x4x4xbf16, #tpu.memory_space<vmem>>, vector<1x4x4xbf16>
    %234 = vector.shape_cast %233 : vector<1x4x4xbf16> to vector<4x4xbf16>
    %cst_185 = arith.constant dense<0.000000e+00> : vector<4x16xf32>
    %235 = tpu.matmul %234, %228, %cst_185 {dimension_numbers = #tpu.dot_dimension_numbers<[1], [0], [0], [1], [0, 0, 1, 1], [], []>} : vector<4x4xbf16>, vector<4x16xbf16>, vector<4x16xf32> -> vector<4x16xf32>
    %236 = arith.addf %223, %235 : vector<4x16xf32>
    %c4_i32_186 = arith.constant 4 : i32
    %237 = arith.addi %0, %c4_i32_186 : i32
    %c2_i32_187 = arith.constant 2 : i32
    %238 = arith.addi %237, %c2_i32_187 : i32
    %239 = arith.index_cast %238 : i32 to index
    %c0_188 = arith.constant 0 : index
    %c0_189 = arith.constant 0 : index
    %240 = vector.load %arg2[%239, %c0_188, %c0_189] : memref<16x4x16xbf16, #tpu.memory_space<vmem>>, vector<1x4x16xbf16>
    %241 = vector.shape_cast %240 : vector<1x4x16xbf16> to vector<4x16xbf16>
    %c2_190 = arith.constant 2 : index
    %c0_191 = arith.constant 0 : index
    %c0_192 = arith.constant 0 : index
    %242 = vector.load %arg3[%c2_190, %c0_191, %c0_192] : memref<3x4x4xbf16, #tpu.memory_space<vmem>>, vector<1x4x4xbf16>
    %243 = vector.shape_cast %242 : vector<1x4x4xbf16> to vector<4x4xbf16>
    %cst_193 = arith.constant dense<0.000000e+00> : vector<4x16xf32>
    %244 = tpu.matmul %243, %241, %cst_193 {dimension_numbers = #tpu.dot_dimension_numbers<[1], [0], [0], [1], [0, 0, 1, 1], [], []>} : vector<4x4xbf16>, vector<4x16xbf16>, vector<4x16xf32> -> vector<4x16xf32>
    %245 = arith.addf %232, %244 : vector<4x16xf32>
    %c2_194 = arith.constant 2 : index
    %c0_195 = arith.constant 0 : index
    %c0_196 = arith.constant 0 : index
    %246 = vector.load %arg4[%c2_194, %c0_195, %c0_196] : memref<3x4x4xbf16, #tpu.memory_space<vmem>>, vector<1x4x4xbf16>
    %247 = vector.shape_cast %246 : vector<1x4x4xbf16> to vector<4x4xbf16>
    %cst_197 = arith.constant dense<0.000000e+00> : vector<4x16xf32>
    %248 = tpu.matmul %247, %241, %cst_197 {dimension_numbers = #tpu.dot_dimension_numbers<[1], [0], [0], [1], [0, 0, 1, 1], [], []>} : vector<4x4xbf16>, vector<4x16xbf16>, vector<4x16xf32> -> vector<4x16xf32>
    %249 = arith.addf %236, %248 : vector<4x16xf32>
    %cst_198 = arith.constant 5.000000e-01 : f32
    %250 = vector.broadcast %cst_198 : f32 to vector<4x16xf32>
    %251 = arith.mulf %250, %249 : vector<4x16xf32>
    %252 = math.tanh %251 : vector<4x16xf32>
    %cst_199 = arith.constant 1.000000e+00 : f32
    %253 = vector.broadcast %cst_199 : f32 to vector<4x16xf32>
    %254 = arith.addf %253, %252 : vector<4x16xf32>
    %cst_200 = arith.constant 5.000000e-01 : f32
    %255 = vector.broadcast %cst_200 : f32 to vector<4x16xf32>
    %256 = arith.mulf %255, %254 : vector<4x16xf32>
    %257 = math.tanh %245 : vector<4x16xf32>
    %258 = arith.mulf %257, %256 : vector<4x16xf32>
    %c4 = arith.constant 4 : index
    %c0_201 = arith.constant 0 : index
    %c0_202 = arith.constant 0 : index
    %259 = vector.load %arg7[%c4, %c0_201, %c0_202] : memref<14x4x16xf32, #tpu.memory_space<vmem>>, vector<1x4x16xf32>
    %260 = vector.shape_cast %259 : vector<1x4x16xf32> to vector<4x16xf32>
    %261 = vector.shape_cast %258 : vector<4x16xf32> to vector<1x4x16xf32>
    tpu.vector_store %arg7[%c4, %c0_201, %c0_202], %261 {strides = array<i32>} : memref<14x4x16xf32, #tpu.memory_space<vmem>>, vector<1x4x16xf32>,
    %c5_i32 = arith.constant 5 : i32
    %262 = arith.addi %0, %c5_i32 : i32
    %c0_i32_203 = arith.constant 0 : i32
    %263 = arith.addi %262, %c0_i32_203 : i32
    %264 = arith.index_cast %263 : i32 to index
    %c0_204 = arith.constant 0 : index
    %c0_205 = arith.constant 0 : index
    %265 = vector.load %arg2[%264, %c0_204, %c0_205] : memref<16x4x16xbf16, #tpu.memory_space<vmem>>, vector<1x4x16xbf16>
    %266 = vector.shape_cast %265 : vector<1x4x16xbf16> to vector<4x16xbf16>
    %c0_206 = arith.constant 0 : index
    %c0_207 = arith.constant 0 : index
    %c0_208 = arith.constant 0 : index
    %267 = vector.load %arg3[%c0_206, %c0_207, %c0_208] : memref<3x4x4xbf16, #tpu.memory_space<vmem>>, vector<1x4x4xbf16>
    %268 = vector.shape_cast %267 : vector<1x4x4xbf16> to vector<4x4xbf16>
    %cst_209 = arith.constant dense<0.000000e+00> : vector<4x16xf32>
    %269 = tpu.matmul %268, %266, %cst_209 {dimension_numbers = #tpu.dot_dimension_numbers<[1], [0], [0], [1], [0, 0, 1, 1], [], []>} : vector<4x4xbf16>, vector<4x16xbf16>, vector<4x16xf32> -> vector<4x16xf32>
    %270 = arith.addf %3, %269 : vector<4x16xf32>
    %c0_210 = arith.constant 0 : index
    %c0_211 = arith.constant 0 : index
    %c0_212 = arith.constant 0 : index
    %271 = vector.load %arg4[%c0_210, %c0_211, %c0_212] : memref<3x4x4xbf16, #tpu.memory_space<vmem>>, vector<1x4x4xbf16>
    %272 = vector.shape_cast %271 : vector<1x4x4xbf16> to vector<4x4xbf16>
    %cst_213 = arith.constant dense<0.000000e+00> : vector<4x16xf32>
    %273 = tpu.matmul %272, %266, %cst_213 {dimension_numbers = #tpu.dot_dimension_numbers<[1], [0], [0], [1], [0, 0, 1, 1], [], []>} : vector<4x4xbf16>, vector<4x16xbf16>, vector<4x16xf32> -> vector<4x16xf32>
    %274 = arith.addf %6, %273 : vector<4x16xf32>
    %c5_i32_214 = arith.constant 5 : i32
    %275 = arith.addi %0, %c5_i32_214 : i32
    %c1_i32_215 = arith.constant 1 : i32
    %276 = arith.addi %275, %c1_i32_215 : i32
    %277 = arith.index_cast %276 : i32 to index
    %c0_216 = arith.constant 0 : index
    %c0_217 = arith.constant 0 : index
    %278 = vector.load %arg2[%277, %c0_216, %c0_217] : memref<16x4x16xbf16, #tpu.memory_space<vmem>>, vector<1x4x16xbf16>
    %279 = vector.shape_cast %278 : vector<1x4x16xbf16> to vector<4x16xbf16>
    %c1_218 = arith.constant 1 : index
    %c0_219 = arith.constant 0 : index
    %c0_220 = arith.constant 0 : index
    %280 = vector.load %arg3[%c1_218, %c0_219, %c0_220] : memref<3x4x4xbf16, #tpu.memory_space<vmem>>, vector<1x4x4xbf16>
    %281 = vector.shape_cast %280 : vector<1x4x4xbf16> to vector<4x4xbf16>
    %cst_221 = arith.constant dense<0.000000e+00> : vector<4x16xf32>
    %282 = tpu.matmul %281, %279, %cst_221 {dimension_numbers = #tpu.dot_dimension_numbers<[1], [0], [0], [1], [0, 0, 1, 1], [], []>} : vector<4x4xbf16>, vector<4x16xbf16>, vector<4x16xf32> -> vector<4x16xf32>
    %283 = arith.addf %270, %282 : vector<4x16xf32>
    %c1_222 = arith.constant 1 : index
    %c0_223 = arith.constant 0 : index
    %c0_224 = arith.constant 0 : index
    %284 = vector.load %arg4[%c1_222, %c0_223, %c0_224] : memref<3x4x4xbf16, #tpu.memory_space<vmem>>, vector<1x4x4xbf16>
    %285 = vector.shape_cast %284 : vector<1x4x4xbf16> to vector<4x4xbf16>
    %cst_225 = arith.constant dense<0.000000e+00> : vector<4x16xf32>
    %286 = tpu.matmul %285, %279, %cst_225 {dimension_numbers = #tpu.dot_dimension_numbers<[1], [0], [0], [1], [0, 0, 1, 1], [], []>} : vector<4x4xbf16>, vector<4x16xbf16>, vector<4x16xf32> -> vector<4x16xf32>
    %287 = arith.addf %274, %286 : vector<4x16xf32>
    %c5_i32_226 = arith.constant 5 : i32
    %288 = arith.addi %0, %c5_i32_226 : i32
    %c2_i32_227 = arith.constant 2 : i32
    %289 = arith.addi %288, %c2_i32_227 : i32
    %290 = arith.index_cast %289 : i32 to index
    %c0_228 = arith.constant 0 : index
    %c0_229 = arith.constant 0 : index
    %291 = vector.load %arg2[%290, %c0_228, %c0_229] : memref<16x4x16xbf16, #tpu.memory_space<vmem>>, vector<1x4x16xbf16>
    %292 = vector.shape_cast %291 : vector<1x4x16xbf16> to vector<4x16xbf16>
    %c2_230 = arith.constant 2 : index
    %c0_231 = arith.constant 0 : index
    %c0_232 = arith.constant 0 : index
    %293 = vector.load %arg3[%c2_230, %c0_231, %c0_232] : memref<3x4x4xbf16, #tpu.memory_space<vmem>>, vector<1x4x4xbf16>
    %294 = vector.shape_cast %293 : vector<1x4x4xbf16> to vector<4x4xbf16>
    %cst_233 = arith.constant dense<0.000000e+00> : vector<4x16xf32>
    %295 = tpu.matmul %294, %292, %cst_233 {dimension_numbers = #tpu.dot_dimension_numbers<[1], [0], [0], [1], [0, 0, 1, 1], [], []>} : vector<4x4xbf16>, vector<4x16xbf16>, vector<4x16xf32> -> vector<4x16xf32>
    %296 = arith.addf %283, %295 : vector<4x16xf32>
    %c2_234 = arith.constant 2 : index
    %c0_235 = arith.constant 0 : index
    %c0_236 = arith.constant 0 : index
    %297 = vector.load %arg4[%c2_234, %c0_235, %c0_236] : memref<3x4x4xbf16, #tpu.memory_space<vmem>>, vector<1x4x4xbf16>
    %298 = vector.shape_cast %297 : vector<1x4x4xbf16> to vector<4x4xbf16>
    %cst_237 = arith.constant dense<0.000000e+00> : vector<4x16xf32>
    %299 = tpu.matmul %298, %292, %cst_237 {dimension_numbers = #tpu.dot_dimension_numbers<[1], [0], [0], [1], [0, 0, 1, 1], [], []>} : vector<4x4xbf16>, vector<4x16xbf16>, vector<4x16xf32> -> vector<4x16xf32>
    %300 = arith.addf %287, %299 : vector<4x16xf32>
    %cst_238 = arith.constant 5.000000e-01 : f32
    %301 = vector.broadcast %cst_238 : f32 to vector<4x16xf32>
    %302 = arith.mulf %301, %300 : vector<4x16xf32>
    %303 = math.tanh %302 : vector<4x16xf32>
    %cst_239 = arith.constant 1.000000e+00 : f32
    %304 = vector.broadcast %cst_239 : f32 to vector<4x16xf32>
    %305 = arith.addf %304, %303 : vector<4x16xf32>
    %cst_240 = arith.constant 5.000000e-01 : f32
    %306 = vector.broadcast %cst_240 : f32 to vector<4x16xf32>
    %307 = arith.mulf %306, %305 : vector<4x16xf32>
    %308 = math.tanh %296 : vector<4x16xf32>
    %309 = arith.mulf %308, %307 : vector<4x16xf32>
    %c5 = arith.constant 5 : index
    %c0_241 = arith.constant 0 : index
    %c0_242 = arith.constant 0 : index
    %310 = vector.load %arg7[%c5, %c0_241, %c0_242] : memref<14x4x16xf32, #tpu.memory_space<vmem>>, vector<1x4x16xf32>
    %311 = vector.shape_cast %310 : vector<1x4x16xf32> to vector<4x16xf32>
    %312 = vector.shape_cast %309 : vector<4x16xf32> to vector<1x4x16xf32>
    tpu.vector_store %arg7[%c5, %c0_241, %c0_242], %312 {strides = array<i32>} : memref<14x4x16xf32, #tpu.memory_space<vmem>>, vector<1x4x16xf32>,
    %c6_i32 = arith.constant 6 : i32
    %313 = arith.addi %0, %c6_i32 : i32
    %c0_i32_243 = arith.constant 0 : i32
    %314 = arith.addi %313, %c0_i32_243 : i32
    %315 = arith.index_cast %314 : i32 to index
    %c0_244 = arith.constant 0 : index
    %c0_245 = arith.constant 0 : index
    %316 = vector.load %arg2[%315, %c0_244, %c0_245] : memref<16x4x16xbf16, #tpu.memory_space<vmem>>, vector<1x4x16xbf16>
    %317 = vector.shape_cast %316 : vector<1x4x16xbf16> to vector<4x16xbf16>
    %c0_246 = arith.constant 0 : index
    %c0_247 = arith.constant 0 : index
    %c0_248 = arith.constant 0 : index
    %318 = vector.load %arg3[%c0_246, %c0_247, %c0_248] : memref<3x4x4xbf16, #tpu.memory_space<vmem>>, vector<1x4x4xbf16>
    %319 = vector.shape_cast %318 : vector<1x4x4xbf16> to vector<4x4xbf16>
    %cst_249 = arith.constant dense<0.000000e+00> : vector<4x16xf32>
    %320 = tpu.matmul %319, %317, %cst_249 {dimension_numbers = #tpu.dot_dimension_numbers<[1], [0], [0], [1], [0, 0, 1, 1], [], []>} : vector<4x4xbf16>, vector<4x16xbf16>, vector<4x16xf32> -> vector<4x16xf32>
    %321 = arith.addf %3, %320 : vector<4x16xf32>
    %c0_250 = arith.constant 0 : index
    %c0_251 = arith.constant 0 : index
    %c0_252 = arith.constant 0 : index
    %322 = vector.load %arg4[%c0_250, %c0_251, %c0_252] : memref<3x4x4xbf16, #tpu.memory_space<vmem>>, vector<1x4x4xbf16>
    %323 = vector.shape_cast %322 : vector<1x4x4xbf16> to vector<4x4xbf16>
    %cst_253 = arith.constant dense<0.000000e+00> : vector<4x16xf32>
    %324 = tpu.matmul %323, %317, %cst_253 {dimension_numbers = #tpu.dot_dimension_numbers<[1], [0], [0], [1], [0, 0, 1, 1], [], []>} : vector<4x4xbf16>, vector<4x16xbf16>, vector<4x16xf32> -> vector<4x16xf32>
    %325 = arith.addf %6, %324 : vector<4x16xf32>
    %c6_i32_254 = arith.constant 6 : i32
    %326 = arith.addi %0, %c6_i32_254 : i32
    %c1_i32_255 = arith.constant 1 : i32
    %327 = arith.addi %326, %c1_i32_255 : i32
    %328 = arith.index_cast %327 : i32 to index
    %c0_256 = arith.constant 0 : index
    %c0_257 = arith.constant 0 : index
    %329 = vector.load %arg2[%328, %c0_256, %c0_257] : memref<16x4x16xbf16, #tpu.memory_space<vmem>>, vector<1x4x16xbf16>
    %330 = vector.shape_cast %329 : vector<1x4x16xbf16> to vector<4x16xbf16>
    %c1_258 = arith.constant 1 : index
    %c0_259 = arith.constant 0 : index
    %c0_260 = arith.constant 0 : index
    %331 = vector.load %arg3[%c1_258, %c0_259, %c0_260] : memref<3x4x4xbf16, #tpu.memory_space<vmem>>, vector<1x4x4xbf16>
    %332 = vector.shape_cast %331 : vector<1x4x4xbf16> to vector<4x4xbf16>
    %cst_261 = arith.constant dense<0.000000e+00> : vector<4x16xf32>
    %333 = tpu.matmul %332, %330, %cst_261 {dimension_numbers = #tpu.dot_dimension_numbers<[1], [0], [0], [1], [0, 0, 1, 1], [], []>} : vector<4x4xbf16>, vector<4x16xbf16>, vector<4x16xf32> -> vector<4x16xf32>
    %334 = arith.addf %321, %333 : vector<4x16xf32>
    %c1_262 = arith.constant 1 : index
    %c0_263 = arith.constant 0 : index
    %c0_264 = arith.constant 0 : index
    %335 = vector.load %arg4[%c1_262, %c0_263, %c0_264] : memref<3x4x4xbf16, #tpu.memory_space<vmem>>, vector<1x4x4xbf16>
    %336 = vector.shape_cast %335 : vector<1x4x4xbf16> to vector<4x4xbf16>
    %cst_265 = arith.constant dense<0.000000e+00> : vector<4x16xf32>
    %337 = tpu.matmul %336, %330, %cst_265 {dimension_numbers = #tpu.dot_dimension_numbers<[1], [0], [0], [1], [0, 0, 1, 1], [], []>} : vector<4x4xbf16>, vector<4x16xbf16>, vector<4x16xf32> -> vector<4x16xf32>
    %338 = arith.addf %325, %337 : vector<4x16xf32>
    %c6_i32_266 = arith.constant 6 : i32
    %339 = arith.addi %0, %c6_i32_266 : i32
    %c2_i32_267 = arith.constant 2 : i32
    %340 = arith.addi %339, %c2_i32_267 : i32
    %341 = arith.index_cast %340 : i32 to index
    %c0_268 = arith.constant 0 : index
    %c0_269 = arith.constant 0 : index
    %342 = vector.load %arg2[%341, %c0_268, %c0_269] : memref<16x4x16xbf16, #tpu.memory_space<vmem>>, vector<1x4x16xbf16>
    %343 = vector.shape_cast %342 : vector<1x4x16xbf16> to vector<4x16xbf16>
    %c2_270 = arith.constant 2 : index
    %c0_271 = arith.constant 0 : index
    %c0_272 = arith.constant 0 : index
    %344 = vector.load %arg3[%c2_270, %c0_271, %c0_272] : memref<3x4x4xbf16, #tpu.memory_space<vmem>>, vector<1x4x4xbf16>
    %345 = vector.shape_cast %344 : vector<1x4x4xbf16> to vector<4x4xbf16>
    %cst_273 = arith.constant dense<0.000000e+00> : vector<4x16xf32>
    %346 = tpu.matmul %345, %343, %cst_273 {dimension_numbers = #tpu.dot_dimension_numbers<[1], [0], [0], [1], [0, 0, 1, 1], [], []>} : vector<4x4xbf16>, vector<4x16xbf16>, vector<4x16xf32> -> vector<4x16xf32>
    %347 = arith.addf %334, %346 : vector<4x16xf32>
    %c2_274 = arith.constant 2 : index
    %c0_275 = arith.constant 0 : index
    %c0_276 = arith.constant 0 : index
    %348 = vector.load %arg4[%c2_274, %c0_275, %c0_276] : memref<3x4x4xbf16, #tpu.memory_space<vmem>>, vector<1x4x4xbf16>
    %349 = vector.shape_cast %348 : vector<1x4x4xbf16> to vector<4x4xbf16>
    %cst_277 = arith.constant dense<0.000000e+00> : vector<4x16xf32>
    %350 = tpu.matmul %349, %343, %cst_277 {dimension_numbers = #tpu.dot_dimension_numbers<[1], [0], [0], [1], [0, 0, 1, 1], [], []>} : vector<4x4xbf16>, vector<4x16xbf16>, vector<4x16xf32> -> vector<4x16xf32>
    %351 = arith.addf %338, %350 : vector<4x16xf32>
    %cst_278 = arith.constant 5.000000e-01 : f32
    %352 = vector.broadcast %cst_278 : f32 to vector<4x16xf32>
    %353 = arith.mulf %352, %351 : vector<4x16xf32>
    %354 = math.tanh %353 : vector<4x16xf32>
    %cst_279 = arith.constant 1.000000e+00 : f32
    %355 = vector.broadcast %cst_279 : f32 to vector<4x16xf32>
    %356 = arith.addf %355, %354 : vector<4x16xf32>
    %cst_280 = arith.constant 5.000000e-01 : f32
    %357 = vector.broadcast %cst_280 : f32 to vector<4x16xf32>
    %358 = arith.mulf %357, %356 : vector<4x16xf32>
    %359 = math.tanh %347 : vector<4x16xf32>
    %360 = arith.mulf %359, %358 : vector<4x16xf32>
    %c6 = arith.constant 6 : index
    %c0_281 = arith.constant 0 : index
    %c0_282 = arith.constant 0 : index
    %361 = vector.load %arg7[%c6, %c0_281, %c0_282] : memref<14x4x16xf32, #tpu.memory_space<vmem>>, vector<1x4x16xf32>
    %362 = vector.shape_cast %361 : vector<1x4x16xf32> to vector<4x16xf32>
    %363 = vector.shape_cast %360 : vector<4x16xf32> to vector<1x4x16xf32>
    tpu.vector_store %arg7[%c6, %c0_281, %c0_282], %363 {strides = array<i32>} : memref<14x4x16xf32, #tpu.memory_space<vmem>>, vector<1x4x16xf32>,
    %c7_i32 = arith.constant 7 : i32
    %364 = arith.addi %0, %c7_i32 : i32
    %c0_i32_283 = arith.constant 0 : i32
    %365 = arith.addi %364, %c0_i32_283 : i32
    %366 = arith.index_cast %365 : i32 to index
    %c0_284 = arith.constant 0 : index
    %c0_285 = arith.constant 0 : index
    %367 = vector.load %arg2[%366, %c0_284, %c0_285] : memref<16x4x16xbf16, #tpu.memory_space<vmem>>, vector<1x4x16xbf16>
    %368 = vector.shape_cast %367 : vector<1x4x16xbf16> to vector<4x16xbf16>
    %c0_286 = arith.constant 0 : index
    %c0_287 = arith.constant 0 : index
    %c0_288 = arith.constant 0 : index
    %369 = vector.load %arg3[%c0_286, %c0_287, %c0_288] : memref<3x4x4xbf16, #tpu.memory_space<vmem>>, vector<1x4x4xbf16>
    %370 = vector.shape_cast %369 : vector<1x4x4xbf16> to vector<4x4xbf16>
    %cst_289 = arith.constant dense<0.000000e+00> : vector<4x16xf32>
    %371 = tpu.matmul %370, %368, %cst_289 {dimension_numbers = #tpu.dot_dimension_numbers<[1], [0], [0], [1], [0, 0, 1, 1], [], []>} : vector<4x4xbf16>, vector<4x16xbf16>, vector<4x16xf32> -> vector<4x16xf32>
    %372 = arith.addf %3, %371 : vector<4x16xf32>
    %c0_290 = arith.constant 0 : index
    %c0_291 = arith.constant 0 : index
    %c0_292 = arith.constant 0 : index
    %373 = vector.load %arg4[%c0_290, %c0_291, %c0_292] : memref<3x4x4xbf16, #tpu.memory_space<vmem>>, vector<1x4x4xbf16>
    %374 = vector.shape_cast %373 : vector<1x4x4xbf16> to vector<4x4xbf16>
    %cst_293 = arith.constant dense<0.000000e+00> : vector<4x16xf32>
    %375 = tpu.matmul %374, %368, %cst_293 {dimension_numbers = #tpu.dot_dimension_numbers<[1], [0], [0], [1], [0, 0, 1, 1], [], []>} : vector<4x4xbf16>, vector<4x16xbf16>, vector<4x16xf32> -> vector<4x16xf32>
    %376 = arith.addf %6, %375 : vector<4x16xf32>
    %c7_i32_294 = arith.constant 7 : i32
    %377 = arith.addi %0, %c7_i32_294 : i32
    %c1_i32_295 = arith.constant 1 : i32
    %378 = arith.addi %377, %c1_i32_295 : i32
    %379 = arith.index_cast %378 : i32 to index
    %c0_296 = arith.constant 0 : index
    %c0_297 = arith.constant 0 : index
    %380 = vector.load %arg2[%379, %c0_296, %c0_297] : memref<16x4x16xbf16, #tpu.memory_space<vmem>>, vector<1x4x16xbf16>
    %381 = vector.shape_cast %380 : vector<1x4x16xbf16> to vector<4x16xbf16>
    %c1_298 = arith.constant 1 : index
    %c0_299 = arith.constant 0 : index
    %c0_300 = arith.constant 0 : index
    %382 = vector.load %arg3[%c1_298, %c0_299, %c0_300] : memref<3x4x4xbf16, #tpu.memory_space<vmem>>, vector<1x4x4xbf16>
    %383 = vector.shape_cast %382 : vector<1x4x4xbf16> to vector<4x4xbf16>
    %cst_301 = arith.constant dense<0.000000e+00> : vector<4x16xf32>
    %384 = tpu.matmul %383, %381, %cst_301 {dimension_numbers = #tpu.dot_dimension_numbers<[1], [0], [0], [1], [0, 0, 1, 1], [], []>} : vector<4x4xbf16>, vector<4x16xbf16>, vector<4x16xf32> -> vector<4x16xf32>
    %385 = arith.addf %372, %384 : vector<4x16xf32>
    %c1_302 = arith.constant 1 : index
    %c0_303 = arith.constant 0 : index
    %c0_304 = arith.constant 0 : index
    %386 = vector.load %arg4[%c1_302, %c0_303, %c0_304] : memref<3x4x4xbf16, #tpu.memory_space<vmem>>, vector<1x4x4xbf16>
    %387 = vector.shape_cast %386 : vector<1x4x4xbf16> to vector<4x4xbf16>
    %cst_305 = arith.constant dense<0.000000e+00> : vector<4x16xf32>
    %388 = tpu.matmul %387, %381, %cst_305 {dimension_numbers = #tpu.dot_dimension_numbers<[1], [0], [0], [1], [0, 0, 1, 1], [], []>} : vector<4x4xbf16>, vector<4x16xbf16>, vector<4x16xf32> -> vector<4x16xf32>
    %389 = arith.addf %376, %388 : vector<4x16xf32>
    %c7_i32_306 = arith.constant 7 : i32
    %390 = arith.addi %0, %c7_i32_306 : i32
    %c2_i32_307 = arith.constant 2 : i32
    %391 = arith.addi %390, %c2_i32_307 : i32
    %392 = arith.index_cast %391 : i32 to index
    %c0_308 = arith.constant 0 : index
    %c0_309 = arith.constant 0 : index
    %393 = vector.load %arg2[%392, %c0_308, %c0_309] : memref<16x4x16xbf16, #tpu.memory_space<vmem>>, vector<1x4x16xbf16>
    %394 = vector.shape_cast %393 : vector<1x4x16xbf16> to vector<4x16xbf16>
    %c2_310 = arith.constant 2 : index
    %c0_311 = arith.constant 0 : index
    %c0_312 = arith.constant 0 : index
    %395 = vector.load %arg3[%c2_310, %c0_311, %c0_312] : memref<3x4x4xbf16, #tpu.memory_space<vmem>>, vector<1x4x4xbf16>
    %396 = vector.shape_cast %395 : vector<1x4x4xbf16> to vector<4x4xbf16>
    %cst_313 = arith.constant dense<0.000000e+00> : vector<4x16xf32>
    %397 = tpu.matmul %396, %394, %cst_313 {dimension_numbers = #tpu.dot_dimension_numbers<[1], [0], [0], [1], [0, 0, 1, 1], [], []>} : vector<4x4xbf16>, vector<4x16xbf16>, vector<4x16xf32> -> vector<4x16xf32>
    %398 = arith.addf %385, %397 : vector<4x16xf32>
    %c2_314 = arith.constant 2 : index
    %c0_315 = arith.constant 0 : index
    %c0_316 = arith.constant 0 : index
    %399 = vector.load %arg4[%c2_314, %c0_315, %c0_316] : memref<3x4x4xbf16, #tpu.memory_space<vmem>>, vector<1x4x4xbf16>
    %400 = vector.shape_cast %399 : vector<1x4x4xbf16> to vector<4x4xbf16>
    %cst_317 = arith.constant dense<0.000000e+00> : vector<4x16xf32>
    %401 = tpu.matmul %400, %394, %cst_317 {dimension_numbers = #tpu.dot_dimension_numbers<[1], [0], [0], [1], [0, 0, 1, 1], [], []>} : vector<4x4xbf16>, vector<4x16xbf16>, vector<4x16xf32> -> vector<4x16xf32>
    %402 = arith.addf %389, %401 : vector<4x16xf32>
    %cst_318 = arith.constant 5.000000e-01 : f32
    %403 = vector.broadcast %cst_318 : f32 to vector<4x16xf32>
    %404 = arith.mulf %403, %402 : vector<4x16xf32>
    %405 = math.tanh %404 : vector<4x16xf32>
    %cst_319 = arith.constant 1.000000e+00 : f32
    %406 = vector.broadcast %cst_319 : f32 to vector<4x16xf32>
    %407 = arith.addf %406, %405 : vector<4x16xf32>
    %cst_320 = arith.constant 5.000000e-01 : f32
    %408 = vector.broadcast %cst_320 : f32 to vector<4x16xf32>
    %409 = arith.mulf %408, %407 : vector<4x16xf32>
    %410 = math.tanh %398 : vector<4x16xf32>
    %411 = arith.mulf %410, %409 : vector<4x16xf32>
    %c7 = arith.constant 7 : index
    %c0_321 = arith.constant 0 : index
    %c0_322 = arith.constant 0 : index
    %412 = vector.load %arg7[%c7, %c0_321, %c0_322] : memref<14x4x16xf32, #tpu.memory_space<vmem>>, vector<1x4x16xf32>
    %413 = vector.shape_cast %412 : vector<1x4x16xf32> to vector<4x16xf32>
    %414 = vector.shape_cast %411 : vector<4x16xf32> to vector<1x4x16xf32>
    tpu.vector_store %arg7[%c7, %c0_321, %c0_322], %414 {strides = array<i32>} : memref<14x4x16xf32, #tpu.memory_space<vmem>>, vector<1x4x16xf32>,
    %c8_i32 = arith.constant 8 : i32
    %415 = arith.addi %0, %c8_i32 : i32
    %c0_i32_323 = arith.constant 0 : i32
    %416 = arith.addi %415, %c0_i32_323 : i32
    %417 = arith.index_cast %416 : i32 to index
    %c0_324 = arith.constant 0 : index
    %c0_325 = arith.constant 0 : index
    %418 = vector.load %arg2[%417, %c0_324, %c0_325] : memref<16x4x16xbf16, #tpu.memory_space<vmem>>, vector<1x4x16xbf16>
    %419 = vector.shape_cast %418 : vector<1x4x16xbf16> to vector<4x16xbf16>
    %c0_326 = arith.constant 0 : index
    %c0_327 = arith.constant 0 : index
    %c0_328 = arith.constant 0 : index
    %420 = vector.load %arg3[%c0_326, %c0_327, %c0_328] : memref<3x4x4xbf16, #tpu.memory_space<vmem>>, vector<1x4x4xbf16>
    %421 = vector.shape_cast %420 : vector<1x4x4xbf16> to vector<4x4xbf16>
    %cst_329 = arith.constant dense<0.000000e+00> : vector<4x16xf32>
    %422 = tpu.matmul %421, %419, %cst_329 {dimension_numbers = #tpu.dot_dimension_numbers<[1], [0], [0], [1], [0, 0, 1, 1], [], []>} : vector<4x4xbf16>, vector<4x16xbf16>, vector<4x16xf32> -> vector<4x16xf32>
    %423 = arith.addf %3, %422 : vector<4x16xf32>
    %c0_330 = arith.constant 0 : index
    %c0_331 = arith.constant 0 : index
    %c0_332 = arith.constant 0 : index
    %424 = vector.load %arg4[%c0_330, %c0_331, %c0_332] : memref<3x4x4xbf16, #tpu.memory_space<vmem>>, vector<1x4x4xbf16>
    %425 = vector.shape_cast %424 : vector<1x4x4xbf16> to vector<4x4xbf16>
    %cst_333 = arith.constant dense<0.000000e+00> : vector<4x16xf32>
    %426 = tpu.matmul %425, %419, %cst_333 {dimension_numbers = #tpu.dot_dimension_numbers<[1], [0], [0], [1], [0, 0, 1, 1], [], []>} : vector<4x4xbf16>, vector<4x16xbf16>, vector<4x16xf32> -> vector<4x16xf32>
    %427 = arith.addf %6, %426 : vector<4x16xf32>
    %c8_i32_334 = arith.constant 8 : i32
    %428 = arith.addi %0, %c8_i32_334 : i32
    %c1_i32_335 = arith.constant 1 : i32
    %429 = arith.addi %428, %c1_i32_335 : i32
    %430 = arith.index_cast %429 : i32 to index
    %c0_336 = arith.constant 0 : index
    %c0_337 = arith.constant 0 : index
    %431 = vector.load %arg2[%430, %c0_336, %c0_337] : memref<16x4x16xbf16, #tpu.memory_space<vmem>>, vector<1x4x16xbf16>
    %432 = vector.shape_cast %431 : vector<1x4x16xbf16> to vector<4x16xbf16>
    %c1_338 = arith.constant 1 : index
    %c0_339 = arith.constant 0 : index
    %c0_340 = arith.constant 0 : index
    %433 = vector.load %arg3[%c1_338, %c0_339, %c0_340] : memref<3x4x4xbf16, #tpu.memory_space<vmem>>, vector<1x4x4xbf16>
    %434 = vector.shape_cast %433 : vector<1x4x4xbf16> to vector<4x4xbf16>
    %cst_341 = arith.constant dense<0.000000e+00> : vector<4x16xf32>
    %435 = tpu.matmul %434, %432, %cst_341 {dimension_numbers = #tpu.dot_dimension_numbers<[1], [0], [0], [1], [0, 0, 1, 1], [], []>} : vector<4x4xbf16>, vector<4x16xbf16>, vector<4x16xf32> -> vector<4x16xf32>
    %436 = arith.addf %423, %435 : vector<4x16xf32>
    %c1_342 = arith.constant 1 : index
    %c0_343 = arith.constant 0 : index
    %c0_344 = arith.constant 0 : index
    %437 = vector.load %arg4[%c1_342, %c0_343, %c0_344] : memref<3x4x4xbf16, #tpu.memory_space<vmem>>, vector<1x4x4xbf16>
    %438 = vector.shape_cast %437 : vector<1x4x4xbf16> to vector<4x4xbf16>
    %cst_345 = arith.constant dense<0.000000e+00> : vector<4x16xf32>
    %439 = tpu.matmul %438, %432, %cst_345 {dimension_numbers = #tpu.dot_dimension_numbers<[1], [0], [0], [1], [0, 0, 1, 1], [], []>} : vector<4x4xbf16>, vector<4x16xbf16>, vector<4x16xf32> -> vector<4x16xf32>
    %440 = arith.addf %427, %439 : vector<4x16xf32>
    %c8_i32_346 = arith.constant 8 : i32
    %441 = arith.addi %0, %c8_i32_346 : i32
    %c2_i32_347 = arith.constant 2 : i32
    %442 = arith.addi %441, %c2_i32_347 : i32
    %443 = arith.index_cast %442 : i32 to index
    %c0_348 = arith.constant 0 : index
    %c0_349 = arith.constant 0 : index
    %444 = vector.load %arg2[%443, %c0_348, %c0_349] : memref<16x4x16xbf16, #tpu.memory_space<vmem>>, vector<1x4x16xbf16>
    %445 = vector.shape_cast %444 : vector<1x4x16xbf16> to vector<4x16xbf16>
    %c2_350 = arith.constant 2 : index
    %c0_351 = arith.constant 0 : index
    %c0_352 = arith.constant 0 : index
    %446 = vector.load %arg3[%c2_350, %c0_351, %c0_352] : memref<3x4x4xbf16, #tpu.memory_space<vmem>>, vector<1x4x4xbf16>
    %447 = vector.shape_cast %446 : vector<1x4x4xbf16> to vector<4x4xbf16>
    %cst_353 = arith.constant dense<0.000000e+00> : vector<4x16xf32>
    %448 = tpu.matmul %447, %445, %cst_353 {dimension_numbers = #tpu.dot_dimension_numbers<[1], [0], [0], [1], [0, 0, 1, 1], [], []>} : vector<4x4xbf16>, vector<4x16xbf16>, vector<4x16xf32> -> vector<4x16xf32>
    %449 = arith.addf %436, %448 : vector<4x16xf32>
    %c2_354 = arith.constant 2 : index
    %c0_355 = arith.constant 0 : index
    %c0_356 = arith.constant 0 : index
    %450 = vector.load %arg4[%c2_354, %c0_355, %c0_356] : memref<3x4x4xbf16, #tpu.memory_space<vmem>>, vector<1x4x4xbf16>
    %451 = vector.shape_cast %450 : vector<1x4x4xbf16> to vector<4x4xbf16>
    %cst_357 = arith.constant dense<0.000000e+00> : vector<4x16xf32>
    %452 = tpu.matmul %451, %445, %cst_357 {dimension_numbers = #tpu.dot_dimension_numbers<[1], [0], [0], [1], [0, 0, 1, 1], [], []>} : vector<4x4xbf16>, vector<4x16xbf16>, vector<4x16xf32> -> vector<4x16xf32>
    %453 = arith.addf %440, %452 : vector<4x16xf32>
    %cst_358 = arith.constant 5.000000e-01 : f32
    %454 = vector.broadcast %cst_358 : f32 to vector<4x16xf32>
    %455 = arith.mulf %454, %453 : vector<4x16xf32>
    %456 = math.tanh %455 : vector<4x16xf32>
    %cst_359 = arith.constant 1.000000e+00 : f32
    %457 = vector.broadcast %cst_359 : f32 to vector<4x16xf32>
    %458 = arith.addf %457, %456 : vector<4x16xf32>
    %cst_360 = arith.constant 5.000000e-01 : f32
    %459 = vector.broadcast %cst_360 : f32 to vector<4x16xf32>
    %460 = arith.mulf %459, %458 : vector<4x16xf32>
    %461 = math.tanh %449 : vector<4x16xf32>
    %462 = arith.mulf %461, %460 : vector<4x16xf32>
    %c8 = arith.constant 8 : index
    %c0_361 = arith.constant 0 : index
    %c0_362 = arith.constant 0 : index
    %463 = vector.load %arg7[%c8, %c0_361, %c0_362] : memref<14x4x16xf32, #tpu.memory_space<vmem>>, vector<1x4x16xf32>
    %464 = vector.shape_cast %463 : vector<1x4x16xf32> to vector<4x16xf32>
    %465 = vector.shape_cast %462 : vector<4x16xf32> to vector<1x4x16xf32>
    tpu.vector_store %arg7[%c8, %c0_361, %c0_362], %465 {strides = array<i32>} : memref<14x4x16xf32, #tpu.memory_space<vmem>>, vector<1x4x16xf32>,
    %c9_i32 = arith.constant 9 : i32
    %466 = arith.addi %0, %c9_i32 : i32
    %c0_i32_363 = arith.constant 0 : i32
    %467 = arith.addi %466, %c0_i32_363 : i32
    %468 = arith.index_cast %467 : i32 to index
    %c0_364 = arith.constant 0 : index
    %c0_365 = arith.constant 0 : index
    %469 = vector.load %arg2[%468, %c0_364, %c0_365] : memref<16x4x16xbf16, #tpu.memory_space<vmem>>, vector<1x4x16xbf16>
    %470 = vector.shape_cast %469 : vector<1x4x16xbf16> to vector<4x16xbf16>
    %c0_366 = arith.constant 0 : index
    %c0_367 = arith.constant 0 : index
    %c0_368 = arith.constant 0 : index
    %471 = vector.load %arg3[%c0_366, %c0_367, %c0_368] : memref<3x4x4xbf16, #tpu.memory_space<vmem>>, vector<1x4x4xbf16>
    %472 = vector.shape_cast %471 : vector<1x4x4xbf16> to vector<4x4xbf16>
    %cst_369 = arith.constant dense<0.000000e+00> : vector<4x16xf32>
    %473 = tpu.matmul %472, %470, %cst_369 {dimension_numbers = #tpu.dot_dimension_numbers<[1], [0], [0], [1], [0, 0, 1, 1], [], []>} : vector<4x4xbf16>, vector<4x16xbf16>, vector<4x16xf32> -> vector<4x16xf32>
    %474 = arith.addf %3, %473 : vector<4x16xf32>
    %c0_370 = arith.constant 0 : index
    %c0_371 = arith.constant 0 : index
    %c0_372 = arith.constant 0 : index
    %475 = vector.load %arg4[%c0_370, %c0_371, %c0_372] : memref<3x4x4xbf16, #tpu.memory_space<vmem>>, vector<1x4x4xbf16>
    %476 = vector.shape_cast %475 : vector<1x4x4xbf16> to vector<4x4xbf16>
    %cst_373 = arith.constant dense<0.000000e+00> : vector<4x16xf32>
    %477 = tpu.matmul %476, %470, %cst_373 {dimension_numbers = #tpu.dot_dimension_numbers<[1], [0], [0], [1], [0, 0, 1, 1], [], []>} : vector<4x4xbf16>, vector<4x16xbf16>, vector<4x16xf32> -> vector<4x16xf32>
    %478 = arith.addf %6, %477 : vector<4x16xf32>
    %c9_i32_374 = arith.constant 9 : i32
    %479 = arith.addi %0, %c9_i32_374 : i32
    %c1_i32_375 = arith.constant 1 : i32
    %480 = arith.addi %479, %c1_i32_375 : i32
    %481 = arith.index_cast %480 : i32 to index
    %c0_376 = arith.constant 0 : index
    %c0_377 = arith.constant 0 : index
    %482 = vector.load %arg2[%481, %c0_376, %c0_377] : memref<16x4x16xbf16, #tpu.memory_space<vmem>>, vector<1x4x16xbf16>
    %483 = vector.shape_cast %482 : vector<1x4x16xbf16> to vector<4x16xbf16>
    %c1_378 = arith.constant 1 : index
    %c0_379 = arith.constant 0 : index
    %c0_380 = arith.constant 0 : index
    %484 = vector.load %arg3[%c1_378, %c0_379, %c0_380] : memref<3x4x4xbf16, #tpu.memory_space<vmem>>, vector<1x4x4xbf16>
    %485 = vector.shape_cast %484 : vector<1x4x4xbf16> to vector<4x4xbf16>
    %cst_381 = arith.constant dense<0.000000e+00> : vector<4x16xf32>
    %486 = tpu.matmul %485, %483, %cst_381 {dimension_numbers = #tpu.dot_dimension_numbers<[1], [0], [0], [1], [0, 0, 1, 1], [], []>} : vector<4x4xbf16>, vector<4x16xbf16>, vector<4x16xf32> -> vector<4x16xf32>
    %487 = arith.addf %474, %486 : vector<4x16xf32>
    %c1_382 = arith.constant 1 : index
    %c0_383 = arith.constant 0 : index
    %c0_384 = arith.constant 0 : index
    %488 = vector.load %arg4[%c1_382, %c0_383, %c0_384] : memref<3x4x4xbf16, #tpu.memory_space<vmem>>, vector<1x4x4xbf16>
    %489 = vector.shape_cast %488 : vector<1x4x4xbf16> to vector<4x4xbf16>
    %cst_385 = arith.constant dense<0.000000e+00> : vector<4x16xf32>
    %490 = tpu.matmul %489, %483, %cst_385 {dimension_numbers = #tpu.dot_dimension_numbers<[1], [0], [0], [1], [0, 0, 1, 1], [], []>} : vector<4x4xbf16>, vector<4x16xbf16>, vector<4x16xf32> -> vector<4x16xf32>
    %491 = arith.addf %478, %490 : vector<4x16xf32>
    %c9_i32_386 = arith.constant 9 : i32
    %492 = arith.addi %0, %c9_i32_386 : i32
    %c2_i32_387 = arith.constant 2 : i32
    %493 = arith.addi %492, %c2_i32_387 : i32
    %494 = arith.index_cast %493 : i32 to index
    %c0_388 = arith.constant 0 : index
    %c0_389 = arith.constant 0 : index
    %495 = vector.load %arg2[%494, %c0_388, %c0_389] : memref<16x4x16xbf16, #tpu.memory_space<vmem>>, vector<1x4x16xbf16>
    %496 = vector.shape_cast %495 : vector<1x4x16xbf16> to vector<4x16xbf16>
    %c2_390 = arith.constant 2 : index
    %c0_391 = arith.constant 0 : index
    %c0_392 = arith.constant 0 : index
    %497 = vector.load %arg3[%c2_390, %c0_391, %c0_392] : memref<3x4x4xbf16, #tpu.memory_space<vmem>>, vector<1x4x4xbf16>
    %498 = vector.shape_cast %497 : vector<1x4x4xbf16> to vector<4x4xbf16>
    %cst_393 = arith.constant dense<0.000000e+00> : vector<4x16xf32>
    %499 = tpu.matmul %498, %496, %cst_393 {dimension_numbers = #tpu.dot_dimension_numbers<[1], [0], [0], [1], [0, 0, 1, 1], [], []>} : vector<4x4xbf16>, vector<4x16xbf16>, vector<4x16xf32> -> vector<4x16xf32>
    %500 = arith.addf %487, %499 : vector<4x16xf32>
    %c2_394 = arith.constant 2 : index
    %c0_395 = arith.constant 0 : index
    %c0_396 = arith.constant 0 : index
    %501 = vector.load %arg4[%c2_394, %c0_395, %c0_396] : memref<3x4x4xbf16, #tpu.memory_space<vmem>>, vector<1x4x4xbf16>
    %502 = vector.shape_cast %501 : vector<1x4x4xbf16> to vector<4x4xbf16>
    %cst_397 = arith.constant dense<0.000000e+00> : vector<4x16xf32>
    %503 = tpu.matmul %502, %496, %cst_397 {dimension_numbers = #tpu.dot_dimension_numbers<[1], [0], [0], [1], [0, 0, 1, 1], [], []>} : vector<4x4xbf16>, vector<4x16xbf16>, vector<4x16xf32> -> vector<4x16xf32>
    %504 = arith.addf %491, %503 : vector<4x16xf32>
    %cst_398 = arith.constant 5.000000e-01 : f32
    %505 = vector.broadcast %cst_398 : f32 to vector<4x16xf32>
    %506 = arith.mulf %505, %504 : vector<4x16xf32>
    %507 = math.tanh %506 : vector<4x16xf32>
    %cst_399 = arith.constant 1.000000e+00 : f32
    %508 = vector.broadcast %cst_399 : f32 to vector<4x16xf32>
    %509 = arith.addf %508, %507 : vector<4x16xf32>
    %cst_400 = arith.constant 5.000000e-01 : f32
    %510 = vector.broadcast %cst_400 : f32 to vector<4x16xf32>
    %511 = arith.mulf %510, %509 : vector<4x16xf32>
    %512 = math.tanh %500 : vector<4x16xf32>
    %513 = arith.mulf %512, %511 : vector<4x16xf32>
    %c9 = arith.constant 9 : index
    %c0_401 = arith.constant 0 : index
    %c0_402 = arith.constant 0 : index
    %514 = vector.load %arg7[%c9, %c0_401, %c0_402] : memref<14x4x16xf32, #tpu.memory_space<vmem>>, vector<1x4x16xf32>
    %515 = vector.shape_cast %514 : vector<1x4x16xf32> to vector<4x16xf32>
    %516 = vector.shape_cast %513 : vector<4x16xf32> to vector<1x4x16xf32>
    tpu.vector_store %arg7[%c9, %c0_401, %c0_402], %516 {strides = array<i32>} : memref<14x4x16xf32, #tpu.memory_space<vmem>>, vector<1x4x16xf32>,
    %c10_i32 = arith.constant 10 : i32
    %517 = arith.addi %0, %c10_i32 : i32
    %c0_i32_403 = arith.constant 0 : i32
    %518 = arith.addi %517, %c0_i32_403 : i32
    %519 = arith.index_cast %518 : i32 to index
    %c0_404 = arith.constant 0 : index
    %c0_405 = arith.constant 0 : index
    %520 = vector.load %arg2[%519, %c0_404, %c0_405] : memref<16x4x16xbf16, #tpu.memory_space<vmem>>, vector<1x4x16xbf16>
    %521 = vector.shape_cast %520 : vector<1x4x16xbf16> to vector<4x16xbf16>
    %c0_406 = arith.constant 0 : index
    %c0_407 = arith.constant 0 : index
    %c0_408 = arith.constant 0 : index
    %522 = vector.load %arg3[%c0_406, %c0_407, %c0_408] : memref<3x4x4xbf16, #tpu.memory_space<vmem>>, vector<1x4x4xbf16>
    %523 = vector.shape_cast %522 : vector<1x4x4xbf16> to vector<4x4xbf16>
    %cst_409 = arith.constant dense<0.000000e+00> : vector<4x16xf32>
    %524 = tpu.matmul %523, %521, %cst_409 {dimension_numbers = #tpu.dot_dimension_numbers<[1], [0], [0], [1], [0, 0, 1, 1], [], []>} : vector<4x4xbf16>, vector<4x16xbf16>, vector<4x16xf32> -> vector<4x16xf32>
    %525 = arith.addf %3, %524 : vector<4x16xf32>
    %c0_410 = arith.constant 0 : index
    %c0_411 = arith.constant 0 : index
    %c0_412 = arith.constant 0 : index
    %526 = vector.load %arg4[%c0_410, %c0_411, %c0_412] : memref<3x4x4xbf16, #tpu.memory_space<vmem>>, vector<1x4x4xbf16>
    %527 = vector.shape_cast %526 : vector<1x4x4xbf16> to vector<4x4xbf16>
    %cst_413 = arith.constant dense<0.000000e+00> : vector<4x16xf32>
    %528 = tpu.matmul %527, %521, %cst_413 {dimension_numbers = #tpu.dot_dimension_numbers<[1], [0], [0], [1], [0, 0, 1, 1], [], []>} : vector<4x4xbf16>, vector<4x16xbf16>, vector<4x16xf32> -> vector<4x16xf32>
    %529 = arith.addf %6, %528 : vector<4x16xf32>
    %c10_i32_414 = arith.constant 10 : i32
    %530 = arith.addi %0, %c10_i32_414 : i32
    %c1_i32_415 = arith.constant 1 : i32
    %531 = arith.addi %530, %c1_i32_415 : i32
    %532 = arith.index_cast %531 : i32 to index
    %c0_416 = arith.constant 0 : index
    %c0_417 = arith.constant 0 : index
    %533 = vector.load %arg2[%532, %c0_416, %c0_417] : memref<16x4x16xbf16, #tpu.memory_space<vmem>>, vector<1x4x16xbf16>
    %534 = vector.shape_cast %533 : vector<1x4x16xbf16> to vector<4x16xbf16>
    %c1_418 = arith.constant 1 : index
    %c0_419 = arith.constant 0 : index
    %c0_420 = arith.constant 0 : index
    %535 = vector.load %arg3[%c1_418, %c0_419, %c0_420] : memref<3x4x4xbf16, #tpu.memory_space<vmem>>, vector<1x4x4xbf16>
    %536 = vector.shape_cast %535 : vector<1x4x4xbf16> to vector<4x4xbf16>
    %cst_421 = arith.constant dense<0.000000e+00> : vector<4x16xf32>
    %537 = tpu.matmul %536, %534, %cst_421 {dimension_numbers = #tpu.dot_dimension_numbers<[1], [0], [0], [1], [0, 0, 1, 1], [], []>} : vector<4x4xbf16>, vector<4x16xbf16>, vector<4x16xf32> -> vector<4x16xf32>
    %538 = arith.addf %525, %537 : vector<4x16xf32>
    %c1_422 = arith.constant 1 : index
    %c0_423 = arith.constant 0 : index
    %c0_424 = arith.constant 0 : index
    %539 = vector.load %arg4[%c1_422, %c0_423, %c0_424] : memref<3x4x4xbf16, #tpu.memory_space<vmem>>, vector<1x4x4xbf16>
    %540 = vector.shape_cast %539 : vector<1x4x4xbf16> to vector<4x4xbf16>
    %cst_425 = arith.constant dense<0.000000e+00> : vector<4x16xf32>
    %541 = tpu.matmul %540, %534, %cst_425 {dimension_numbers = #tpu.dot_dimension_numbers<[1], [0], [0], [1], [0, 0, 1, 1], [], []>} : vector<4x4xbf16>, vector<4x16xbf16>, vector<4x16xf32> -> vector<4x16xf32>
    %542 = arith.addf %529, %541 : vector<4x16xf32>
    %c10_i32_426 = arith.constant 10 : i32
    %543 = arith.addi %0, %c10_i32_426 : i32
    %c2_i32_427 = arith.constant 2 : i32
    %544 = arith.addi %543, %c2_i32_427 : i32
    %545 = arith.index_cast %544 : i32 to index
    %c0_428 = arith.constant 0 : index
    %c0_429 = arith.constant 0 : index
    %546 = vector.load %arg2[%545, %c0_428, %c0_429] : memref<16x4x16xbf16, #tpu.memory_space<vmem>>, vector<1x4x16xbf16>
    %547 = vector.shape_cast %546 : vector<1x4x16xbf16> to vector<4x16xbf16>
    %c2_430 = arith.constant 2 : index
    %c0_431 = arith.constant 0 : index
    %c0_432 = arith.constant 0 : index
    %548 = vector.load %arg3[%c2_430, %c0_431, %c0_432] : memref<3x4x4xbf16, #tpu.memory_space<vmem>>, vector<1x4x4xbf16>
    %549 = vector.shape_cast %548 : vector<1x4x4xbf16> to vector<4x4xbf16>
    %cst_433 = arith.constant dense<0.000000e+00> : vector<4x16xf32>
    %550 = tpu.matmul %549, %547, %cst_433 {dimension_numbers = #tpu.dot_dimension_numbers<[1], [0], [0], [1], [0, 0, 1, 1], [], []>} : vector<4x4xbf16>, vector<4x16xbf16>, vector<4x16xf32> -> vector<4x16xf32>
    %551 = arith.addf %538, %550 : vector<4x16xf32>
    %c2_434 = arith.constant 2 : index
    %c0_435 = arith.constant 0 : index
    %c0_436 = arith.constant 0 : index
    %552 = vector.load %arg4[%c2_434, %c0_435, %c0_436] : memref<3x4x4xbf16, #tpu.memory_space<vmem>>, vector<1x4x4xbf16>
    %553 = vector.shape_cast %552 : vector<1x4x4xbf16> to vector<4x4xbf16>
    %cst_437 = arith.constant dense<0.000000e+00> : vector<4x16xf32>
    %554 = tpu.matmul %553, %547, %cst_437 {dimension_numbers = #tpu.dot_dimension_numbers<[1], [0], [0], [1], [0, 0, 1, 1], [], []>} : vector<4x4xbf16>, vector<4x16xbf16>, vector<4x16xf32> -> vector<4x16xf32>
    %555 = arith.addf %542, %554 : vector<4x16xf32>
    %cst_438 = arith.constant 5.000000e-01 : f32
    %556 = vector.broadcast %cst_438 : f32 to vector<4x16xf32>
    %557 = arith.mulf %556, %555 : vector<4x16xf32>
    %558 = math.tanh %557 : vector<4x16xf32>
    %cst_439 = arith.constant 1.000000e+00 : f32
    %559 = vector.broadcast %cst_439 : f32 to vector<4x16xf32>
    %560 = arith.addf %559, %558 : vector<4x16xf32>
    %cst_440 = arith.constant 5.000000e-01 : f32
    %561 = vector.broadcast %cst_440 : f32 to vector<4x16xf32>
    %562 = arith.mulf %561, %560 : vector<4x16xf32>
    %563 = math.tanh %551 : vector<4x16xf32>
    %564 = arith.mulf %563, %562 : vector<4x16xf32>
    %c10 = arith.constant 10 : index
    %c0_441 = arith.constant 0 : index
    %c0_442 = arith.constant 0 : index
    %565 = vector.load %arg7[%c10, %c0_441, %c0_442] : memref<14x4x16xf32, #tpu.memory_space<vmem>>, vector<1x4x16xf32>
    %566 = vector.shape_cast %565 : vector<1x4x16xf32> to vector<4x16xf32>
    %567 = vector.shape_cast %564 : vector<4x16xf32> to vector<1x4x16xf32>
    tpu.vector_store %arg7[%c10, %c0_441, %c0_442], %567 {strides = array<i32>} : memref<14x4x16xf32, #tpu.memory_space<vmem>>, vector<1x4x16xf32>,
    %c11_i32 = arith.constant 11 : i32
    %568 = arith.addi %0, %c11_i32 : i32
    %c0_i32_443 = arith.constant 0 : i32
    %569 = arith.addi %568, %c0_i32_443 : i32
    %570 = arith.index_cast %569 : i32 to index
    %c0_444 = arith.constant 0 : index
    %c0_445 = arith.constant 0 : index
    %571 = vector.load %arg2[%570, %c0_444, %c0_445] : memref<16x4x16xbf16, #tpu.memory_space<vmem>>, vector<1x4x16xbf16>
    %572 = vector.shape_cast %571 : vector<1x4x16xbf16> to vector<4x16xbf16>
    %c0_446 = arith.constant 0 : index
    %c0_447 = arith.constant 0 : index
    %c0_448 = arith.constant 0 : index
    %573 = vector.load %arg3[%c0_446, %c0_447, %c0_448] : memref<3x4x4xbf16, #tpu.memory_space<vmem>>, vector<1x4x4xbf16>
    %574 = vector.shape_cast %573 : vector<1x4x4xbf16> to vector<4x4xbf16>
    %cst_449 = arith.constant dense<0.000000e+00> : vector<4x16xf32>
    %575 = tpu.matmul %574, %572, %cst_449 {dimension_numbers = #tpu.dot_dimension_numbers<[1], [0], [0], [1], [0, 0, 1, 1], [], []>} : vector<4x4xbf16>, vector<4x16xbf16>, vector<4x16xf32> -> vector<4x16xf32>
    %576 = arith.addf %3, %575 : vector<4x16xf32>
    %c0_450 = arith.constant 0 : index
    %c0_451 = arith.constant 0 : index
    %c0_452 = arith.constant 0 : index
    %577 = vector.load %arg4[%c0_450, %c0_451, %c0_452] : memref<3x4x4xbf16, #tpu.memory_space<vmem>>, vector<1x4x4xbf16>
    %578 = vector.shape_cast %577 : vector<1x4x4xbf16> to vector<4x4xbf16>
    %cst_453 = arith.constant dense<0.000000e+00> : vector<4x16xf32>
    %579 = tpu.matmul %578, %572, %cst_453 {dimension_numbers = #tpu.dot_dimension_numbers<[1], [0], [0], [1], [0, 0, 1, 1], [], []>} : vector<4x4xbf16>, vector<4x16xbf16>, vector<4x16xf32> -> vector<4x16xf32>
    %580 = arith.addf %6, %579 : vector<4x16xf32>
    %c11_i32_454 = arith.constant 11 : i32
    %581 = arith.addi %0, %c11_i32_454 : i32
    %c1_i32_455 = arith.constant 1 : i32
    %582 = arith.addi %581, %c1_i32_455 : i32
    %583 = arith.index_cast %582 : i32 to index
    %c0_456 = arith.constant 0 : index
    %c0_457 = arith.constant 0 : index
    %584 = vector.load %arg2[%583, %c0_456, %c0_457] : memref<16x4x16xbf16, #tpu.memory_space<vmem>>, vector<1x4x16xbf16>
    %585 = vector.shape_cast %584 : vector<1x4x16xbf16> to vector<4x16xbf16>
    %c1_458 = arith.constant 1 : index
    %c0_459 = arith.constant 0 : index
    %c0_460 = arith.constant 0 : index
    %586 = vector.load %arg3[%c1_458, %c0_459, %c0_460] : memref<3x4x4xbf16, #tpu.memory_space<vmem>>, vector<1x4x4xbf16>
    %587 = vector.shape_cast %586 : vector<1x4x4xbf16> to vector<4x4xbf16>
    %cst_461 = arith.constant dense<0.000000e+00> : vector<4x16xf32>
    %588 = tpu.matmul %587, %585, %cst_461 {dimension_numbers = #tpu.dot_dimension_numbers<[1], [0], [0], [1], [0, 0, 1, 1], [], []>} : vector<4x4xbf16>, vector<4x16xbf16>, vector<4x16xf32> -> vector<4x16xf32>
    %589 = arith.addf %576, %588 : vector<4x16xf32>
    %c1_462 = arith.constant 1 : index
    %c0_463 = arith.constant 0 : index
    %c0_464 = arith.constant 0 : index
    %590 = vector.load %arg4[%c1_462, %c0_463, %c0_464] : memref<3x4x4xbf16, #tpu.memory_space<vmem>>, vector<1x4x4xbf16>
    %591 = vector.shape_cast %590 : vector<1x4x4xbf16> to vector<4x4xbf16>
    %cst_465 = arith.constant dense<0.000000e+00> : vector<4x16xf32>
    %592 = tpu.matmul %591, %585, %cst_465 {dimension_numbers = #tpu.dot_dimension_numbers<[1], [0], [0], [1], [0, 0, 1, 1], [], []>} : vector<4x4xbf16>, vector<4x16xbf16>, vector<4x16xf32> -> vector<4x16xf32>
    %593 = arith.addf %580, %592 : vector<4x16xf32>
    %c11_i32_466 = arith.constant 11 : i32
    %594 = arith.addi %0, %c11_i32_466 : i32
    %c2_i32_467 = arith.constant 2 : i32
    %595 = arith.addi %594, %c2_i32_467 : i32
    %596 = arith.index_cast %595 : i32 to index
    %c0_468 = arith.constant 0 : index
    %c0_469 = arith.constant 0 : index
    %597 = vector.load %arg2[%596, %c0_468, %c0_469] : memref<16x4x16xbf16, #tpu.memory_space<vmem>>, vector<1x4x16xbf16>
    %598 = vector.shape_cast %597 : vector<1x4x16xbf16> to vector<4x16xbf16>
    %c2_470 = arith.constant 2 : index
    %c0_471 = arith.constant 0 : index
    %c0_472 = arith.constant 0 : index
    %599 = vector.load %arg3[%c2_470, %c0_471, %c0_472] : memref<3x4x4xbf16, #tpu.memory_space<vmem>>, vector<1x4x4xbf16>
    %600 = vector.shape_cast %599 : vector<1x4x4xbf16> to vector<4x4xbf16>
    %cst_473 = arith.constant dense<0.000000e+00> : vector<4x16xf32>
    %601 = tpu.matmul %600, %598, %cst_473 {dimension_numbers = #tpu.dot_dimension_numbers<[1], [0], [0], [1], [0, 0, 1, 1], [], []>} : vector<4x4xbf16>, vector<4x16xbf16>, vector<4x16xf32> -> vector<4x16xf32>
    %602 = arith.addf %589, %601 : vector<4x16xf32>
    %c2_474 = arith.constant 2 : index
    %c0_475 = arith.constant 0 : index
    %c0_476 = arith.constant 0 : index
    %603 = vector.load %arg4[%c2_474, %c0_475, %c0_476] : memref<3x4x4xbf16, #tpu.memory_space<vmem>>, vector<1x4x4xbf16>
    %604 = vector.shape_cast %603 : vector<1x4x4xbf16> to vector<4x4xbf16>
    %cst_477 = arith.constant dense<0.000000e+00> : vector<4x16xf32>
    %605 = tpu.matmul %604, %598, %cst_477 {dimension_numbers = #tpu.dot_dimension_numbers<[1], [0], [0], [1], [0, 0, 1, 1], [], []>} : vector<4x4xbf16>, vector<4x16xbf16>, vector<4x16xf32> -> vector<4x16xf32>
    %606 = arith.addf %593, %605 : vector<4x16xf32>
    %cst_478 = arith.constant 5.000000e-01 : f32
    %607 = vector.broadcast %cst_478 : f32 to vector<4x16xf32>
    %608 = arith.mulf %607, %606 : vector<4x16xf32>
    %609 = math.tanh %608 : vector<4x16xf32>
    %cst_479 = arith.constant 1.000000e+00 : f32
    %610 = vector.broadcast %cst_479 : f32 to vector<4x16xf32>
    %611 = arith.addf %610, %609 : vector<4x16xf32>
    %cst_480 = arith.constant 5.000000e-01 : f32
    %612 = vector.broadcast %cst_480 : f32 to vector<4x16xf32>
    %613 = arith.mulf %612, %611 : vector<4x16xf32>
    %614 = math.tanh %602 : vector<4x16xf32>
    %615 = arith.mulf %614, %613 : vector<4x16xf32>
    %c11 = arith.constant 11 : index
    %c0_481 = arith.constant 0 : index
    %c0_482 = arith.constant 0 : index
    %616 = vector.load %arg7[%c11, %c0_481, %c0_482] : memref<14x4x16xf32, #tpu.memory_space<vmem>>, vector<1x4x16xf32>
    %617 = vector.shape_cast %616 : vector<1x4x16xf32> to vector<4x16xf32>
    %618 = vector.shape_cast %615 : vector<4x16xf32> to vector<1x4x16xf32>
    tpu.vector_store %arg7[%c11, %c0_481, %c0_482], %618 {strides = array<i32>} : memref<14x4x16xf32, #tpu.memory_space<vmem>>, vector<1x4x16xf32>,
    %c12_i32 = arith.constant 12 : i32
    %619 = arith.addi %0, %c12_i32 : i32
    %c0_i32_483 = arith.constant 0 : i32
    %620 = arith.addi %619, %c0_i32_483 : i32
    %621 = arith.index_cast %620 : i32 to index
    %c0_484 = arith.constant 0 : index
    %c0_485 = arith.constant 0 : index
    %622 = vector.load %arg2[%621, %c0_484, %c0_485] : memref<16x4x16xbf16, #tpu.memory_space<vmem>>, vector<1x4x16xbf16>
    %623 = vector.shape_cast %622 : vector<1x4x16xbf16> to vector<4x16xbf16>
    %c0_486 = arith.constant 0 : index
    %c0_487 = arith.constant 0 : index
    %c0_488 = arith.constant 0 : index
    %624 = vector.load %arg3[%c0_486, %c0_487, %c0_488] : memref<3x4x4xbf16, #tpu.memory_space<vmem>>, vector<1x4x4xbf16>
    %625 = vector.shape_cast %624 : vector<1x4x4xbf16> to vector<4x4xbf16>
    %cst_489 = arith.constant dense<0.000000e+00> : vector<4x16xf32>
    %626 = tpu.matmul %625, %623, %cst_489 {dimension_numbers = #tpu.dot_dimension_numbers<[1], [0], [0], [1], [0, 0, 1, 1], [], []>} : vector<4x4xbf16>, vector<4x16xbf16>, vector<4x16xf32> -> vector<4x16xf32>
    %627 = arith.addf %3, %626 : vector<4x16xf32>
    %c0_490 = arith.constant 0 : index
    %c0_491 = arith.constant 0 : index
    %c0_492 = arith.constant 0 : index
    %628 = vector.load %arg4[%c0_490, %c0_491, %c0_492] : memref<3x4x4xbf16, #tpu.memory_space<vmem>>, vector<1x4x4xbf16>
    %629 = vector.shape_cast %628 : vector<1x4x4xbf16> to vector<4x4xbf16>
    %cst_493 = arith.constant dense<0.000000e+00> : vector<4x16xf32>
    %630 = tpu.matmul %629, %623, %cst_493 {dimension_numbers = #tpu.dot_dimension_numbers<[1], [0], [0], [1], [0, 0, 1, 1], [], []>} : vector<4x4xbf16>, vector<4x16xbf16>, vector<4x16xf32> -> vector<4x16xf32>
    %631 = arith.addf %6, %630 : vector<4x16xf32>
    %c12_i32_494 = arith.constant 12 : i32
    %632 = arith.addi %0, %c12_i32_494 : i32
    %c1_i32_495 = arith.constant 1 : i32
    %633 = arith.addi %632, %c1_i32_495 : i32
    %634 = arith.index_cast %633 : i32 to index
    %c0_496 = arith.constant 0 : index
    %c0_497 = arith.constant 0 : index
    %635 = vector.load %arg2[%634, %c0_496, %c0_497] : memref<16x4x16xbf16, #tpu.memory_space<vmem>>, vector<1x4x16xbf16>
    %636 = vector.shape_cast %635 : vector<1x4x16xbf16> to vector<4x16xbf16>
    %c1_498 = arith.constant 1 : index
    %c0_499 = arith.constant 0 : index
    %c0_500 = arith.constant 0 : index
    %637 = vector.load %arg3[%c1_498, %c0_499, %c0_500] : memref<3x4x4xbf16, #tpu.memory_space<vmem>>, vector<1x4x4xbf16>
    %638 = vector.shape_cast %637 : vector<1x4x4xbf16> to vector<4x4xbf16>
    %cst_501 = arith.constant dense<0.000000e+00> : vector<4x16xf32>
    %639 = tpu.matmul %638, %636, %cst_501 {dimension_numbers = #tpu.dot_dimension_numbers<[1], [0], [0], [1], [0, 0, 1, 1], [], []>} : vector<4x4xbf16>, vector<4x16xbf16>, vector<4x16xf32> -> vector<4x16xf32>
    %640 = arith.addf %627, %639 : vector<4x16xf32>
    %c1_502 = arith.constant 1 : index
    %c0_503 = arith.constant 0 : index
    %c0_504 = arith.constant 0 : index
    %641 = vector.load %arg4[%c1_502, %c0_503, %c0_504] : memref<3x4x4xbf16, #tpu.memory_space<vmem>>, vector<1x4x4xbf16>
    %642 = vector.shape_cast %641 : vector<1x4x4xbf16> to vector<4x4xbf16>
    %cst_505 = arith.constant dense<0.000000e+00> : vector<4x16xf32>
    %643 = tpu.matmul %642, %636, %cst_505 {dimension_numbers = #tpu.dot_dimension_numbers<[1], [0], [0], [1], [0, 0, 1, 1], [], []>} : vector<4x4xbf16>, vector<4x16xbf16>, vector<4x16xf32> -> vector<4x16xf32>
    %644 = arith.addf %631, %643 : vector<4x16xf32>
    %c12_i32_506 = arith.constant 12 : i32
    %645 = arith.addi %0, %c12_i32_506 : i32
    %c2_i32_507 = arith.constant 2 : i32
    %646 = arith.addi %645, %c2_i32_507 : i32
    %647 = arith.index_cast %646 : i32 to index
    %c0_508 = arith.constant 0 : index
    %c0_509 = arith.constant 0 : index
    %648 = vector.load %arg2[%647, %c0_508, %c0_509] : memref<16x4x16xbf16, #tpu.memory_space<vmem>>, vector<1x4x16xbf16>
    %649 = vector.shape_cast %648 : vector<1x4x16xbf16> to vector<4x16xbf16>
    %c2_510 = arith.constant 2 : index
    %c0_511 = arith.constant 0 : index
    %c0_512 = arith.constant 0 : index
    %650 = vector.load %arg3[%c2_510, %c0_511, %c0_512] : memref<3x4x4xbf16, #tpu.memory_space<vmem>>, vector<1x4x4xbf16>
    %651 = vector.shape_cast %650 : vector<1x4x4xbf16> to vector<4x4xbf16>
    %cst_513 = arith.constant dense<0.000000e+00> : vector<4x16xf32>
    %652 = tpu.matmul %651, %649, %cst_513 {dimension_numbers = #tpu.dot_dimension_numbers<[1], [0], [0], [1], [0, 0, 1, 1], [], []>} : vector<4x4xbf16>, vector<4x16xbf16>, vector<4x16xf32> -> vector<4x16xf32>
    %653 = arith.addf %640, %652 : vector<4x16xf32>
    %c2_514 = arith.constant 2 : index
    %c0_515 = arith.constant 0 : index
    %c0_516 = arith.constant 0 : index
    %654 = vector.load %arg4[%c2_514, %c0_515, %c0_516] : memref<3x4x4xbf16, #tpu.memory_space<vmem>>, vector<1x4x4xbf16>
    %655 = vector.shape_cast %654 : vector<1x4x4xbf16> to vector<4x4xbf16>
    %cst_517 = arith.constant dense<0.000000e+00> : vector<4x16xf32>
    %656 = tpu.matmul %655, %649, %cst_517 {dimension_numbers = #tpu.dot_dimension_numbers<[1], [0], [0], [1], [0, 0, 1, 1], [], []>} : vector<4x4xbf16>, vector<4x16xbf16>, vector<4x16xf32> -> vector<4x16xf32>
    %657 = arith.addf %644, %656 : vector<4x16xf32>
    %cst_518 = arith.constant 5.000000e-01 : f32
    %658 = vector.broadcast %cst_518 : f32 to vector<4x16xf32>
    %659 = arith.mulf %658, %657 : vector<4x16xf32>
    %660 = math.tanh %659 : vector<4x16xf32>
    %cst_519 = arith.constant 1.000000e+00 : f32
    %661 = vector.broadcast %cst_519 : f32 to vector<4x16xf32>
    %662 = arith.addf %661, %660 : vector<4x16xf32>
    %cst_520 = arith.constant 5.000000e-01 : f32
    %663 = vector.broadcast %cst_520 : f32 to vector<4x16xf32>
    %664 = arith.mulf %663, %662 : vector<4x16xf32>
    %665 = math.tanh %653 : vector<4x16xf32>
    %666 = arith.mulf %665, %664 : vector<4x16xf32>
    %c12 = arith.constant 12 : index
    %c0_521 = arith.constant 0 : index
    %c0_522 = arith.constant 0 : index
    %667 = vector.load %arg7[%c12, %c0_521, %c0_522] : memref<14x4x16xf32, #tpu.memory_space<vmem>>, vector<1x4x16xf32>
    %668 = vector.shape_cast %667 : vector<1x4x16xf32> to vector<4x16xf32>
    %669 = vector.shape_cast %666 : vector<4x16xf32> to vector<1x4x16xf32>
    tpu.vector_store %arg7[%c12, %c0_521, %c0_522], %669 {strides = array<i32>} : memref<14x4x16xf32, #tpu.memory_space<vmem>>, vector<1x4x16xf32>,
    %c13_i32 = arith.constant 13 : i32
    %670 = arith.addi %0, %c13_i32 : i32
    %c0_i32_523 = arith.constant 0 : i32
    %671 = arith.addi %670, %c0_i32_523 : i32
    %672 = arith.index_cast %671 : i32 to index
    %c0_524 = arith.constant 0 : index
    %c0_525 = arith.constant 0 : index
    %673 = vector.load %arg2[%672, %c0_524, %c0_525] : memref<16x4x16xbf16, #tpu.memory_space<vmem>>, vector<1x4x16xbf16>
    %674 = vector.shape_cast %673 : vector<1x4x16xbf16> to vector<4x16xbf16>
    %c0_526 = arith.constant 0 : index
    %c0_527 = arith.constant 0 : index
    %c0_528 = arith.constant 0 : index
    %675 = vector.load %arg3[%c0_526, %c0_527, %c0_528] : memref<3x4x4xbf16, #tpu.memory_space<vmem>>, vector<1x4x4xbf16>
    %676 = vector.shape_cast %675 : vector<1x4x4xbf16> to vector<4x4xbf16>
    %cst_529 = arith.constant dense<0.000000e+00> : vector<4x16xf32>
    %677 = tpu.matmul %676, %674, %cst_529 {dimension_numbers = #tpu.dot_dimension_numbers<[1], [0], [0], [1], [0, 0, 1, 1], [], []>} : vector<4x4xbf16>, vector<4x16xbf16>, vector<4x16xf32> -> vector<4x16xf32>
    %678 = arith.addf %3, %677 : vector<4x16xf32>
    %c0_530 = arith.constant 0 : index
    %c0_531 = arith.constant 0 : index
    %c0_532 = arith.constant 0 : index
    %679 = vector.load %arg4[%c0_530, %c0_531, %c0_532] : memref<3x4x4xbf16, #tpu.memory_space<vmem>>, vector<1x4x4xbf16>
    %680 = vector.shape_cast %679 : vector<1x4x4xbf16> to vector<4x4xbf16>
    %cst_533 = arith.constant dense<0.000000e+00> : vector<4x16xf32>
    %681 = tpu.matmul %680, %674, %cst_533 {dimension_numbers = #tpu.dot_dimension_numbers<[1], [0], [0], [1], [0, 0, 1, 1], [], []>} : vector<4x4xbf16>, vector<4x16xbf16>, vector<4x16xf32> -> vector<4x16xf32>
    %682 = arith.addf %6, %681 : vector<4x16xf32>
    %c13_i32_534 = arith.constant 13 : i32
    %683 = arith.addi %0, %c13_i32_534 : i32
    %c1_i32_535 = arith.constant 1 : i32
    %684 = arith.addi %683, %c1_i32_535 : i32
    %685 = arith.index_cast %684 : i32 to index
    %c0_536 = arith.constant 0 : index
    %c0_537 = arith.constant 0 : index
    %686 = vector.load %arg2[%685, %c0_536, %c0_537] : memref<16x4x16xbf16, #tpu.memory_space<vmem>>, vector<1x4x16xbf16>
    %687 = vector.shape_cast %686 : vector<1x4x16xbf16> to vector<4x16xbf16>
    %c1_538 = arith.constant 1 : index
    %c0_539 = arith.constant 0 : index
    %c0_540 = arith.constant 0 : index
    %688 = vector.load %arg3[%c1_538, %c0_539, %c0_540] : memref<3x4x4xbf16, #tpu.memory_space<vmem>>, vector<1x4x4xbf16>
    %689 = vector.shape_cast %688 : vector<1x4x4xbf16> to vector<4x4xbf16>
    %cst_541 = arith.constant dense<0.000000e+00> : vector<4x16xf32>
    %690 = tpu.matmul %689, %687, %cst_541 {dimension_numbers = #tpu.dot_dimension_numbers<[1], [0], [0], [1], [0, 0, 1, 1], [], []>} : vector<4x4xbf16>, vector<4x16xbf16>, vector<4x16xf32> -> vector<4x16xf32>
    %691 = arith.addf %678, %690 : vector<4x16xf32>
    %c1_542 = arith.constant 1 : index
    %c0_543 = arith.constant 0 : index
    %c0_544 = arith.constant 0 : index
    %692 = vector.load %arg4[%c1_542, %c0_543, %c0_544] : memref<3x4x4xbf16, #tpu.memory_space<vmem>>, vector<1x4x4xbf16>
    %693 = vector.shape_cast %692 : vector<1x4x4xbf16> to vector<4x4xbf16>
    %cst_545 = arith.constant dense<0.000000e+00> : vector<4x16xf32>
    %694 = tpu.matmul %693, %687, %cst_545 {dimension_numbers = #tpu.dot_dimension_numbers<[1], [0], [0], [1], [0, 0, 1, 1], [], []>} : vector<4x4xbf16>, vector<4x16xbf16>, vector<4x16xf32> -> vector<4x16xf32>
    %695 = arith.addf %682, %694 : vector<4x16xf32>
    %c13_i32_546 = arith.constant 13 : i32
    %696 = arith.addi %0, %c13_i32_546 : i32
    %c2_i32_547 = arith.constant 2 : i32
    %697 = arith.addi %696, %c2_i32_547 : i32
    %698 = arith.index_cast %697 : i32 to index
    %c0_548 = arith.constant 0 : index
    %c0_549 = arith.constant 0 : index
    %699 = vector.load %arg2[%698, %c0_548, %c0_549] : memref<16x4x16xbf16, #tpu.memory_space<vmem>>, vector<1x4x16xbf16>
    %700 = vector.shape_cast %699 : vector<1x4x16xbf16> to vector<4x16xbf16>
    %c2_550 = arith.constant 2 : index
    %c0_551 = arith.constant 0 : index
    %c0_552 = arith.constant 0 : index
    %701 = vector.load %arg3[%c2_550, %c0_551, %c0_552] : memref<3x4x4xbf16, #tpu.memory_space<vmem>>, vector<1x4x4xbf16>
    %702 = vector.shape_cast %701 : vector<1x4x4xbf16> to vector<4x4xbf16>
    %cst_553 = arith.constant dense<0.000000e+00> : vector<4x16xf32>
    %703 = tpu.matmul %702, %700, %cst_553 {dimension_numbers = #tpu.dot_dimension_numbers<[1], [0], [0], [1], [0, 0, 1, 1], [], []>} : vector<4x4xbf16>, vector<4x16xbf16>, vector<4x16xf32> -> vector<4x16xf32>
    %704 = arith.addf %691, %703 : vector<4x16xf32>
    %c2_554 = arith.constant 2 : index
    %c0_555 = arith.constant 0 : index
    %c0_556 = arith.constant 0 : index
    %705 = vector.load %arg4[%c2_554, %c0_555, %c0_556] : memref<3x4x4xbf16, #tpu.memory_space<vmem>>, vector<1x4x4xbf16>
    %706 = vector.shape_cast %705 : vector<1x4x4xbf16> to vector<4x4xbf16>
    %cst_557 = arith.constant dense<0.000000e+00> : vector<4x16xf32>
    %707 = tpu.matmul %706, %700, %cst_557 {dimension_numbers = #tpu.dot_dimension_numbers<[1], [0], [0], [1], [0, 0, 1, 1], [], []>} : vector<4x4xbf16>, vector<4x16xbf16>, vector<4x16xf32> -> vector<4x16xf32>
    %708 = arith.addf %695, %707 : vector<4x16xf32>
    %cst_558 = arith.constant 5.000000e-01 : f32
    %709 = vector.broadcast %cst_558 : f32 to vector<4x16xf32>
    %710 = arith.mulf %709, %708 : vector<4x16xf32>
    %711 = math.tanh %710 : vector<4x16xf32>
    %cst_559 = arith.constant 1.000000e+00 : f32
    %712 = vector.broadcast %cst_559 : f32 to vector<4x16xf32>
    %713 = arith.addf %712, %711 : vector<4x16xf32>
    %cst_560 = arith.constant 5.000000e-01 : f32
    %714 = vector.broadcast %cst_560 : f32 to vector<4x16xf32>
    %715 = arith.mulf %714, %713 : vector<4x16xf32>
    %716 = math.tanh %704 : vector<4x16xf32>
    %717 = arith.mulf %716, %715 : vector<4x16xf32>
    %c13 = arith.constant 13 : index
    %c0_561 = arith.constant 0 : index
    %c0_562 = arith.constant 0 : index
    %718 = vector.load %arg7[%c13, %c0_561, %c0_562] : memref<14x4x16xf32, #tpu.memory_space<vmem>>, vector<1x4x16xf32>
    %719 = vector.shape_cast %718 : vector<1x4x16xf32> to vector<4x16xf32>
    %720 = vector.shape_cast %717 : vector<4x16xf32> to vector<1x4x16xf32>
    tpu.vector_store %arg7[%c13, %c0_561, %c0_562], %720 {strides = array<i32>} : memref<14x4x16xf32, #tpu.memory_space<vmem>>, vector<1x4x16xf32>,
    return
  }
  func.func @transform_0(%arg0: i32, %arg1: i32) -> (i32, i32, i32) {
    %c0_i32 = arith.constant 0 : i32
    %c0_i32_0 = arith.constant 0 : i32
    %c0_i32_1 = arith.constant 0 : i32
    return %c0_i32, %c0_i32_0, %arg0 : i32, i32, i32
  }
  func.func @transform_1(%arg0: i32, %arg1: i32) -> (i32, i32, i32) {
    %c0_i32 = arith.constant 0 : i32
    %c0_i32_0 = arith.constant 0 : i32
    %c0_i32_1 = arith.constant 0 : i32
    %c0_i32_2 = arith.constant 0 : i32
    return %c0_i32, %c0_i32_0, %c0_i32_1 : i32, i32, i32
  }
  func.func @transform_2(%arg0: i32, %arg1: i32) -> (i32, i32, i32) {
    %c0_i32 = arith.constant 0 : i32
    %c0_i32_0 = arith.constant 0 : i32
    %c0_i32_1 = arith.constant 0 : i32
    %c0_i32_2 = arith.constant 0 : i32
    return %c0_i32, %c0_i32_0, %c0_i32_1 : i32, i32, i32
  }
  func.func @transform_3(%arg0: i32, %arg1: i32) -> (i32, i32) {
    %c0_i32 = arith.constant 0 : i32
    %c0_i32_0 = arith.constant 0 : i32
    %c0_i32_1 = arith.constant 0 : i32
    return %c0_i32, %c0_i32_0 : i32, i32
  }
  func.func @transform_4(%arg0: i32, %arg1: i32) -> (i32, i32) {
    %c0_i32 = arith.constant 0 : i32
    %c0_i32_0 = arith.constant 0 : i32
    %c0_i32_1 = arith.constant 0 : i32
    return %c0_i32, %c0_i32_0 : i32, i32
  }
  func.func @transform_5(%arg0: i32, %arg1: i32) -> (i32, i32, i32) {
    %c0_i32 = arith.constant 0 : i32
    %c0_i32_0 = arith.constant 0 : i32
    return %arg1, %c0_i32, %arg0 : i32, i32, i32
  }
}

</mosaic_0001>

<llo_original>
// kernel: tpu_custom_call.1
$region0: #{tpu_custom_call.1}
  #allocation0 [shape = 'u32[]', space=smem, size = 0x4, offset = 0x4, fixed_abs, tag = 'smem constant byte address 0x4 - core index']
  #allocation1 [shape = 'u32[72,128]{1,0:T(1,128)}', space=vmem, size = 0x9000, scoped, tag = 'internal scratch']
  %s0 = inlined_call_operand.hbm [shape: bf16[16,4,16], index: 0, kind: input, shape index: {}]
  %s1 = inlined_call_operand.vmem [shape: bf16[3,4,4], index: 1, kind: input, shape index: {}]
  %s2 = inlined_call_operand.hbm [shape: bf16[3,4,4], index: 2, kind: input, shape index: {}]
  %s3 = inlined_call_operand.vmem [shape: f32[4,1], index: 3, kind: input, shape index: {}]
  %s4 = inlined_call_operand.vmem [shape: f32[4,1], index: 4, kind: input, shape index: {}]
  %s5 = inlined_call_operand.hbm [shape: f32[14,4,16], index: 5, kind: output, shape index: {}]
  %s6 = sld [smem:[#allocation0]]
  $region38: #{tpu_custom_call.1} parent=0
    _
  %s8 = ssub.s32 1, %s6
  %s9 = scalar_select 0, %s8, %s6
  $region1: #{tpu_custom_call.1} parent=0
    #allocation2 [shape = 'u8[16384]{0}', space=vmem, size = 0x4000, scoped, tag = 'input window, operand 0, single buffered']
    #allocation3 [shape = 's32[1]{0}', space=sflag, size = 0x4, scoped, tag = 'scoped memory for tpu_custom_call.1']
    #allocation4 [shape = 's32[1]{0}', space=sflag, size = 0x4, scoped, tag = 'scoped memory for tpu_custom_call.1']
    #allocation5 [shape = 'u8[3072]{0}', space=vmem, size = 0xc00, scoped, tag = 'input window, operand 2, single buffered']
    #allocation6 [shape = 's32[1]{0}', space=sflag, size = 0x4, scoped, tag = 'scoped memory for tpu_custom_call.1']
    #allocation7 [shape = 'u8[28672]{0}', space=vmem, size = 0x7000, scoped, tag = 'output window, operand 0, single buffered']
    %10 = vsyncpa [#allocation3], 0
    %11 = vsyncpa [#allocation6], 0
    %12 = vsyncpa [#allocation4], 0
    // Predicated region
    $region2: #{tpu_custom_call.1} parent=1 // pred_check
      _
    $region3: #{tpu_custom_call.1} parent=1 // pred_check_branch
      %14 = sbr.rel (0) target = $region5
    $region4: #{tpu_custom_call.1} parent=1 // pred_region
      %16 = vsyncadd [#allocation3], 0
      %s17 = sshll.u32 %s0, 4
      %s18 = int_to_ptr.hbm [resolvable:$true] %s17
      %s19 = sshll.u32 [#allocation2], 4
      %s20 = int_to_ptr.vmem [resolvable:$true] %s19
      %25 = dma.hbm_to_vmem [thread:$0]  %s18, 512, %s20, [#allocation3], 32, 32, 2
    $region5: #{tpu_custom_call.1} parent=1 // pred_fallthru
      _
    // Predicated region
    $region6: #{tpu_custom_call.1} parent=1 // pred_check
      _
    $region7: #{tpu_custom_call.1} parent=1 // pred_check_branch
      %27 = sbr.rel (0) target = $region9
    $region8: #{tpu_custom_call.1} parent=1 // pred_region
      _
    $region9: #{tpu_custom_call.1} parent=1 // pred_fallthru
      _
    // Predicated region
    $region10: #{tpu_custom_call.1} parent=1 // pred_check
      _
    $region11: #{tpu_custom_call.1} parent=1 // pred_check_branch
      %29 = sbr.rel (0) target = $region13
    $region12: #{tpu_custom_call.1} parent=1 // pred_region
      %31 = vsyncadd [#allocation6], 0
      %s32 = sshll.u32 %s2, 4
      %s33 = int_to_ptr.hbm [resolvable:$true] %s32
      %s34 = sshll.u32 [#allocation5], 4
      %s35 = int_to_ptr.vmem [resolvable:$true] %s34
      %40 = dma.hbm_to_vmem [thread:$0]  %s33, 96, %s35, [#allocation6], 32, 32, 2
    $region13: #{tpu_custom_call.1} parent=1 // pred_fallthru
      _
    // Predicated region
    $region14: #{tpu_custom_call.1} parent=1 // pred_check
      _
    $region15: #{tpu_custom_call.1} parent=1 // pred_check_branch
      %42 = sbr.rel (0) target = $region17
    $region16: #{tpu_custom_call.1} parent=1 // pred_region
      _
    $region17: #{tpu_custom_call.1} parent=1 // pred_fallthru
      _
    // Predicated region
    $region18: #{tpu_custom_call.1} parent=1 // pred_check
      _
    $region19: #{tpu_custom_call.1} parent=1 // pred_check_branch
      %44 = sbr.rel (0) target = $region21
    $region20: #{tpu_custom_call.1} parent=1 // pred_region
      _
    $region21: #{tpu_custom_call.1} parent=1 // pred_fallthru
      _
    // Predicated region
    $region22: #{tpu_custom_call.1} parent=1 // pred_check
      _
    $region23: #{tpu_custom_call.1} parent=1 // pred_check_branch
      %46 = sbr.rel (0) target = $region25
    $region24: #{tpu_custom_call.1} parent=1 // pred_region
      %48 = dma.done [#allocation3], 512
    $region25: #{tpu_custom_call.1} parent=1 // pred_fallthru
      _
    // Predicated region
    $region26: #{tpu_custom_call.1} parent=1 // pred_check
      _
    $region27: #{tpu_custom_call.1} parent=1 // pred_check_branch
      %50 = sbr.rel (0) target = $region29
    $region28: #{tpu_custom_call.1} parent=1 // pred_region
      %52 = dma.done [#allocation6], 96
    $region29: #{tpu_custom_call.1} parent=1 // pred_fallthru
      _
    %s54 = smul.u32 0, 14
    %v55 = vld [vmem:[%s3] sm:$0xf]
    %57 = vset.pattern.permute.xlu0 0
    %58 = vperm.xlu0 %57, %v55
    %v59 = vpop.permute.xlu0 %58
    %v61 = vld [vmem:[%s4] sm:$0xf]
    %63 = vset.pattern.permute.xlu0 0
    %64 = vperm.xlu0 %63, %v61
    %v65 = vpop.permute.xlu0 %64
    %s67 = smul.addr %s54, 2
    %s68 = scalar_lea.vmem [#allocation2], %s67
    %v69 = vld [vmem:[%s68] sm:$0x3]
    %v70 = vld [vmem:[%s1] sm:$0x3]
    %vm71 = vcmask 31744
    %v73 = vsel %vm71, %v70, 0
    %vm75 = vcmask 1041408
    %v77 = vsel %vm75, %v69, 0
    %79 = vmatpush.bf16.msra.mxu0 0
    %80 = vmatpush.bf16.msra.mxu0 0
    %81 = vmatpush.bf16.msra.mxu0 0
    %82 = vmatpush.bf16.msra.mxu0 0
    %83 = vmatpush.bf16.msra.mxu0 0
    %84 = vmatpush.bf16.msra.mxu0 0
    %85 = vmatpush.bf16.msra.mxu0 0
    %86 = vmatpush.bf16.msra.mxu0 %v77
    %87 = vmatmul.bf16.gmra.mxu0 %v73
    %v88 = vpop.f32.mrf.mxu0
    %v89 = vadd.f32 0.0, %v88
    %v90 = vpop.f32.mrf.mxu0
    %91 = vdwg.mxu0
    %v92 = vadd.f32 %v59, %v89
    %v93 = vld [vmem:[#allocation5] sm:$0x3]
    %v95 = vsel %vm71, %v93, 0
    %97 = vmatpush.bf16.msra.mxu0 0
    %98 = vmatpush.bf16.msra.mxu0 0
    %99 = vmatpush.bf16.msra.mxu0 0
    %100 = vmatpush.bf16.msra.mxu0 0
    %101 = vmatpush.bf16.msra.mxu0 0
    %102 = vmatpush.bf16.msra.mxu0 0
    %103 = vmatpush.bf16.msra.mxu0 0
    %104 = vmatpush.bf16.msra.mxu0 %v77
    %105 = vmatmul.bf16.gmra.mxu0 %v95
    %v106 = vpop.f32.mrf.mxu0
    %v107 = vadd.f32 0.0, %v106
    %v108 = vpop.f32.mrf.mxu0
    %109 = vdwg.mxu0
    %v110 = vadd.f32 %v65, %v107
    %s111 = sadd.s32 %s54, 1
    %s112 = smul.addr %s111, 2
    %s113 = scalar_lea.vmem [#allocation2], %s112
    %v114 = vld [vmem:[%s113] sm:$0x3]
    %s115 = scalar_lea.vmem %s1, 2
    %v116 = vld [vmem:[%s115] sm:$0x3]
    %v118 = vsel %vm71, %v116, 0
    %v121 = vsel %vm75, %v114, 0
    %123 = vmatpush.bf16.msra.mxu0 0
    %124 = vmatpush.bf16.msra.mxu0 0
    %125 = vmatpush.bf16.msra.mxu0 0
    %126 = vmatpush.bf16.msra.mxu0 0
    %127 = vmatpush.bf16.msra.mxu0 0
    %128 = vmatpush.bf16.msra.mxu0 0
    %129 = vmatpush.bf16.msra.mxu0 0
    %130 = vmatpush.bf16.msra.mxu0 %v121
    %131 = vmatmul.bf16.gmra.mxu0 %v118
    %v132 = vpop.f32.mrf.mxu0
    %v133 = vadd.f32 0.0, %v132
    %v134 = vpop.f32.mrf.mxu0
    %135 = vdwg.mxu0
    %v136 = vadd.f32 %v92, %v133
    %s137 = scalar_lea.vmem [#allocation5], 2
    %v138 = vld [vmem:[%s137] sm:$0x3]
    %v140 = vsel %vm71, %v138, 0
    %142 = vmatpush.bf16.msra.mxu0 0
    %143 = vmatpush.bf16.msra.mxu0 0
    %144 = vmatpush.bf16.msra.mxu0 0
    %145 = vmatpush.bf16.msra.mxu0 0
    %146 = vmatpush.bf16.msra.mxu0 0
    %147 = vmatpush.bf16.msra.mxu0 0
    %148 = vmatpush.bf16.msra.mxu0 0
    %149 = vmatpush.bf16.msra.mxu0 %v121
    %150 = vmatmul.bf16.gmra.mxu0 %v140
    %v151 = vpop.f32.mrf.mxu0
    %v152 = vadd.f32 0.0, %v151
    %v153 = vpop.f32.mrf.mxu0
    %154 = vdwg.mxu0
    %v155 = vadd.f32 %v110, %v152
    %s156 = sadd.s32 %s54, 2
    %s157 = smul.addr %s156, 2
    %s158 = scalar_lea.vmem [#allocation2], %s157
    %v159 = vld [vmem:[%s158] sm:$0x3]
    %s160 = scalar_lea.vmem %s1, 4
    %v161 = vld [vmem:[%s160] sm:$0x3]
    %v163 = vsel %vm71, %v161, 0
    %v166 = vsel %vm75, %v159, 0
    %168 = vmatpush.bf16.msra.mxu0 0
    %169 = vmatpush.bf16.msra.mxu0 0
    %170 = vmatpush.bf16.msra.mxu0 0
    %171 = vmatpush.bf16.msra.mxu0 0
    %172 = vmatpush.bf16.msra.mxu0 0
    %173 = vmatpush.bf16.msra.mxu0 0
    %174 = vmatpush.bf16.msra.mxu0 0
    %175 = vmatpush.bf16.msra.mxu0 %v166
    %176 = vmatmul.bf16.gmra.mxu0 %v163
    %v177 = vpop.f32.mrf.mxu0
    %v178 = vadd.f32 0.0, %v177
    %v179 = vpop.f32.mrf.mxu0
    %180 = vdwg.mxu0
    %v181 = vadd.f32 %v136, %v178
    %s182 = scalar_lea.vmem [#allocation5], 4
    %v183 = vld [vmem:[%s182] sm:$0x3]
    %v185 = vsel %vm71, %v183, 0
    %187 = vmatpush.bf16.msra.mxu0 0
    %188 = vmatpush.bf16.msra.mxu0 0
    %189 = vmatpush.bf16.msra.mxu0 0
    %190 = vmatpush.bf16.msra.mxu0 0
    %191 = vmatpush.bf16.msra.mxu0 0
    %192 = vmatpush.bf16.msra.mxu0 0
    %193 = vmatpush.bf16.msra.mxu0 0
    %194 = vmatpush.bf16.msra.mxu0 %v166
    %195 = vmatmul.bf16.gmra.mxu0 %v185
    %v196 = vpop.f32.mrf.mxu0
    %v197 = vadd.f32 0.0, %v196
    %v198 = vpop.f32.mrf.mxu0
    %199 = vdwg.mxu0
    %v200 = vadd.f32 %v155, %v197
    %v201 = vmul.f32 %v200, 0.5
    %v202 = vtanh.pop %v201
    %v203 = vadd.f32 %v202, 1.0
    %v204 = vmul.f32 %v203, 0.5
    %v205 = vtanh.pop %v181
    %v206 = vmul.f32 %v205, %v204
    %vm207 = vcmask 125952
    %208 = vst.msk [vmem:[#allocation7] sm:$0xf] %vm207, %v206
    %v209 = vld [vmem:[%s113] sm:$0x3]
    %v210 = vld [vmem:[%s1] sm:$0x3]
    %v212 = vsel %vm71, %v210, 0
    %v215 = vsel %vm75, %v209, 0
    %217 = vmatpush.bf16.msra.mxu0 0
    %218 = vmatpush.bf16.msra.mxu0 0
    %219 = vmatpush.bf16.msra.mxu0 0
    %220 = vmatpush.bf16.msra.mxu0 0
    %221 = vmatpush.bf16.msra.mxu0 0
    %222 = vmatpush.bf16.msra.mxu0 0
    %223 = vmatpush.bf16.msra.mxu0 0
    %224 = vmatpush.bf16.msra.mxu0 %v215
    %225 = vmatmul.bf16.gmra.mxu0 %v212
    %v226 = vpop.f32.mrf.mxu0
    %v227 = vadd.f32 0.0, %v226
    %v228 = vpop.f32.mrf.mxu0
    %229 = vdwg.mxu0
    %v230 = vadd.f32 %v59, %v227
    %v231 = vld [vmem:[#allocation5] sm:$0x3]
    %v233 = vsel %vm71, %v231, 0
    %235 = vmatpush.bf16.msra.mxu0 0
    %236 = vmatpush.bf16.msra.mxu0 0
    %237 = vmatpush.bf16.msra.mxu0 0
    %238 = vmatpush.bf16.msra.mxu0 0
    %239 = vmatpush.bf16.msra.mxu0 0
    %240 = vmatpush.bf16.msra.mxu0 0
    %241 = vmatpush.bf16.msra.mxu0 0
    %242 = vmatpush.bf16.msra.mxu0 %v215
    %243 = vmatmul.bf16.gmra.mxu0 %v233
    %v244 = vpop.f32.mrf.mxu0
    %v245 = vadd.f32 0.0, %v244
    %v246 = vpop.f32.mrf.mxu0
    %247 = vdwg.mxu0
    %v248 = vadd.f32 %v65, %v245
    %v249 = vld [vmem:[%s158] sm:$0x3]
    %v250 = vld [vmem:[%s115] sm:$0x3]
    %v252 = vsel %vm71, %v250, 0
    %v255 = vsel %vm75, %v249, 0
    %257 = vmatpush.bf16.msra.mxu0 0
    %258 = vmatpush.bf16.msra.mxu0 0
    %259 = vmatpush.bf16.msra.mxu0 0
    %260 = vmatpush.bf16.msra.mxu0 0
    %261 = vmatpush.bf16.msra.mxu0 0
    %262 = vmatpush.bf16.msra.mxu0 0
    %263 = vmatpush.bf16.msra.mxu0 0
    %264 = vmatpush.bf16.msra.mxu0 %v255
    %265 = vmatmul.bf16.gmra.mxu0 %v252
    %v266 = vpop.f32.mrf.mxu0
    %v267 = vadd.f32 0.0, %v266
    %v268 = vpop.f32.mrf.mxu0
    %269 = vdwg.mxu0
    %v270 = vadd.f32 %v230, %v267
    %v271 = vld [vmem:[%s137] sm:$0x3]
    %v273 = vsel %vm71, %v271, 0
    %275 = vmatpush.bf16.msra.mxu0 0
    %276 = vmatpush.bf16.msra.mxu0 0
    %277 = vmatpush.bf16.msra.mxu0 0
    %278 = vmatpush.bf16.msra.mxu0 0
    %279 = vmatpush.bf16.msra.mxu0 0
    %280 = vmatpush.bf16.msra.mxu0 0
    %281 = vmatpush.bf16.msra.mxu0 0
    %282 = vmatpush.bf16.msra.mxu0 %v255
    %283 = vmatmul.bf16.gmra.mxu0 %v273
    %v284 = vpop.f32.mrf.mxu0
    %v285 = vadd.f32 0.0, %v284
    %v286 = vpop.f32.mrf.mxu0
    %287 = vdwg.mxu0
    %v288 = vadd.f32 %v248, %v285
    %s289 = sadd.s32 %s54, 3
    %s290 = smul.addr %s289, 2
    %s291 = scalar_lea.vmem [#allocation2], %s290
    %v292 = vld [vmem:[%s291] sm:$0x3]
    %v293 = vld [vmem:[%s160] sm:$0x3]
    %v295 = vsel %vm71, %v293, 0
    %v298 = vsel %vm75, %v292, 0
    %300 = vmatpush.bf16.msra.mxu0 0
    %301 = vmatpush.bf16.msra.mxu0 0
    %302 = vmatpush.bf16.msra.mxu0 0
    %303 = vmatpush.bf16.msra.mxu0 0
    %304 = vmatpush.bf16.msra.mxu0 0
    %305 = vmatpush.bf16.msra.mxu0 0
    %306 = vmatpush.bf16.msra.mxu0 0
    %307 = vmatpush.bf16.msra.mxu0 %v298
    %308 = vmatmul.bf16.gmra.mxu0 %v295
    %v309 = vpop.f32.mrf.mxu0
    %v310 = vadd.f32 0.0, %v309
    %v311 = vpop.f32.mrf.mxu0
    %312 = vdwg.mxu0
    %v313 = vadd.f32 %v270, %v310
    %v314 = vld [vmem:[%s182] sm:$0x3]
    %v316 = vsel %vm71, %v314, 0
    %318 = vmatpush.bf16.msra.mxu0 0
    %319 = vmatpush.bf16.msra.mxu0 0
    %320 = vmatpush.bf16.msra.mxu0 0
    %321 = vmatpush.bf16.msra.mxu0 0
    %322 = vmatpush.bf16.msra.mxu0 0
    %323 = vmatpush.bf16.msra.mxu0 0
    %324 = vmatpush.bf16.msra.mxu0 0
    %325 = vmatpush.bf16.msra.mxu0 %v298
    %326 = vmatmul.bf16.gmra.mxu0 %v316
    %v327 = vpop.f32.mrf.mxu0
    %v328 = vadd.f32 0.0, %v327
    %v329 = vpop.f32.mrf.mxu0
    %330 = vdwg.mxu0
    %v331 = vadd.f32 %v288, %v328
    %v332 = vmul.f32 %v331, 0.5
    %v333 = vtanh.pop %v332
    %v334 = vadd.f32 %v333, 1.0
    %v335 = vmul.f32 %v334, 0.5
    %v336 = vtanh.pop %v313
    %v337 = vmul.f32 %v336, %v335
    %s338 = scalar_lea.vmem [#allocation7], 4
    %339 = vst.msk [vmem:[%s338] sm:$0xf] %vm207, %v337
    %v340 = vld [vmem:[%s158] sm:$0x3]
    %v341 = vld [vmem:[%s1] sm:$0x3]
    %v343 = vsel %vm71, %v341, 0
    %v346 = vsel %vm75, %v340, 0
    %348 = vmatpush.bf16.msra.mxu0 0
    %349 = vmatpush.bf16.msra.mxu0 0
    %350 = vmatpush.bf16.msra.mxu0 0
    %351 = vmatpush.bf16.msra.mxu0 0
    %352 = vmatpush.bf16.msra.mxu0 0
    %353 = vmatpush.bf16.msra.mxu0 0
    %354 = vmatpush.bf16.msra.mxu0 0
    %355 = vmatpush.bf16.msra.mxu0 %v346
    %356 = vmatmul.bf16.gmra.mxu0 %v343
    %v357 = vpop.f32.mrf.mxu0
    %v358 = vadd.f32 0.0, %v357
    %v359 = vpop.f32.mrf.mxu0
    %360 = vdwg.mxu0
    %v361 = vadd.f32 %v59, %v358
    %v362 = vld [vmem:[#allocation5] sm:$0x3]
    %v364 = vsel %vm71, %v362, 0
    %366 = vmatpush.bf16.msra.mxu0 0
    %367 = vmatpush.bf16.msra.mxu0 0
    %368 = vmatpush.bf16.msra.mxu0 0
    %369 = vmatpush.bf16.msra.mxu0 0
    %370 = vmatpush.bf16.msra.mxu0 0
    %371 = vmatpush.bf16.msra.mxu0 0
    %372 = vmatpush.bf16.msra.mxu0 0
    %373 = vmatpush.bf16.msra.mxu0 %v346
    %374 = vmatmul.bf16.gmra.mxu0 %v364
    %v375 = vpop.f32.mrf.mxu0
    %v376 = vadd.f32 0.0, %v375
    %v377 = vpop.f32.mrf.mxu0
    %378 = vdwg.mxu0
    %v379 = vadd.f32 %v65, %v376
    %v380 = vld [vmem:[%s291] sm:$0x3]
    %v381 = vld [vmem:[%s115] sm:$0x3]
    %v383 = vsel %vm71, %v381, 0
    %v386 = vsel %vm75, %v380, 0
    %388 = vmatpush.bf16.msra.mxu0 0
    %389 = vmatpush.bf16.msra.mxu0 0
    %390 = vmatpush.bf16.msra.mxu0 0
    %391 = vmatpush.bf16.msra.mxu0 0
    %392 = vmatpush.bf16.msra.mxu0 0
    %393 = vmatpush.bf16.msra.mxu0 0
    %394 = vmatpush.bf16.msra.mxu0 0
    %395 = vmatpush.bf16.msra.mxu0 %v386
    %396 = vmatmul.bf16.gmra.mxu0 %v383
    %v397 = vpop.f32.mrf.mxu0
    %v398 = vadd.f32 0.0, %v397
    %v399 = vpop.f32.mrf.mxu0
    %400 = vdwg.mxu0
    %v401 = vadd.f32 %v361, %v398
    %v402 = vld [vmem:[%s137] sm:$0x3]
    %v404 = vsel %vm71, %v402, 0
    %406 = vmatpush.bf16.msra.mxu0 0
    %407 = vmatpush.bf16.msra.mxu0 0
    %408 = vmatpush.bf16.msra.mxu0 0
    %409 = vmatpush.bf16.msra.mxu0 0
    %410 = vmatpush.bf16.msra.mxu0 0
    %411 = vmatpush.bf16.msra.mxu0 0
    %412 = vmatpush.bf16.msra.mxu0 0
    %413 = vmatpush.bf16.msra.mxu0 %v386
    %414 = vmatmul.bf16.gmra.mxu0 %v404
    %v415 = vpop.f32.mrf.mxu0
    %v416 = vadd.f32 0.0, %v415
    %v417 = vpop.f32.mrf.mxu0
    %418 = vdwg.mxu0
    %v419 = vadd.f32 %v379, %v416
    %s420 = sadd.s32 %s54, 4
    %s421 = smul.addr %s420, 2
    %s422 = scalar_lea.vmem [#allocation2], %s421
    %v423 = vld [vmem:[%s422] sm:$0x3]
    %v424 = vld [vmem:[%s160] sm:$0x3]
    %v426 = vsel %vm71, %v424, 0
    %v429 = vsel %vm75, %v423, 0
    %431 = vmatpush.bf16.msra.mxu0 0
    %432 = vmatpush.bf16.msra.mxu0 0
    %433 = vmatpush.bf16.msra.mxu0 0
    %434 = vmatpush.bf16.msra.mxu0 0
    %435 = vmatpush.bf16.msra.mxu0 0
    %436 = vmatpush.bf16.msra.mxu0 0
    %437 = vmatpush.bf16.msra.mxu0 0
    %438 = vmatpush.bf16.msra.mxu0 %v429
    %439 = vmatmul.bf16.gmra.mxu0 %v426
    %v440 = vpop.f32.mrf.mxu0
    %v441 = vadd.f32 0.0, %v440
    %v442 = vpop.f32.mrf.mxu0
    %443 = vdwg.mxu0
    %v444 = vadd.f32 %v401, %v441
    %v445 = vld [vmem:[%s182] sm:$0x3]
    %v447 = vsel %vm71, %v445, 0
    %449 = vmatpush.bf16.msra.mxu0 0
    %450 = vmatpush.bf16.msra.mxu0 0
    %451 = vmatpush.bf16.msra.mxu0 0
    %452 = vmatpush.bf16.msra.mxu0 0
    %453 = vmatpush.bf16.msra.mxu0 0
    %454 = vmatpush.bf16.msra.mxu0 0
    %455 = vmatpush.bf16.msra.mxu0 0
    %456 = vmatpush.bf16.msra.mxu0 %v429
    %457 = vmatmul.bf16.gmra.mxu0 %v447
    %v458 = vpop.f32.mrf.mxu0
    %v459 = vadd.f32 0.0, %v458
    %v460 = vpop.f32.mrf.mxu0
    %461 = vdwg.mxu0
    %v462 = vadd.f32 %v419, %v459
    %v463 = vmul.f32 %v462, 0.5
    %v464 = vtanh.pop %v463
    %v465 = vadd.f32 %v464, 1.0
    %v466 = vmul.f32 %v465, 0.5
    %v467 = vtanh.pop %v444
    %v468 = vmul.f32 %v467, %v466
    %s469 = scalar_lea.vmem [#allocation7], 8
    %470 = vst.msk [vmem:[%s469] sm:$0xf] %vm207, %v468
    %v471 = vld [vmem:[%s291] sm:$0x3]
    %v472 = vld [vmem:[%s1] sm:$0x3]
    %v474 = vsel %vm71, %v472, 0
    %v477 = vsel %vm75, %v471, 0
    %479 = vmatpush.bf16.msra.mxu0 0
    %480 = vmatpush.bf16.msra.mxu0 0
    %481 = vmatpush.bf16.msra.mxu0 0
    %482 = vmatpush.bf16.msra.mxu0 0
    %483 = vmatpush.bf16.msra.mxu0 0
    %484 = vmatpush.bf16.msra.mxu0 0
    %485 = vmatpush.bf16.msra.mxu0 0
    %486 = vmatpush.bf16.msra.mxu0 %v477
    %487 = vmatmul.bf16.gmra.mxu0 %v474
    %v488 = vpop.f32.mrf.mxu0
    %v489 = vadd.f32 0.0, %v488
    %v490 = vpop.f32.mrf.mxu0
    %491 = vdwg.mxu0
    %v492 = vadd.f32 %v59, %v489
    %v493 = vld [vmem:[#allocation5] sm:$0x3]
    %v495 = vsel %vm71, %v493, 0
    %497 = vmatpush.bf16.msra.mxu0 0
    %498 = vmatpush.bf16.msra.mxu0 0
    %499 = vmatpush.bf16.msra.mxu0 0
    %500 = vmatpush.bf16.msra.mxu0 0
    %501 = vmatpush.bf16.msra.mxu0 0
    %502 = vmatpush.bf16.msra.mxu0 0
    %503 = vmatpush.bf16.msra.mxu0 0
    %504 = vmatpush.bf16.msra.mxu0 %v477
    %505 = vmatmul.bf16.gmra.mxu0 %v495
    %v506 = vpop.f32.mrf.mxu0
    %v507 = vadd.f32 0.0, %v506
    %v508 = vpop.f32.mrf.mxu0
    %509 = vdwg.mxu0
    %v510 = vadd.f32 %v65, %v507
    %v511 = vld [vmem:[%s422] sm:$0x3]
    %v512 = vld [vmem:[%s115] sm:$0x3]
    %v514 = vsel %vm71, %v512, 0
    %v517 = vsel %vm75, %v511, 0
    %519 = vmatpush.bf16.msra.mxu0 0
    %520 = vmatpush.bf16.msra.mxu0 0
    %521 = vmatpush.bf16.msra.mxu0 0
    %522 = vmatpush.bf16.msra.mxu0 0
    %523 = vmatpush.bf16.msra.mxu0 0
    %524 = vmatpush.bf16.msra.mxu0 0
    %525 = vmatpush.bf16.msra.mxu0 0
    %526 = vmatpush.bf16.msra.mxu0 %v517
    %527 = vmatmul.bf16.gmra.mxu0 %v514
    %v528 = vpop.f32.mrf.mxu0
    %v529 = vadd.f32 0.0, %v528
    %v530 = vpop.f32.mrf.mxu0
    %531 = vdwg.mxu0
    %v532 = vadd.f32 %v492, %v529
    %v533 = vld [vmem:[%s137] sm:$0x3]
    %v535 = vsel %vm71, %v533, 0
    %537 = vmatpush.bf16.msra.mxu0 0
    %538 = vmatpush.bf16.msra.mxu0 0
    %539 = vmatpush.bf16.msra.mxu0 0
    %540 = vmatpush.bf16.msra.mxu0 0
    %541 = vmatpush.bf16.msra.mxu0 0
    %542 = vmatpush.bf16.msra.mxu0 0
    %543 = vmatpush.bf16.msra.mxu0 0
    %544 = vmatpush.bf16.msra.mxu0 %v517
    %545 = vmatmul.bf16.gmra.mxu0 %v535
    %v546 = vpop.f32.mrf.mxu0
    %v547 = vadd.f32 0.0, %v546
    %v548 = vpop.f32.mrf.mxu0
    %549 = vdwg.mxu0
    %v550 = vadd.f32 %v510, %v547
    %s551 = sadd.s32 %s54, 5
    %s552 = smul.addr %s551, 2
    %s553 = scalar_lea.vmem [#allocation2], %s552
    %v554 = vld [vmem:[%s553] sm:$0x3]
    %v555 = vld [vmem:[%s160] sm:$0x3]
    %v557 = vsel %vm71, %v555, 0
    %v560 = vsel %vm75, %v554, 0
    %562 = vmatpush.bf16.msra.mxu0 0
    %563 = vmatpush.bf16.msra.mxu0 0
    %564 = vmatpush.bf16.msra.mxu0 0
    %565 = vmatpush.bf16.msra.mxu0 0
    %566 = vmatpush.bf16.msra.mxu0 0
    %567 = vmatpush.bf16.msra.mxu0 0
    %568 = vmatpush.bf16.msra.mxu0 0
    %569 = vmatpush.bf16.msra.mxu0 %v560
    %570 = vmatmul.bf16.gmra.mxu0 %v557
    %v571 = vpop.f32.mrf.mxu0
    %v572 = vadd.f32 0.0, %v571
    %v573 = vpop.f32.mrf.mxu0
    %574 = vdwg.mxu0
    %v575 = vadd.f32 %v532, %v572
    %v576 = vld [vmem:[%s182] sm:$0x3]
    %v578 = vsel %vm71, %v576, 0
    %580 = vmatpush.bf16.msra.mxu0 0
    %581 = vmatpush.bf16.msra.mxu0 0
    %582 = vmatpush.bf16.msra.mxu0 0
    %583 = vmatpush.bf16.msra.mxu0 0
    %584 = vmatpush.bf16.msra.mxu0 0
    %585 = vmatpush.bf16.msra.mxu0 0
    %586 = vmatpush.bf16.msra.mxu0 0
    %587 = vmatpush.bf16.msra.mxu0 %v560
    %588 = vmatmul.bf16.gmra.mxu0 %v578
    %v589 = vpop.f32.mrf.mxu0
    %v590 = vadd.f32 0.0, %v589
    %v591 = vpop.f32.mrf.mxu0
    %592 = vdwg.mxu0
    %v593 = vadd.f32 %v550, %v590
    %v594 = vmul.f32 %v593, 0.5
    %v595 = vtanh.pop %v594
    %v596 = vadd.f32 %v595, 1.0
    %v597 = vmul.f32 %v596, 0.5
    %v598 = vtanh.pop %v575
    %v599 = vmul.f32 %v598, %v597
    %s600 = scalar_lea.vmem [#allocation7], 12
    %601 = vst.msk [vmem:[%s600] sm:$0xf] %vm207, %v599
    %v602 = vld [vmem:[%s422] sm:$0x3]
    %v603 = vld [vmem:[%s1] sm:$0x3]
    %v605 = vsel %vm71, %v603, 0
    %v608 = vsel %vm75, %v602, 0
    %610 = vmatpush.bf16.msra.mxu0 0
    %611 = vmatpush.bf16.msra.mxu0 0
    %612 = vmatpush.bf16.msra.mxu0 0
    %613 = vmatpush.bf16.msra.mxu0 0
    %614 = vmatpush.bf16.msra.mxu0 0
    %615 = vmatpush.bf16.msra.mxu0 0
    %616 = vmatpush.bf16.msra.mxu0 0
    %617 = vmatpush.bf16.msra.mxu0 %v608
    %618 = vmatmul.bf16.gmra.mxu0 %v605
    %v619 = vpop.f32.mrf.mxu0
    %v620 = vadd.f32 0.0, %v619
    %v621 = vpop.f32.mrf.mxu0
    %622 = vdwg.mxu0
    %v623 = vadd.f32 %v59, %v620
    %v624 = vld [vmem:[#allocation5] sm:$0x3]
    %v626 = vsel %vm71, %v624, 0
    %628 = vmatpush.bf16.msra.mxu0 0
    %629 = vmatpush.bf16.msra.mxu0 0
    %630 = vmatpush.bf16.msra.mxu0 0
    %631 = vmatpush.bf16.msra.mxu0 0
    %632 = vmatpush.bf16.msra.mxu0 0
    %633 = vmatpush.bf16.msra.mxu0 0
    %634 = vmatpush.bf16.msra.mxu0 0
    %635 = vmatpush.bf16.msra.mxu0 %v608
    %636 = vmatmul.bf16.gmra.mxu0 %v626
    %v637 = vpop.f32.mrf.mxu0
    %v638 = vadd.f32 0.0, %v637
    %v639 = vpop.f32.mrf.mxu0
    %640 = vdwg.mxu0
    %v641 = vadd.f32 %v65, %v638
    %v642 = vld [vmem:[%s553] sm:$0x3]
    %v643 = vld [vmem:[%s115] sm:$0x3]
    %v645 = vsel %vm71, %v643, 0
    %v648 = vsel %vm75, %v642, 0
    %650 = vmatpush.bf16.msra.mxu0 0
    %651 = vmatpush.bf16.msra.mxu0 0
    %652 = vmatpush.bf16.msra.mxu0 0
    %653 = vmatpush.bf16.msra.mxu0 0
    %654 = vmatpush.bf16.msra.mxu0 0
    %655 = vmatpush.bf16.msra.mxu0 0
    %656 = vmatpush.bf16.msra.mxu0 0
    %657 = vmatpush.bf16.msra.mxu0 %v648
    %658 = vmatmul.bf16.gmra.mxu0 %v645
    %v659 = vpop.f32.mrf.mxu0
    %v660 = vadd.f32 0.0, %v659
    %v661 = vpop.f32.mrf.mxu0
    %662 = vdwg.mxu0
    %v663 = vadd.f32 %v623, %v660
    %v664 = vld [vmem:[%s137] sm:$0x3]
    %v666 = vsel %vm71, %v664, 0
    %668 = vmatpush.bf16.msra.mxu0 0
    %669 = vmatpush.bf16.msra.mxu0 0
    %670 = vmatpush.bf16.msra.mxu0 0
    %671 = vmatpush.bf16.msra.mxu0 0
    %672 = vmatpush.bf16.msra.mxu0 0
    %673 = vmatpush.bf16.msra.mxu0 0
    %674 = vmatpush.bf16.msra.mxu0 0
    %675 = vmatpush.bf16.msra.mxu0 %v648
    %676 = vmatmul.bf16.gmra.mxu0 %v666
    %v677 = vpop.f32.mrf.mxu0
    %v678 = vadd.f32 0.0, %v677
    %v679 = vpop.f32.mrf.mxu0
    %680 = vdwg.mxu0
    %v681 = vadd.f32 %v641, %v678
    %s682 = sadd.s32 %s54, 6
    %s683 = smul.addr %s682, 2
    %s684 = scalar_lea.vmem [#allocation2], %s683
    %v685 = vld [vmem:[%s684] sm:$0x3]
    %v686 = vld [vmem:[%s160] sm:$0x3]
    %v688 = vsel %vm71, %v686, 0
    %v691 = vsel %vm75, %v685, 0
    %693 = vmatpush.bf16.msra.mxu0 0
    %694 = vmatpush.bf16.msra.mxu0 0
    %695 = vmatpush.bf16.msra.mxu0 0
    %696 = vmatpush.bf16.msra.mxu0 0
    %697 = vmatpush.bf16.msra.mxu0 0
    %698 = vmatpush.bf16.msra.mxu0 0
    %699 = vmatpush.bf16.msra.mxu0 0
    %700 = vmatpush.bf16.msra.mxu0 %v691
    %701 = vmatmul.bf16.gmra.mxu0 %v688
    %v702 = vpop.f32.mrf.mxu0
    %v703 = vadd.f32 0.0, %v702
    %v704 = vpop.f32.mrf.mxu0
    %705 = vdwg.mxu0
    %v706 = vadd.f32 %v663, %v703
    %v707 = vld [vmem:[%s182] sm:$0x3]
    %v709 = vsel %vm71, %v707, 0
    %711 = vmatpush.bf16.msra.mxu0 0
    %712 = vmatpush.bf16.msra.mxu0 0
    %713 = vmatpush.bf16.msra.mxu0 0
    %714 = vmatpush.bf16.msra.mxu0 0
    %715 = vmatpush.bf16.msra.mxu0 0
    %716 = vmatpush.bf16.msra.mxu0 0
    %717 = vmatpush.bf16.msra.mxu0 0
    %718 = vmatpush.bf16.msra.mxu0 %v691
    %719 = vmatmul.bf16.gmra.mxu0 %v709
    %v720 = vpop.f32.mrf.mxu0
    %v721 = vadd.f32 0.0, %v720
    %v722 = vpop.f32.mrf.mxu0
    %723 = vdwg.mxu0
    %v724 = vadd.f32 %v681, %v721
    %v725 = vmul.f32 %v724, 0.5
    %v726 = vtanh.pop %v725
    %v727 = vadd.f32 %v726, 1.0
    %v728 = vmul.f32 %v727, 0.5
    %v729 = vtanh.pop %v706
    %v730 = vmul.f32 %v729, %v728
    %s731 = scalar_lea.vmem [#allocation7], 16
    %732 = vst.msk [vmem:[%s731] sm:$0xf] %vm207, %v730
    %v733 = vld [vmem:[%s553] sm:$0x3]
    %v734 = vld [vmem:[%s1] sm:$0x3]
    %v736 = vsel %vm71, %v734, 0
    %v739 = vsel %vm75, %v733, 0
    %741 = vmatpush.bf16.msra.mxu0 0
    %742 = vmatpush.bf16.msra.mxu0 0
    %743 = vmatpush.bf16.msra.mxu0 0
    %744 = vmatpush.bf16.msra.mxu0 0
    %745 = vmatpush.bf16.msra.mxu0 0
    %746 = vmatpush.bf16.msra.mxu0 0
    %747 = vmatpush.bf16.msra.mxu0 0
    %748 = vmatpush.bf16.msra.mxu0 %v739
    %749 = vmatmul.bf16.gmra.mxu0 %v736
    %v750 = vpop.f32.mrf.mxu0
    %v751 = vadd.f32 0.0, %v750
    %v752 = vpop.f32.mrf.mxu0
    %753 = vdwg.mxu0
    %v754 = vadd.f32 %v59, %v751
    %v755 = vld [vmem:[#allocation5] sm:$0x3]
    %v757 = vsel %vm71, %v755, 0
    %759 = vmatpush.bf16.msra.mxu0 0
    %760 = vmatpush.bf16.msra.mxu0 0
    %761 = vmatpush.bf16.msra.mxu0 0
    %762 = vmatpush.bf16.msra.mxu0 0
    %763 = vmatpush.bf16.msra.mxu0 0
    %764 = vmatpush.bf16.msra.mxu0 0
    %765 = vmatpush.bf16.msra.mxu0 0
    %766 = vmatpush.bf16.msra.mxu0 %v739
    %767 = vmatmul.bf16.gmra.mxu0 %v757
    %v768 = vpop.f32.mrf.mxu0
    %v769 = vadd.f32 0.0, %v768
    %v770 = vpop.f32.mrf.mxu0
    %771 = vdwg.mxu0
    %v772 = vadd.f32 %v65, %v769
    %v773 = vld [vmem:[%s684] sm:$0x3]
    %v774 = vld [vmem:[%s115] sm:$0x3]
    %v776 = vsel %vm71, %v774, 0
    %v779 = vsel %vm75, %v773, 0
    %781 = vmatpush.bf16.msra.mxu0 0
    %782 = vmatpush.bf16.msra.mxu0 0
    %783 = vmatpush.bf16.msra.mxu0 0
    %784 = vmatpush.bf16.msra.mxu0 0
    %785 = vmatpush.bf16.msra.mxu0 0
    %786 = vmatpush.bf16.msra.mxu0 0
    %787 = vmatpush.bf16.msra.mxu0 0
    %788 = vmatpush.bf16.msra.mxu0 %v779
    %789 = vmatmul.bf16.gmra.mxu0 %v776
    %v790 = vpop.f32.mrf.mxu0
    %v791 = vadd.f32 0.0, %v790
    %v792 = vpop.f32.mrf.mxu0
    %793 = vdwg.mxu0
    %v794 = vadd.f32 %v754, %v791
    %v795 = vld [vmem:[%s137] sm:$0x3]
    %v797 = vsel %vm71, %v795, 0
    %799 = vmatpush.bf16.msra.mxu0 0
    %800 = vmatpush.bf16.msra.mxu0 0
    %801 = vmatpush.bf16.msra.mxu0 0
    %802 = vmatpush.bf16.msra.mxu0 0
    %803 = vmatpush.bf16.msra.mxu0 0
    %804 = vmatpush.bf16.msra.mxu0 0
    %805 = vmatpush.bf16.msra.mxu0 0
    %806 = vmatpush.bf16.msra.mxu0 %v779
    %807 = vmatmul.bf16.gmra.mxu0 %v797
    %v808 = vpop.f32.mrf.mxu0
    %v809 = vadd.f32 0.0, %v808
    %v810 = vpop.f32.mrf.mxu0
    %811 = vdwg.mxu0
    %v812 = vadd.f32 %v772, %v809
    %s813 = sadd.s32 %s54, 7
    %s814 = smul.addr %s813, 2
    %s815 = scalar_lea.vmem [#allocation2], %s814
    %v816 = vld [vmem:[%s815] sm:$0x3]
    %v817 = vld [vmem:[%s160] sm:$0x3]
    %v819 = vsel %vm71, %v817, 0
    %v822 = vsel %vm75, %v816, 0
    %824 = vmatpush.bf16.msra.mxu0 0
    %825 = vmatpush.bf16.msra.mxu0 0
    %826 = vmatpush.bf16.msra.mxu0 0
    %827 = vmatpush.bf16.msra.mxu0 0
    %828 = vmatpush.bf16.msra.mxu0 0
    %829 = vmatpush.bf16.msra.mxu0 0
    %830 = vmatpush.bf16.msra.mxu0 0
    %831 = vmatpush.bf16.msra.mxu0 %v822
    %832 = vmatmul.bf16.gmra.mxu0 %v819
    %v833 = vpop.f32.mrf.mxu0
    %v834 = vadd.f32 0.0, %v833
    %v835 = vpop.f32.mrf.mxu0
    %836 = vdwg.mxu0
    %v837 = vadd.f32 %v794, %v834
    %v838 = vld [vmem:[%s182] sm:$0x3]
    %v840 = vsel %vm71, %v838, 0
    %842 = vmatpush.bf16.msra.mxu0 0
    %843 = vmatpush.bf16.msra.mxu0 0
    %844 = vmatpush.bf16.msra.mxu0 0
    %845 = vmatpush.bf16.msra.mxu0 0
    %846 = vmatpush.bf16.msra.mxu0 0
    %847 = vmatpush.bf16.msra.mxu0 0
    %848 = vmatpush.bf16.msra.mxu0 0
    %849 = vmatpush.bf16.msra.mxu0 %v822
    %850 = vmatmul.bf16.gmra.mxu0 %v840
    %v851 = vpop.f32.mrf.mxu0
    %v852 = vadd.f32 0.0, %v851
    %v853 = vpop.f32.mrf.mxu0
    %854 = vdwg.mxu0
    %v855 = vadd.f32 %v812, %v852
    %v856 = vmul.f32 %v855, 0.5
    %v857 = vtanh.pop %v856
    %v858 = vadd.f32 %v857, 1.0
    %v859 = vmul.f32 %v858, 0.5
    %v860 = vtanh.pop %v837
    %v861 = vmul.f32 %v860, %v859
    %s862 = scalar_lea.vmem [#allocation7], 20
    %863 = vst.msk [vmem:[%s862] sm:$0xf] %vm207, %v861
    %v864 = vld [vmem:[%s684] sm:$0x3]
    %v865 = vld [vmem:[%s1] sm:$0x3]
    %v867 = vsel %vm71, %v865, 0
    %v870 = vsel %vm75, %v864, 0
    %872 = vmatpush.bf16.msra.mxu0 0
    %873 = vmatpush.bf16.msra.mxu0 0
    %874 = vmatpush.bf16.msra.mxu0 0
    %875 = vmatpush.bf16.msra.mxu0 0
    %876 = vmatpush.bf16.msra.mxu0 0
    %877 = vmatpush.bf16.msra.mxu0 0
    %878 = vmatpush.bf16.msra.mxu0 0
    %879 = vmatpush.bf16.msra.mxu0 %v870
    %880 = vmatmul.bf16.gmra.mxu0 %v867
    %v881 = vpop.f32.mrf.mxu0
    %v882 = vadd.f32 0.0, %v881
    %v883 = vpop.f32.mrf.mxu0
    %884 = vdwg.mxu0
    %v885 = vadd.f32 %v59, %v882
    %v886 = vld [vmem:[#allocation5] sm:$0x3]
    %v888 = vsel %vm71, %v886, 0
    %890 = vmatpush.bf16.msra.mxu0 0
    %891 = vmatpush.bf16.msra.mxu0 0
    %892 = vmatpush.bf16.msra.mxu0 0
    %893 = vmatpush.bf16.msra.mxu0 0
    %894 = vmatpush.bf16.msra.mxu0 0
    %895 = vmatpush.bf16.msra.mxu0 0
    %896 = vmatpush.bf16.msra.mxu0 0
    %897 = vmatpush.bf16.msra.mxu0 %v870
    %898 = vmatmul.bf16.gmra.mxu0 %v888
    %v899 = vpop.f32.mrf.mxu0
    %v900 = vadd.f32 0.0, %v899
    %v901 = vpop.f32.mrf.mxu0
    %902 = vdwg.mxu0
    %v903 = vadd.f32 %v65, %v900
    %v904 = vld [vmem:[%s815] sm:$0x3]
    %v905 = vld [vmem:[%s115] sm:$0x3]
    %v907 = vsel %vm71, %v905, 0
    %v910 = vsel %vm75, %v904, 0
    %912 = vmatpush.bf16.msra.mxu0 0
    %913 = vmatpush.bf16.msra.mxu0 0
    %914 = vmatpush.bf16.msra.mxu0 0
    %915 = vmatpush.bf16.msra.mxu0 0
    %916 = vmatpush.bf16.msra.mxu0 0
    %917 = vmatpush.bf16.msra.mxu0 0
    %918 = vmatpush.bf16.msra.mxu0 0
    %919 = vmatpush.bf16.msra.mxu0 %v910
    %920 = vmatmul.bf16.gmra.mxu0 %v907
    %v921 = vpop.f32.mrf.mxu0
    %v922 = vadd.f32 0.0, %v921
    %v923 = vpop.f32.mrf.mxu0
    %924 = vdwg.mxu0
    %v925 = vadd.f32 %v885, %v922
    %v926 = vld [vmem:[%s137] sm:$0x3]
    %v928 = vsel %vm71, %v926, 0
    %930 = vmatpush.bf16.msra.mxu0 0
    %931 = vmatpush.bf16.msra.mxu0 0
    %932 = vmatpush.bf16.msra.mxu0 0
    %933 = vmatpush.bf16.msra.mxu0 0
    %934 = vmatpush.bf16.msra.mxu0 0
    %935 = vmatpush.bf16.msra.mxu0 0
    %936 = vmatpush.bf16.msra.mxu0 0
    %937 = vmatpush.bf16.msra.mxu0 %v910
    %938 = vmatmul.bf16.gmra.mxu0 %v928
    %v939 = vpop.f32.mrf.mxu0
    %v940 = vadd.f32 0.0, %v939
    %v941 = vpop.f32.mrf.mxu0
    %942 = vdwg.mxu0
    %v943 = vadd.f32 %v903, %v940
    %s944 = sadd.s32 %s54, 8
    %s945 = smul.addr %s944, 2
    %s946 = scalar_lea.vmem [#allocation2], %s945
    %v947 = vld [vmem:[%s946] sm:$0x3]
    %v948 = vld [vmem:[%s160] sm:$0x3]
    %v950 = vsel %vm71, %v948, 0
    %v953 = vsel %vm75, %v947, 0
    %955 = vmatpush.bf16.msra.mxu0 0
    %956 = vmatpush.bf16.msra.mxu0 0
    %957 = vmatpush.bf16.msra.mxu0 0
    %958 = vmatpush.bf16.msra.mxu0 0
    %959 = vmatpush.bf16.msra.mxu0 0
    %960 = vmatpush.bf16.msra.mxu0 0
    %961 = vmatpush.bf16.msra.mxu0 0
    %962 = vmatpush.bf16.msra.mxu0 %v953
    %963 = vmatmul.bf16.gmra.mxu0 %v950
    %v964 = vpop.f32.mrf.mxu0
    %v965 = vadd.f32 0.0, %v964
    %v966 = vpop.f32.mrf.mxu0
    %967 = vdwg.mxu0
    %v968 = vadd.f32 %v925, %v965
    %v969 = vld [vmem:[%s182] sm:$0x3]
    %v971 = vsel %vm71, %v969, 0
    %973 = vmatpush.bf16.msra.mxu0 0
    %974 = vmatpush.bf16.msra.mxu0 0
    %975 = vmatpush.bf16.msra.mxu0 0
    %976 = vmatpush.bf16.msra.mxu0 0
    %977 = vmatpush.bf16.msra.mxu0 0
    %978 = vmatpush.bf16.msra.mxu0 0
    %979 = vmatpush.bf16.msra.mxu0 0
    %980 = vmatpush.bf16.msra.mxu0 %v953
    %981 = vmatmul.bf16.gmra.mxu0 %v971
    %v982 = vpop.f32.mrf.mxu0
    %v983 = vadd.f32 0.0, %v982
    %v984 = vpop.f32.mrf.mxu0
    %985 = vdwg.mxu0
    %v986 = vadd.f32 %v943, %v983
    %v987 = vmul.f32 %v986, 0.5
    %v988 = vtanh.pop %v987
    %v989 = vadd.f32 %v988, 1.0
    %v990 = vmul.f32 %v989, 0.5
    %v991 = vtanh.pop %v968
    %v992 = vmul.f32 %v991, %v990
    %s993 = scalar_lea.vmem [#allocation7], 24
    %994 = vst.msk [vmem:[%s993] sm:$0xf] %vm207, %v992
    %v995 = vld [vmem:[%s815] sm:$0x3]
    %v996 = vld [vmem:[%s1] sm:$0x3]
    %v998 = vsel %vm71, %v996, 0
    %v1001 = vsel %vm75, %v995, 0
    %1003 = vmatpush.bf16.msra.mxu0 0
    %1004 = vmatpush.bf16.msra.mxu0 0
    %1005 = vmatpush.bf16.msra.mxu0 0
    %1006 = vmatpush.bf16.msra.mxu0 0
    %1007 = vmatpush.bf16.msra.mxu0 0
    %1008 = vmatpush.bf16.msra.mxu0 0
    %1009 = vmatpush.bf16.msra.mxu0 0
    %1010 = vmatpush.bf16.msra.mxu0 %v1001
    %1011 = vmatmul.bf16.gmra.mxu0 %v998
    %v1012 = vpop.f32.mrf.mxu0
    %v1013 = vadd.f32 0.0, %v1012
    %v1014 = vpop.f32.mrf.mxu0
    %1015 = vdwg.mxu0
    %v1016 = vadd.f32 %v59, %v1013
    %v1017 = vld [vmem:[#allocation5] sm:$0x3]
    %v1019 = vsel %vm71, %v1017, 0
    %1021 = vmatpush.bf16.msra.mxu0 0
    %1022 = vmatpush.bf16.msra.mxu0 0
    %1023 = vmatpush.bf16.msra.mxu0 0
    %1024 = vmatpush.bf16.msra.mxu0 0
    %1025 = vmatpush.bf16.msra.mxu0 0
    %1026 = vmatpush.bf16.msra.mxu0 0
    %1027 = vmatpush.bf16.msra.mxu0 0
    %1028 = vmatpush.bf16.msra.mxu0 %v1001
    %1029 = vmatmul.bf16.gmra.mxu0 %v1019
    %v1030 = vpop.f32.mrf.mxu0
    %v1031 = vadd.f32 0.0, %v1030
    %v1032 = vpop.f32.mrf.mxu0
    %1033 = vdwg.mxu0
    %v1034 = vadd.f32 %v65, %v1031
    %v1035 = vld [vmem:[%s946] sm:$0x3]
    %v1036 = vld [vmem:[%s115] sm:$0x3]
    %v1038 = vsel %vm71, %v1036, 0
    %v1041 = vsel %vm75, %v1035, 0
    %1043 = vmatpush.bf16.msra.mxu0 0
    %1044 = vmatpush.bf16.msra.mxu0 0
    %1045 = vmatpush.bf16.msra.mxu0 0
    %1046 = vmatpush.bf16.msra.mxu0 0
    %1047 = vmatpush.bf16.msra.mxu0 0
    %1048 = vmatpush.bf16.msra.mxu0 0
    %1049 = vmatpush.bf16.msra.mxu0 0
    %1050 = vmatpush.bf16.msra.mxu0 %v1041
    %1051 = vmatmul.bf16.gmra.mxu0 %v1038
    %v1052 = vpop.f32.mrf.mxu0
    %v1053 = vadd.f32 0.0, %v1052
    %v1054 = vpop.f32.mrf.mxu0
    %1055 = vdwg.mxu0
    %v1056 = vadd.f32 %v1016, %v1053
    %v1057 = vld [vmem:[%s137] sm:$0x3]
    %v1059 = vsel %vm71, %v1057, 0
    %1061 = vmatpush.bf16.msra.mxu0 0
    %1062 = vmatpush.bf16.msra.mxu0 0
    %1063 = vmatpush.bf16.msra.mxu0 0
    %1064 = vmatpush.bf16.msra.mxu0 0
    %1065 = vmatpush.bf16.msra.mxu0 0
    %1066 = vmatpush.bf16.msra.mxu0 0
    %1067 = vmatpush.bf16.msra.mxu0 0
    %1068 = vmatpush.bf16.msra.mxu0 %v1041
    %1069 = vmatmul.bf16.gmra.mxu0 %v1059
    %v1070 = vpop.f32.mrf.mxu0
    %v1071 = vadd.f32 0.0, %v1070
    %v1072 = vpop.f32.mrf.mxu0
    %1073 = vdwg.mxu0
    %v1074 = vadd.f32 %v1034, %v1071
    %s1075 = sadd.s32 %s54, 9
    %s1076 = smul.addr %s1075, 2
    %s1077 = scalar_lea.vmem [#allocation2], %s1076
    %v1078 = vld [vmem:[%s1077] sm:$0x3]
    %v1079 = vld [vmem:[%s160] sm:$0x3]
    %v1081 = vsel %vm71, %v1079, 0
    %v1084 = vsel %vm75, %v1078, 0
    %1086 = vmatpush.bf16.msra.mxu0 0
    %1087 = vmatpush.bf16.msra.mxu0 0
    %1088 = vmatpush.bf16.msra.mxu0 0
    %1089 = vmatpush.bf16.msra.mxu0 0
    %1090 = vmatpush.bf16.msra.mxu0 0
    %1091 = vmatpush.bf16.msra.mxu0 0
    %1092 = vmatpush.bf16.msra.mxu0 0
    %1093 = vmatpush.bf16.msra.mxu0 %v1084
    %1094 = vmatmul.bf16.gmra.mxu0 %v1081
    %v1095 = vpop.f32.mrf.mxu0
    %v1096 = vadd.f32 0.0, %v1095
    %v1097 = vpop.f32.mrf.mxu0
    %1098 = vdwg.mxu0
    %v1099 = vadd.f32 %v1056, %v1096
    %v1100 = vld [vmem:[%s182] sm:$0x3]
    %v1102 = vsel %vm71, %v1100, 0
    %1104 = vmatpush.bf16.msra.mxu0 0
    %1105 = vmatpush.bf16.msra.mxu0 0
    %1106 = vmatpush.bf16.msra.mxu0 0
    %1107 = vmatpush.bf16.msra.mxu0 0
    %1108 = vmatpush.bf16.msra.mxu0 0
    %1109 = vmatpush.bf16.msra.mxu0 0
    %1110 = vmatpush.bf16.msra.mxu0 0
    %1111 = vmatpush.bf16.msra.mxu0 %v1084
    %1112 = vmatmul.bf16.gmra.mxu0 %v1102
    %v1113 = vpop.f32.mrf.mxu0
    %v1114 = vadd.f32 0.0, %v1113
    %v1115 = vpop.f32.mrf.mxu0
    %1116 = vdwg.mxu0
    %v1117 = vadd.f32 %v1074, %v1114
    %v1118 = vmul.f32 %v1117, 0.5
    %v1119 = vtanh.pop %v1118
    %v1120 = vadd.f32 %v1119, 1.0
    %v1121 = vmul.f32 %v1120, 0.5
    %v1122 = vtanh.pop %v1099
    %v1123 = vmul.f32 %v1122, %v1121
    %s1124 = scalar_lea.vmem [#allocation7], 28
    %1125 = vst.msk [vmem:[%s1124] sm:$0xf] %vm207, %v1123
    %v1126 = vld [vmem:[%s946] sm:$0x3]
    %v1127 = vld [vmem:[%s1] sm:$0x3]
    %v1129 = vsel %vm71, %v1127, 0
    %v1132 = vsel %vm75, %v1126, 0
    %1134 = vmatpush.bf16.msra.mxu0 0
    %1135 = vmatpush.bf16.msra.mxu0 0
    %1136 = vmatpush.bf16.msra.mxu0 0
    %1137 = vmatpush.bf16.msra.mxu0 0
    %1138 = vmatpush.bf16.msra.mxu0 0
    %1139 = vmatpush.bf16.msra.mxu0 0
    %1140 = vmatpush.bf16.msra.mxu0 0
    %1141 = vmatpush.bf16.msra.mxu0 %v1132
    %1142 = vmatmul.bf16.gmra.mxu0 %v1129
    %v1143 = vpop.f32.mrf.mxu0
    %v1144 = vadd.f32 0.0, %v1143
    %v1145 = vpop.f32.mrf.mxu0
    %1146 = vdwg.mxu0
    %v1147 = vadd.f32 %v59, %v1144
    %v1148 = vld [vmem:[#allocation5] sm:$0x3]
    %v1150 = vsel %vm71, %v1148, 0
    %1152 = vmatpush.bf16.msra.mxu0 0
    %1153 = vmatpush.bf16.msra.mxu0 0
    %1154 = vmatpush.bf16.msra.mxu0 0
    %1155 = vmatpush.bf16.msra.mxu0 0
    %1156 = vmatpush.bf16.msra.mxu0 0
    %1157 = vmatpush.bf16.msra.mxu0 0
    %1158 = vmatpush.bf16.msra.mxu0 0
    %1159 = vmatpush.bf16.msra.mxu0 %v1132
    %1160 = vmatmul.bf16.gmra.mxu0 %v1150
    %v1161 = vpop.f32.mrf.mxu0
    %v1162 = vadd.f32 0.0, %v1161
    %v1163 = vpop.f32.mrf.mxu0
    %1164 = vdwg.mxu0
    %v1165 = vadd.f32 %v65, %v1162
    %v1166 = vld [vmem:[%s1077] sm:$0x3]
    %v1167 = vld [vmem:[%s115] sm:$0x3]
    %v1169 = vsel %vm71, %v1167, 0
    %v1172 = vsel %vm75, %v1166, 0
    %1174 = vmatpush.bf16.msra.mxu0 0
    %1175 = vmatpush.bf16.msra.mxu0 0
    %1176 = vmatpush.bf16.msra.mxu0 0
    %1177 = vmatpush.bf16.msra.mxu0 0
    %1178 = vmatpush.bf16.msra.mxu0 0
    %1179 = vmatpush.bf16.msra.mxu0 0
    %1180 = vmatpush.bf16.msra.mxu0 0
    %1181 = vmatpush.bf16.msra.mxu0 %v1172
    %1182 = vmatmul.bf16.gmra.mxu0 %v1169
    %v1183 = vpop.f32.mrf.mxu0
    %v1184 = vadd.f32 0.0, %v1183
    %v1185 = vpop.f32.mrf.mxu0
    %1186 = vdwg.mxu0
    %v1187 = vadd.f32 %v1147, %v1184
    %v1188 = vld [vmem:[%s137] sm:$0x3]
    %v1190 = vsel %vm71, %v1188, 0
    %1192 = vmatpush.bf16.msra.mxu0 0
    %1193 = vmatpush.bf16.msra.mxu0 0
    %1194 = vmatpush.bf16.msra.mxu0 0
    %1195 = vmatpush.bf16.msra.mxu0 0
    %1196 = vmatpush.bf16.msra.mxu0 0
    %1197 = vmatpush.bf16.msra.mxu0 0
    %1198 = vmatpush.bf16.msra.mxu0 0
    %1199 = vmatpush.bf16.msra.mxu0 %v1172
    %1200 = vmatmul.bf16.gmra.mxu0 %v1190
    %v1201 = vpop.f32.mrf.mxu0
    %v1202 = vadd.f32 0.0, %v1201
    %v1203 = vpop.f32.mrf.mxu0
    %1204 = vdwg.mxu0
    %v1205 = vadd.f32 %v1165, %v1202
    %s1206 = sadd.s32 %s54, 10
    %s1207 = smul.addr %s1206, 2
    %s1208 = scalar_lea.vmem [#allocation2], %s1207
    %v1209 = vld [vmem:[%s1208] sm:$0x3]
    %v1210 = vld [vmem:[%s160] sm:$0x3]
    %v1212 = vsel %vm71, %v1210, 0
    %v1215 = vsel %vm75, %v1209, 0
    %1217 = vmatpush.bf16.msra.mxu0 0
    %1218 = vmatpush.bf16.msra.mxu0 0
    %1219 = vmatpush.bf16.msra.mxu0 0
    %1220 = vmatpush.bf16.msra.mxu0 0
    %1221 = vmatpush.bf16.msra.mxu0 0
    %1222 = vmatpush.bf16.msra.mxu0 0
    %1223 = vmatpush.bf16.msra.mxu0 0
    %1224 = vmatpush.bf16.msra.mxu0 %v1215
    %1225 = vmatmul.bf16.gmra.mxu0 %v1212
    %v1226 = vpop.f32.mrf.mxu0
    %v1227 = vadd.f32 0.0, %v1226
    %v1228 = vpop.f32.mrf.mxu0
    %1229 = vdwg.mxu0
    %v1230 = vadd.f32 %v1187, %v1227
    %v1231 = vld [vmem:[%s182] sm:$0x3]
    %v1233 = vsel %vm71, %v1231, 0
    %1235 = vmatpush.bf16.msra.mxu0 0
    %1236 = vmatpush.bf16.msra.mxu0 0
    %1237 = vmatpush.bf16.msra.mxu0 0
    %1238 = vmatpush.bf16.msra.mxu0 0
    %1239 = vmatpush.bf16.msra.mxu0 0
    %1240 = vmatpush.bf16.msra.mxu0 0
    %1241 = vmatpush.bf16.msra.mxu0 0
    %1242 = vmatpush.bf16.msra.mxu0 %v1215
    %1243 = vmatmul.bf16.gmra.mxu0 %v1233
    %v1244 = vpop.f32.mrf.mxu0
    %v1245 = vadd.f32 0.0, %v1244
    %v1246 = vpop.f32.mrf.mxu0
    %1247 = vdwg.mxu0
    %v1248 = vadd.f32 %v1205, %v1245
    %v1249 = vmul.f32 %v1248, 0.5
    %v1250 = vtanh.pop %v1249
    %v1251 = vadd.f32 %v1250, 1.0
    %v1252 = vmul.f32 %v1251, 0.5
    %v1253 = vtanh.pop %v1230
    %v1254 = vmul.f32 %v1253, %v1252
    %s1255 = scalar_lea.vmem [#allocation7], 32
    %1256 = vst.msk [vmem:[%s1255] sm:$0xf] %vm207, %v1254
    %v1257 = vld [vmem:[%s1077] sm:$0x3]
    %v1258 = vld [vmem:[%s1] sm:$0x3]
    %v1260 = vsel %vm71, %v1258, 0
    %v1263 = vsel %vm75, %v1257, 0
    %1265 = vmatpush.bf16.msra.mxu0 0
    %1266 = vmatpush.bf16.msra.mxu0 0
    %1267 = vmatpush.bf16.msra.mxu0 0
    %1268 = vmatpush.bf16.msra.mxu0 0
    %1269 = vmatpush.bf16.msra.mxu0 0
    %1270 = vmatpush.bf16.msra.mxu0 0
    %1271 = vmatpush.bf16.msra.mxu0 0
    %1272 = vmatpush.bf16.msra.mxu0 %v1263
    %1273 = vmatmul.bf16.gmra.mxu0 %v1260
    %v1274 = vpop.f32.mrf.mxu0
    %v1275 = vadd.f32 0.0, %v1274
    %v1276 = vpop.f32.mrf.mxu0
    %1277 = vdwg.mxu0
    %v1278 = vadd.f32 %v59, %v1275
    %v1279 = vld [vmem:[#allocation5] sm:$0x3]
    %v1281 = vsel %vm71, %v1279, 0
    %1283 = vmatpush.bf16.msra.mxu0 0
    %1284 = vmatpush.bf16.msra.mxu0 0
    %1285 = vmatpush.bf16.msra.mxu0 0
    %1286 = vmatpush.bf16.msra.mxu0 0
    %1287 = vmatpush.bf16.msra.mxu0 0
    %1288 = vmatpush.bf16.msra.mxu0 0
    %1289 = vmatpush.bf16.msra.mxu0 0
    %1290 = vmatpush.bf16.msra.mxu0 %v1263
    %1291 = vmatmul.bf16.gmra.mxu0 %v1281
    %v1292 = vpop.f32.mrf.mxu0
    %v1293 = vadd.f32 0.0, %v1292
    %v1294 = vpop.f32.mrf.mxu0
    %1295 = vdwg.mxu0
    %v1296 = vadd.f32 %v65, %v1293
    %v1297 = vld [vmem:[%s1208] sm:$0x3]
    %v1298 = vld [vmem:[%s115] sm:$0x3]
    %v1300 = vsel %vm71, %v1298, 0
    %v1303 = vsel %vm75, %v1297, 0
    %1305 = vmatpush.bf16.msra.mxu0 0
    %1306 = vmatpush.bf16.msra.mxu0 0
    %1307 = vmatpush.bf16.msra.mxu0 0
    %1308 = vmatpush.bf16.msra.mxu0 0
    %1309 = vmatpush.bf16.msra.mxu0 0
    %1310 = vmatpush.bf16.msra.mxu0 0
    %1311 = vmatpush.bf16.msra.mxu0 0
    %1312 = vmatpush.bf16.msra.mxu0 %v1303
    %1313 = vmatmul.bf16.gmra.mxu0 %v1300
    %v1314 = vpop.f32.mrf.mxu0
    %v1315 = vadd.f32 0.0, %v1314
    %v1316 = vpop.f32.mrf.mxu0
    %1317 = vdwg.mxu0
    %v1318 = vadd.f32 %v1278, %v1315
    %v1319 = vld [vmem:[%s137] sm:$0x3]
    %v1321 = vsel %vm71, %v1319, 0
    %1323 = vmatpush.bf16.msra.mxu0 0
    %1324 = vmatpush.bf16.msra.mxu0 0
    %1325 = vmatpush.bf16.msra.mxu0 0
    %1326 = vmatpush.bf16.msra.mxu0 0
    %1327 = vmatpush.bf16.msra.mxu0 0
    %1328 = vmatpush.bf16.msra.mxu0 0
    %1329 = vmatpush.bf16.msra.mxu0 0
    %1330 = vmatpush.bf16.msra.mxu0 %v1303
    %1331 = vmatmul.bf16.gmra.mxu0 %v1321
    %v1332 = vpop.f32.mrf.mxu0
    %v1333 = vadd.f32 0.0, %v1332
    %v1334 = vpop.f32.mrf.mxu0
    %1335 = vdwg.mxu0
    %v1336 = vadd.f32 %v1296, %v1333
    %s1337 = sadd.s32 %s54, 11
    %s1338 = smul.addr %s1337, 2
    %s1339 = scalar_lea.vmem [#allocation2], %s1338
    %v1340 = vld [vmem:[%s1339] sm:$0x3]
    %v1341 = vld [vmem:[%s160] sm:$0x3]
    %v1343 = vsel %vm71, %v1341, 0
    %v1346 = vsel %vm75, %v1340, 0
    %1348 = vmatpush.bf16.msra.mxu0 0
    %1349 = vmatpush.bf16.msra.mxu0 0
    %1350 = vmatpush.bf16.msra.mxu0 0
    %1351 = vmatpush.bf16.msra.mxu0 0
    %1352 = vmatpush.bf16.msra.mxu0 0
    %1353 = vmatpush.bf16.msra.mxu0 0
    %1354 = vmatpush.bf16.msra.mxu0 0
    %1355 = vmatpush.bf16.msra.mxu0 %v1346
    %1356 = vmatmul.bf16.gmra.mxu0 %v1343
    %v1357 = vpop.f32.mrf.mxu0
    %v1358 = vadd.f32 0.0, %v1357
    %v1359 = vpop.f32.mrf.mxu0
    %1360 = vdwg.mxu0
    %v1361 = vadd.f32 %v1318, %v1358
    %v1362 = vld [vmem:[%s182] sm:$0x3]
    %v1364 = vsel %vm71, %v1362, 0
    %1366 = vmatpush.bf16.msra.mxu0 0
    %1367 = vmatpush.bf16.msra.mxu0 0
    %1368 = vmatpush.bf16.msra.mxu0 0
    %1369 = vmatpush.bf16.msra.mxu0 0
    %1370 = vmatpush.bf16.msra.mxu0 0
    %1371 = vmatpush.bf16.msra.mxu0 0
    %1372 = vmatpush.bf16.msra.mxu0 0
    %1373 = vmatpush.bf16.msra.mxu0 %v1346
    %1374 = vmatmul.bf16.gmra.mxu0 %v1364
    %v1375 = vpop.f32.mrf.mxu0
    %v1376 = vadd.f32 0.0, %v1375
    %v1377 = vpop.f32.mrf.mxu0
    %1378 = vdwg.mxu0
    %v1379 = vadd.f32 %v1336, %v1376
    %v1380 = vmul.f32 %v1379, 0.5
    %v1381 = vtanh.pop %v1380
    %v1382 = vadd.f32 %v1381, 1.0
    %v1383 = vmul.f32 %v1382, 0.5
    %v1384 = vtanh.pop %v1361
    %v1385 = vmul.f32 %v1384, %v1383
    %s1386 = scalar_lea.vmem [#allocation7], 36
    %1387 = vst.msk [vmem:[%s1386] sm:$0xf] %vm207, %v1385
    %v1388 = vld [vmem:[%s1208] sm:$0x3]
    %v1389 = vld [vmem:[%s1] sm:$0x3]
    %v1391 = vsel %vm71, %v1389, 0
    %v1394 = vsel %vm75, %v1388, 0
    %1396 = vmatpush.bf16.msra.mxu0 0
    %1397 = vmatpush.bf16.msra.mxu0 0
    %1398 = vmatpush.bf16.msra.mxu0 0
    %1399 = vmatpush.bf16.msra.mxu0 0
    %1400 = vmatpush.bf16.msra.mxu0 0
    %1401 = vmatpush.bf16.msra.mxu0 0
    %1402 = vmatpush.bf16.msra.mxu0 0
    %1403 = vmatpush.bf16.msra.mxu0 %v1394
    %1404 = vmatmul.bf16.gmra.mxu0 %v1391
    %v1405 = vpop.f32.mrf.mxu0
    %v1406 = vadd.f32 0.0, %v1405
    %v1407 = vpop.f32.mrf.mxu0
    %1408 = vdwg.mxu0
    %v1409 = vadd.f32 %v59, %v1406
    %v1410 = vld [vmem:[#allocation5] sm:$0x3]
    %v1412 = vsel %vm71, %v1410, 0
    %1414 = vmatpush.bf16.msra.mxu0 0
    %1415 = vmatpush.bf16.msra.mxu0 0
    %1416 = vmatpush.bf16.msra.mxu0 0
    %1417 = vmatpush.bf16.msra.mxu0 0
    %1418 = vmatpush.bf16.msra.mxu0 0
    %1419 = vmatpush.bf16.msra.mxu0 0
    %1420 = vmatpush.bf16.msra.mxu0 0
    %1421 = vmatpush.bf16.msra.mxu0 %v1394
    %1422 = vmatmul.bf16.gmra.mxu0 %v1412
    %v1423 = vpop.f32.mrf.mxu0
    %v1424 = vadd.f32 0.0, %v1423
    %v1425 = vpop.f32.mrf.mxu0
    %1426 = vdwg.mxu0
    %v1427 = vadd.f32 %v65, %v1424
    %v1428 = vld [vmem:[%s1339] sm:$0x3]
    %v1429 = vld [vmem:[%s115] sm:$0x3]
    %v1431 = vsel %vm71, %v1429, 0
    %v1434 = vsel %vm75, %v1428, 0
    %1436 = vmatpush.bf16.msra.mxu0 0
    %1437 = vmatpush.bf16.msra.mxu0 0
    %1438 = vmatpush.bf16.msra.mxu0 0
    %1439 = vmatpush.bf16.msra.mxu0 0
    %1440 = vmatpush.bf16.msra.mxu0 0
    %1441 = vmatpush.bf16.msra.mxu0 0
    %1442 = vmatpush.bf16.msra.mxu0 0
    %1443 = vmatpush.bf16.msra.mxu0 %v1434
    %1444 = vmatmul.bf16.gmra.mxu0 %v1431
    %v1445 = vpop.f32.mrf.mxu0
    %v1446 = vadd.f32 0.0, %v1445
    %v1447 = vpop.f32.mrf.mxu0
    %1448 = vdwg.mxu0
    %v1449 = vadd.f32 %v1409, %v1446
    %v1450 = vld [vmem:[%s137] sm:$0x3]
    %v1452 = vsel %vm71, %v1450, 0
    %1454 = vmatpush.bf16.msra.mxu0 0
    %1455 = vmatpush.bf16.msra.mxu0 0
    %1456 = vmatpush.bf16.msra.mxu0 0
    %1457 = vmatpush.bf16.msra.mxu0 0
    %1458 = vmatpush.bf16.msra.mxu0 0
    %1459 = vmatpush.bf16.msra.mxu0 0
    %1460 = vmatpush.bf16.msra.mxu0 0
    %1461 = vmatpush.bf16.msra.mxu0 %v1434
    %1462 = vmatmul.bf16.gmra.mxu0 %v1452
    %v1463 = vpop.f32.mrf.mxu0
    %v1464 = vadd.f32 0.0, %v1463
    %v1465 = vpop.f32.mrf.mxu0
    %1466 = vdwg.mxu0
    %v1467 = vadd.f32 %v1427, %v1464
    %s1468 = sadd.s32 %s54, 12
    %s1469 = smul.addr %s1468, 2
    %s1470 = scalar_lea.vmem [#allocation2], %s1469
    %v1471 = vld [vmem:[%s1470] sm:$0x3]
    %v1472 = vld [vmem:[%s160] sm:$0x3]
    %v1474 = vsel %vm71, %v1472, 0
    %v1477 = vsel %vm75, %v1471, 0
    %1479 = vmatpush.bf16.msra.mxu0 0
    %1480 = vmatpush.bf16.msra.mxu0 0
    %1481 = vmatpush.bf16.msra.mxu0 0
    %1482 = vmatpush.bf16.msra.mxu0 0
    %1483 = vmatpush.bf16.msra.mxu0 0
    %1484 = vmatpush.bf16.msra.mxu0 0
    %1485 = vmatpush.bf16.msra.mxu0 0
    %1486 = vmatpush.bf16.msra.mxu0 %v1477
    %1487 = vmatmul.bf16.gmra.mxu0 %v1474
    %v1488 = vpop.f32.mrf.mxu0
    %v1489 = vadd.f32 0.0, %v1488
    %v1490 = vpop.f32.mrf.mxu0
    %1491 = vdwg.mxu0
    %v1492 = vadd.f32 %v1449, %v1489
    %v1493 = vld [vmem:[%s182] sm:$0x3]
    %v1495 = vsel %vm71, %v1493, 0
    %1497 = vmatpush.bf16.msra.mxu0 0
    %1498 = vmatpush.bf16.msra.mxu0 0
    %1499 = vmatpush.bf16.msra.mxu0 0
    %1500 = vmatpush.bf16.msra.mxu0 0
    %1501 = vmatpush.bf16.msra.mxu0 0
    %1502 = vmatpush.bf16.msra.mxu0 0
    %1503 = vmatpush.bf16.msra.mxu0 0
    %1504 = vmatpush.bf16.msra.mxu0 %v1477
    %1505 = vmatmul.bf16.gmra.mxu0 %v1495
    %v1506 = vpop.f32.mrf.mxu0
    %v1507 = vadd.f32 0.0, %v1506
    %v1508 = vpop.f32.mrf.mxu0
    %1509 = vdwg.mxu0
    %v1510 = vadd.f32 %v1467, %v1507
    %v1511 = vmul.f32 %v1510, 0.5
    %v1512 = vtanh.pop %v1511
    %v1513 = vadd.f32 %v1512, 1.0
    %v1514 = vmul.f32 %v1513, 0.5
    %v1515 = vtanh.pop %v1492
    %v1516 = vmul.f32 %v1515, %v1514
    %s1517 = scalar_lea.vmem [#allocation7], 40
    %1518 = vst.msk [vmem:[%s1517] sm:$0xf] %vm207, %v1516
    %v1519 = vld [vmem:[%s1339] sm:$0x3]
    %v1520 = vld [vmem:[%s1] sm:$0x3]
    %v1522 = vsel %vm71, %v1520, 0
    %v1525 = vsel %vm75, %v1519, 0
    %1527 = vmatpush.bf16.msra.mxu0 0
    %1528 = vmatpush.bf16.msra.mxu0 0
    %1529 = vmatpush.bf16.msra.mxu0 0
    %1530 = vmatpush.bf16.msra.mxu0 0
    %1531 = vmatpush.bf16.msra.mxu0 0
    %1532 = vmatpush.bf16.msra.mxu0 0
    %1533 = vmatpush.bf16.msra.mxu0 0
    %1534 = vmatpush.bf16.msra.mxu0 %v1525
    %1535 = vmatmul.bf16.gmra.mxu0 %v1522
    %v1536 = vpop.f32.mrf.mxu0
    %v1537 = vadd.f32 0.0, %v1536
    %v1538 = vpop.f32.mrf.mxu0
    %1539 = vdwg.mxu0
    %v1540 = vadd.f32 %v59, %v1537
    %v1541 = vld [vmem:[#allocation5] sm:$0x3]
    %v1543 = vsel %vm71, %v1541, 0
    %1545 = vmatpush.bf16.msra.mxu0 0
    %1546 = vmatpush.bf16.msra.mxu0 0
    %1547 = vmatpush.bf16.msra.mxu0 0
    %1548 = vmatpush.bf16.msra.mxu0 0
    %1549 = vmatpush.bf16.msra.mxu0 0
    %1550 = vmatpush.bf16.msra.mxu0 0
    %1551 = vmatpush.bf16.msra.mxu0 0
    %1552 = vmatpush.bf16.msra.mxu0 %v1525
    %1553 = vmatmul.bf16.gmra.mxu0 %v1543
    %v1554 = vpop.f32.mrf.mxu0
    %v1555 = vadd.f32 0.0, %v1554
    %v1556 = vpop.f32.mrf.mxu0
    %1557 = vdwg.mxu0
    %v1558 = vadd.f32 %v65, %v1555
    %v1559 = vld [vmem:[%s1470] sm:$0x3]
    %v1560 = vld [vmem:[%s115] sm:$0x3]
    %v1562 = vsel %vm71, %v1560, 0
    %v1565 = vsel %vm75, %v1559, 0
    %1567 = vmatpush.bf16.msra.mxu0 0
    %1568 = vmatpush.bf16.msra.mxu0 0
    %1569 = vmatpush.bf16.msra.mxu0 0
    %1570 = vmatpush.bf16.msra.mxu0 0
    %1571 = vmatpush.bf16.msra.mxu0 0
    %1572 = vmatpush.bf16.msra.mxu0 0
    %1573 = vmatpush.bf16.msra.mxu0 0
    %1574 = vmatpush.bf16.msra.mxu0 %v1565
    %1575 = vmatmul.bf16.gmra.mxu0 %v1562
    %v1576 = vpop.f32.mrf.mxu0
    %v1577 = vadd.f32 0.0, %v1576
    %v1578 = vpop.f32.mrf.mxu0
    %1579 = vdwg.mxu0
    %v1580 = vadd.f32 %v1540, %v1577
    %v1581 = vld [vmem:[%s137] sm:$0x3]
    %v1583 = vsel %vm71, %v1581, 0
    %1585 = vmatpush.bf16.msra.mxu0 0
    %1586 = vmatpush.bf16.msra.mxu0 0
    %1587 = vmatpush.bf16.msra.mxu0 0
    %1588 = vmatpush.bf16.msra.mxu0 0
    %1589 = vmatpush.bf16.msra.mxu0 0
    %1590 = vmatpush.bf16.msra.mxu0 0
    %1591 = vmatpush.bf16.msra.mxu0 0
    %1592 = vmatpush.bf16.msra.mxu0 %v1565
    %1593 = vmatmul.bf16.gmra.mxu0 %v1583
    %v1594 = vpop.f32.mrf.mxu0
    %v1595 = vadd.f32 0.0, %v1594
    %v1596 = vpop.f32.mrf.mxu0
    %1597 = vdwg.mxu0
    %v1598 = vadd.f32 %v1558, %v1595
    %s1599 = sadd.s32 %s54, 13
    %s1600 = smul.addr %s1599, 2
    %s1601 = scalar_lea.vmem [#allocation2], %s1600
    %v1602 = vld [vmem:[%s1601] sm:$0x3]
    %v1603 = vld [vmem:[%s160] sm:$0x3]
    %v1605 = vsel %vm71, %v1603, 0
    %v1608 = vsel %vm75, %v1602, 0
    %1610 = vmatpush.bf16.msra.mxu0 0
    %1611 = vmatpush.bf16.msra.mxu0 0
    %1612 = vmatpush.bf16.msra.mxu0 0
    %1613 = vmatpush.bf16.msra.mxu0 0
    %1614 = vmatpush.bf16.msra.mxu0 0
    %1615 = vmatpush.bf16.msra.mxu0 0
    %1616 = vmatpush.bf16.msra.mxu0 0
    %1617 = vmatpush.bf16.msra.mxu0 %v1608
    %1618 = vmatmul.bf16.gmra.mxu0 %v1605
    %v1619 = vpop.f32.mrf.mxu0
    %v1620 = vadd.f32 0.0, %v1619
    %v1621 = vpop.f32.mrf.mxu0
    %1622 = vdwg.mxu0
    %v1623 = vadd.f32 %v1580, %v1620
    %v1624 = vld [vmem:[%s182] sm:$0x3]
    %v1626 = vsel %vm71, %v1624, 0
    %1628 = vmatpush.bf16.msra.mxu0 0
    %1629 = vmatpush.bf16.msra.mxu0 0
    %1630 = vmatpush.bf16.msra.mxu0 0
    %1631 = vmatpush.bf16.msra.mxu0 0
    %1632 = vmatpush.bf16.msra.mxu0 0
    %1633 = vmatpush.bf16.msra.mxu0 0
    %1634 = vmatpush.bf16.msra.mxu0 0
    %1635 = vmatpush.bf16.msra.mxu0 %v1608
    %1636 = vmatmul.bf16.gmra.mxu0 %v1626
    %v1637 = vpop.f32.mrf.mxu0
    %v1638 = vadd.f32 0.0, %v1637
    %v1639 = vpop.f32.mrf.mxu0
    %1640 = vdwg.mxu0
    %v1641 = vadd.f32 %v1598, %v1638
    %v1642 = vmul.f32 %v1641, 0.5
    %v1643 = vtanh.pop %v1642
    %v1644 = vadd.f32 %v1643, 1.0
    %v1645 = vmul.f32 %v1644, 0.5
    %v1646 = vtanh.pop %v1623
    %v1647 = vmul.f32 %v1646, %v1645
    %s1648 = scalar_lea.vmem [#allocation7], 44
    %1649 = vst.msk [vmem:[%s1648] sm:$0xf] %vm207, %v1647
    %v1650 = vld [vmem:[%s1470] sm:$0x3]
    %v1651 = vld [vmem:[%s1] sm:$0x3]
    %v1653 = vsel %vm71, %v1651, 0
    %v1656 = vsel %vm75, %v1650, 0
    %1658 = vmatpush.bf16.msra.mxu0 0
    %1659 = vmatpush.bf16.msra.mxu0 0
    %1660 = vmatpush.bf16.msra.mxu0 0
    %1661 = vmatpush.bf16.msra.mxu0 0
    %1662 = vmatpush.bf16.msra.mxu0 0
    %1663 = vmatpush.bf16.msra.mxu0 0
    %1664 = vmatpush.bf16.msra.mxu0 0
    %1665 = vmatpush.bf16.msra.mxu0 %v1656
    %1666 = vmatmul.bf16.gmra.mxu0 %v1653
    %v1667 = vpop.f32.mrf.mxu0
    %v1668 = vadd.f32 0.0, %v1667
    %v1669 = vpop.f32.mrf.mxu0
    %1670 = vdwg.mxu0
    %v1671 = vadd.f32 %v59, %v1668
    %v1672 = vld [vmem:[#allocation5] sm:$0x3]
    %v1674 = vsel %vm71, %v1672, 0
    %1676 = vmatpush.bf16.msra.mxu0 0
    %1677 = vmatpush.bf16.msra.mxu0 0
    %1678 = vmatpush.bf16.msra.mxu0 0
    %1679 = vmatpush.bf16.msra.mxu0 0
    %1680 = vmatpush.bf16.msra.mxu0 0
    %1681 = vmatpush.bf16.msra.mxu0 0
    %1682 = vmatpush.bf16.msra.mxu0 0
    %1683 = vmatpush.bf16.msra.mxu0 %v1656
    %1684 = vmatmul.bf16.gmra.mxu0 %v1674
    %v1685 = vpop.f32.mrf.mxu0
    %v1686 = vadd.f32 0.0, %v1685
    %v1687 = vpop.f32.mrf.mxu0
    %1688 = vdwg.mxu0
    %v1689 = vadd.f32 %v65, %v1686
    %v1690 = vld [vmem:[%s1601] sm:$0x3]
    %v1691 = vld [vmem:[%s115] sm:$0x3]
    %v1693 = vsel %vm71, %v1691, 0
    %v1696 = vsel %vm75, %v1690, 0
    %1698 = vmatpush.bf16.msra.mxu0 0
    %1699 = vmatpush.bf16.msra.mxu0 0
    %1700 = vmatpush.bf16.msra.mxu0 0
    %1701 = vmatpush.bf16.msra.mxu0 0
    %1702 = vmatpush.bf16.msra.mxu0 0
    %1703 = vmatpush.bf16.msra.mxu0 0
    %1704 = vmatpush.bf16.msra.mxu0 0
    %1705 = vmatpush.bf16.msra.mxu0 %v1696
    %1706 = vmatmul.bf16.gmra.mxu0 %v1693
    %v1707 = vpop.f32.mrf.mxu0
    %v1708 = vadd.f32 0.0, %v1707
    %v1709 = vpop.f32.mrf.mxu0
    %1710 = vdwg.mxu0
    %v1711 = vadd.f32 %v1671, %v1708
    %v1712 = vld [vmem:[%s137] sm:$0x3]
    %v1714 = vsel %vm71, %v1712, 0
    %1716 = vmatpush.bf16.msra.mxu0 0
    %1717 = vmatpush.bf16.msra.mxu0 0
    %1718 = vmatpush.bf16.msra.mxu0 0
    %1719 = vmatpush.bf16.msra.mxu0 0
    %1720 = vmatpush.bf16.msra.mxu0 0
    %1721 = vmatpush.bf16.msra.mxu0 0
    %1722 = vmatpush.bf16.msra.mxu0 0
    %1723 = vmatpush.bf16.msra.mxu0 %v1696
    %1724 = vmatmul.bf16.gmra.mxu0 %v1714
    %v1725 = vpop.f32.mrf.mxu0
    %v1726 = vadd.f32 0.0, %v1725
    %v1727 = vpop.f32.mrf.mxu0
    %1728 = vdwg.mxu0
    %v1729 = vadd.f32 %v1689, %v1726
    %s1730 = sadd.s32 %s54, 14
    %s1731 = smul.addr %s1730, 2
    %s1732 = scalar_lea.vmem [#allocation2], %s1731
    %v1733 = vld [vmem:[%s1732] sm:$0x3]
    %v1734 = vld [vmem:[%s160] sm:$0x3]
    %v1736 = vsel %vm71, %v1734, 0
    %v1739 = vsel %vm75, %v1733, 0
    %1741 = vmatpush.bf16.msra.mxu0 0
    %1742 = vmatpush.bf16.msra.mxu0 0
    %1743 = vmatpush.bf16.msra.mxu0 0
    %1744 = vmatpush.bf16.msra.mxu0 0
    %1745 = vmatpush.bf16.msra.mxu0 0
    %1746 = vmatpush.bf16.msra.mxu0 0
    %1747 = vmatpush.bf16.msra.mxu0 0
    %1748 = vmatpush.bf16.msra.mxu0 %v1739
    %1749 = vmatmul.bf16.gmra.mxu0 %v1736
    %v1750 = vpop.f32.mrf.mxu0
    %v1751 = vadd.f32 0.0, %v1750
    %v1752 = vpop.f32.mrf.mxu0
    %1753 = vdwg.mxu0
    %v1754 = vadd.f32 %v1711, %v1751
    %v1755 = vld [vmem:[%s182] sm:$0x3]
    %v1757 = vsel %vm71, %v1755, 0
    %1759 = vmatpush.bf16.msra.mxu0 0
    %1760 = vmatpush.bf16.msra.mxu0 0
    %1761 = vmatpush.bf16.msra.mxu0 0
    %1762 = vmatpush.bf16.msra.mxu0 0
    %1763 = vmatpush.bf16.msra.mxu0 0
    %1764 = vmatpush.bf16.msra.mxu0 0
    %1765 = vmatpush.bf16.msra.mxu0 0
    %1766 = vmatpush.bf16.msra.mxu0 %v1739
    %1767 = vmatmul.bf16.gmra.mxu0 %v1757
    %v1768 = vpop.f32.mrf.mxu0
    %v1769 = vadd.f32 0.0, %v1768
    %v1770 = vpop.f32.mrf.mxu0
    %1771 = vdwg.mxu0
    %v1772 = vadd.f32 %v1729, %v1769
    %v1773 = vmul.f32 %v1772, 0.5
    %v1774 = vtanh.pop %v1773
    %v1775 = vadd.f32 %v1774, 1.0
    %v1776 = vmul.f32 %v1775, 0.5
    %v1777 = vtanh.pop %v1754
    %v1778 = vmul.f32 %v1777, %v1776
    %s1779 = scalar_lea.vmem [#allocation7], 48
    %1780 = vst.msk [vmem:[%s1779] sm:$0xf] %vm207, %v1778
    %v1781 = vld [vmem:[%s1601] sm:$0x3]
    %v1782 = vld [vmem:[%s1] sm:$0x3]
    %v1784 = vsel %vm71, %v1782, 0
    %v1787 = vsel %vm75, %v1781, 0
    %1789 = vmatpush.bf16.msra.mxu0 0
    %1790 = vmatpush.bf16.msra.mxu0 0
    %1791 = vmatpush.bf16.msra.mxu0 0
    %1792 = vmatpush.bf16.msra.mxu0 0
    %1793 = vmatpush.bf16.msra.mxu0 0
    %1794 = vmatpush.bf16.msra.mxu0 0
    %1795 = vmatpush.bf16.msra.mxu0 0
    %1796 = vmatpush.bf16.msra.mxu0 %v1787
    %1797 = vmatmul.bf16.gmra.mxu0 %v1784
    %v1798 = vpop.f32.mrf.mxu0
    %v1799 = vadd.f32 0.0, %v1798
    %v1800 = vpop.f32.mrf.mxu0
    %1801 = vdwg.mxu0
    %v1802 = vadd.f32 %v59, %v1799
    %v1803 = vld [vmem:[#allocation5] sm:$0x3]
    %v1805 = vsel %vm71, %v1803, 0
    %1807 = vmatpush.bf16.msra.mxu0 0
    %1808 = vmatpush.bf16.msra.mxu0 0
    %1809 = vmatpush.bf16.msra.mxu0 0
    %1810 = vmatpush.bf16.msra.mxu0 0
    %1811 = vmatpush.bf16.msra.mxu0 0
    %1812 = vmatpush.bf16.msra.mxu0 0
    %1813 = vmatpush.bf16.msra.mxu0 0
    %1814 = vmatpush.bf16.msra.mxu0 %v1787
    %1815 = vmatmul.bf16.gmra.mxu0 %v1805
    %v1816 = vpop.f32.mrf.mxu0
    %v1817 = vadd.f32 0.0, %v1816
    %v1818 = vpop.f32.mrf.mxu0
    %1819 = vdwg.mxu0
    %v1820 = vadd.f32 %v65, %v1817
    %v1821 = vld [vmem:[%s1732] sm:$0x3]
    %v1822 = vld [vmem:[%s115] sm:$0x3]
    %v1824 = vsel %vm71, %v1822, 0
    %v1827 = vsel %vm75, %v1821, 0
    %1829 = vmatpush.bf16.msra.mxu0 0
    %1830 = vmatpush.bf16.msra.mxu0 0
    %1831 = vmatpush.bf16.msra.mxu0 0
    %1832 = vmatpush.bf16.msra.mxu0 0
    %1833 = vmatpush.bf16.msra.mxu0 0
    %1834 = vmatpush.bf16.msra.mxu0 0
    %1835 = vmatpush.bf16.msra.mxu0 0
    %1836 = vmatpush.bf16.msra.mxu0 %v1827
    %1837 = vmatmul.bf16.gmra.mxu0 %v1824
    %v1838 = vpop.f32.mrf.mxu0
    %v1839 = vadd.f32 0.0, %v1838
    %v1840 = vpop.f32.mrf.mxu0
    %1841 = vdwg.mxu0
    %v1842 = vadd.f32 %v1802, %v1839
    %v1843 = vld [vmem:[%s137] sm:$0x3]
    %v1845 = vsel %vm71, %v1843, 0
    %1847 = vmatpush.bf16.msra.mxu0 0
    %1848 = vmatpush.bf16.msra.mxu0 0
    %1849 = vmatpush.bf16.msra.mxu0 0
    %1850 = vmatpush.bf16.msra.mxu0 0
    %1851 = vmatpush.bf16.msra.mxu0 0
    %1852 = vmatpush.bf16.msra.mxu0 0
    %1853 = vmatpush.bf16.msra.mxu0 0
    %1854 = vmatpush.bf16.msra.mxu0 %v1827
    %1855 = vmatmul.bf16.gmra.mxu0 %v1845
    %v1856 = vpop.f32.mrf.mxu0
    %v1857 = vadd.f32 0.0, %v1856
    %v1858 = vpop.f32.mrf.mxu0
    %1859 = vdwg.mxu0
    %v1860 = vadd.f32 %v1820, %v1857
    %s1861 = sadd.s32 %s54, 15
    %s1862 = smul.addr %s1861, 2
    %s1863 = scalar_lea.vmem [#allocation2], %s1862
    %v1864 = vld [vmem:[%s1863] sm:$0x3]
    %v1865 = vld [vmem:[%s160] sm:$0x3]
    %v1867 = vsel %vm71, %v1865, 0
    %v1870 = vsel %vm75, %v1864, 0
    %1872 = vmatpush.bf16.msra.mxu0 0
    %1873 = vmatpush.bf16.msra.mxu0 0
    %1874 = vmatpush.bf16.msra.mxu0 0
    %1875 = vmatpush.bf16.msra.mxu0 0
    %1876 = vmatpush.bf16.msra.mxu0 0
    %1877 = vmatpush.bf16.msra.mxu0 0
    %1878 = vmatpush.bf16.msra.mxu0 0
    %1879 = vmatpush.bf16.msra.mxu0 %v1870
    %1880 = vmatmul.bf16.gmra.mxu0 %v1867
    %v1881 = vpop.f32.mrf.mxu0
    %v1882 = vadd.f32 0.0, %v1881
    %v1883 = vpop.f32.mrf.mxu0
    %1884 = vdwg.mxu0
    %v1885 = vadd.f32 %v1842, %v1882
    %v1886 = vld [vmem:[%s182] sm:$0x3]
    %v1888 = vsel %vm71, %v1886, 0
    %1890 = vmatpush.bf16.msra.mxu0 0
    %1891 = vmatpush.bf16.msra.mxu0 0
    %1892 = vmatpush.bf16.msra.mxu0 0
    %1893 = vmatpush.bf16.msra.mxu0 0
    %1894 = vmatpush.bf16.msra.mxu0 0
    %1895 = vmatpush.bf16.msra.mxu0 0
    %1896 = vmatpush.bf16.msra.mxu0 0
    %1897 = vmatpush.bf16.msra.mxu0 %v1870
    %1898 = vmatmul.bf16.gmra.mxu0 %v1888
    %v1899 = vpop.f32.mrf.mxu0
    %v1900 = vadd.f32 0.0, %v1899
    %v1901 = vpop.f32.mrf.mxu0
    %1902 = vdwg.mxu0
    %v1903 = vadd.f32 %v1860, %v1900
    %v1904 = vmul.f32 %v1903, 0.5
    %v1905 = vtanh.pop %v1904
    %v1906 = vadd.f32 %v1905, 1.0
    %v1907 = vmul.f32 %v1906, 0.5
    %v1908 = vtanh.pop %v1885
    %v1909 = vmul.f32 %v1908, %v1907
    %s1910 = scalar_lea.vmem [#allocation7], 52
    %1911 = vst.msk [vmem:[%s1910] sm:$0xf] %vm207, %v1909
    // Predicated region
    $region30: #{tpu_custom_call.1} parent=1 // pred_check
      _
    $region31: #{tpu_custom_call.1} parent=1 // pred_check_branch
      %1913 = sbr.rel (0) target = $region33
    $region32: #{tpu_custom_call.1} parent=1 // pred_region
      %1915 = vsyncadd [#allocation4], 0
      %s1916 = sshll.u32 [#allocation7], 4
      %s1917 = int_to_ptr.vmem [resolvable:$true] %s1916
      %s1918 = sshll.u32 %s5, 4
      %s1919 = int_to_ptr.hbm [resolvable:$true] %s1918
      %1924 = dma.vmem_to_hbm [thread:$0]  %s1917, 896, %s1919, [#allocation4], 64, 64, 4
    $region33: #{tpu_custom_call.1} parent=1 // pred_fallthru
      _
    // Predicated region
    $region34: #{tpu_custom_call.1} parent=1 // pred_check
      _
    $region35: #{tpu_custom_call.1} parent=1 // pred_check_branch
      %1926 = sbr.rel (0) target = $region37
    $region36: #{tpu_custom_call.1} parent=1 // pred_region
      %1928 = dma.done [#allocation4], 896
    $region37: #{tpu_custom_call.1} parent=1 // pred_fallthru
      _
    %1929 = vsyncpa [#allocation3], 1
    %1930 = vsyncpa [#allocation6], 1
    %1931 = vsyncpa [#allocation4], 1

</llo_original>
